<compile_context>
chip_gen: v5e
topology: v5e:2x2
jax: 0.10.0
libtpu: 0.0.40
codegen_flags: <defaults>
</compile_context>

<pallas_src>
import functools

import jax
import jax.numpy as jnp
from jax.experimental import pallas as pl
from jax.experimental.pallas import tpu as pltpu

LANES = 128  # pad channels up to a multiple of this -> lane-dense layout


def _round_up(x, m):
    return (x + m - 1) // m * m


# ------------------------------- kernel ------------------------------------ #

def _basic_block_kernel(x_ref, w1_ref, b1_ref, w2_ref, b2_ref, out_ref,
                        xpad_ref, *, H, W):
    """Fused BasicBlock for one batch element (channel-padded NHWC).

    x_ref   : (1, H*W, Cp) f32   input activations (spatial dims flattened)
    w*_ref  : (9*Cp, Cp)   bf16  im2col conv weights, BN scale folded in
    b*_ref  : (1, Cp)      f32   folded BN bias
    out_ref : (1, H*W, Cp) f32   (HBM buffer aliased with x)
    xpad_ref: (H+2, W+2, Cp) f32 VMEM halo scratch, reused by both convs
    """
    Cp = x_ref.shape[-1]
    HW = H * W

    # Zero the 1-pixel halo border once; the scratch persists across grid
    # steps and the interior is fully re-written below before every use.
    @pl.when(pl.program_id(0) == 0)
    def _zero_halo():
        xpad_ref[...] = jnp.zeros_like(xpad_ref)

    def conv3x3_bn(w_ref, b_ref):
        # im2col: one (HW, 9*Cp) @ (9*Cp, Cp) MXU matmul (bf16 in, f32 acc)
        # instead of nine tiny K=C matmuls.
        cols = []
        for ki in range(3):
            for kj in range(3):
                win = xpad_ref[ki:ki + H, kj:kj + W, :]           # (H, W, Cp)
                cols.append(win.reshape(HW, Cp).astype(jnp.bfloat16))
        patch = jnp.concatenate(cols, axis=-1)                    # (HW, 9*Cp)
        acc = jnp.dot(patch, w_ref[...],
                      preferred_element_type=jnp.float32)         # (HW, Cp) f32
        return acc + b_ref[...]                                   # folded BN

    # conv1 + bn1 + relu  (halo interior <- x, one image row per dense store)
    for h in range(H):
        xpad_ref[1 + h, 1:W + 1, :] = x_ref[0, h * W:(h + 1) * W, :]
    y1 = jnp.maximum(conv3x3_bn(w1_ref, b1_ref), 0.0)             # (HW, Cp)

    # conv2 + bn2          (reuse the same halo buffer for y1)
    for h in range(H):
        xpad_ref[1 + h, 1:W + 1, :] = y1[h * W:(h + 1) * W, :]
    y2 = conv3x3_bn(w2_ref, b2_ref)

    # + residual, relu (f32 VPU), single lane-dense store of the whole block.
    out = jnp.maximum(y2 + x_ref[0], 0.0)
    out_ref[0] = out.astype(out_ref.dtype)


# ------------------------------- wrapper ------------------------------------ #

def _forward(x_nchw, params):
    """BasicBlock forward. Input/output are NCHW like the PyTorch module."""
    N, C, H, W = x_nchw.shape
    Cp = params["b1"].shape[-1]

    # NCHW -> NHWC, zero-pad channels to the lane width, flatten spatial dims
    # so kernel blocks are (H*W, Cp) with a 128-multiple minor dimension.
    x = jnp.transpose(x_nchw, (0, 2, 3, 1)).astype(jnp.float32)
    x = jnp.pad(x, ((0, 0), (0, 0), (0, 0), (0, Cp - C)))
    x = x.reshape(N, H * W, Cp)

    kernel = functools.partial(_basic_block_kernel, H=H, W=W)
    out = pl.pallas_call(
        kernel,
        out_shape=jax.ShapeDtypeStruct((N, H * W, Cp), jnp.float32),
        grid=(N,),
        in_specs=[
            pl.BlockSpec((1, H * W, Cp), lambda n: (n, 0, 0)),   # x / residual
            pl.BlockSpec((9 * Cp, Cp), lambda n: (0, 0)),        # w1 (bf16)
            pl.BlockSpec((1, Cp), lambda n: (0, 0)),             # b1
            pl.BlockSpec((9 * Cp, Cp), lambda n: (0, 0)),        # w2 (bf16)
            pl.BlockSpec((1, Cp), lambda n: (0, 0)),             # b2
        ],
        out_specs=pl.BlockSpec((1, H * W, Cp), lambda n: (n, 0, 0)),
        scratch_shapes=[pltpu.VMEM((H + 2, W + 2, Cp), jnp.float32)],
        input_output_aliases={0: 0},      # residual buffer becomes the output
        compiler_params=pltpu.CompilerParams(
            dimension_semantics=("parallel",)),
    )(x, params["w1"], params["b1"], params["w2"], params["b2"])

    out = out.reshape(N, H, W, Cp)[..., :C]
    return jnp.transpose(out, (0, 3, 1, 2))


basic_block_forward = jax.jit(_forward)


# --------------------- deterministic parameter init ------------------------- #

def init_params(key, c):
    """Conv weights in im2col layout with eval-mode BN folded in.

    w*: (9*Cp, Cp) bf16, row index = (ki*3 + kj)*Cp + ci, BN scale folded in.
    b*: (1, Cp)    f32  folded BN bias (zero in the padded channels).
    """
    cp = _round_up(c, LANES)
    ks = jax.random.split(key, 10)
    eps = 1e-5

    def bn_fold(kg, kb, km, kv):
        gamma = 1.0 + 0.1 * jax.random.normal(kg, (c,), jnp.float32)
        beta = 0.1 * jax.random.normal(kb, (c,), jnp.float32)
        mean = 0.1 * jax.random.normal(km, (c,), jnp.float32)
        var = jax.random.uniform(kv, (c,), jnp.float32, minval=0.5, maxval=1.5)
        scale = gamma / jnp.sqrt(var + eps)
        bias = beta - mean * scale
        return scale, bias

    def conv_weight(k, scale):
        w_oihw = 0.1 * jax.random.normal(k, (c, c, 3, 3), jnp.float32)
        w = jnp.transpose(w_oihw, (2, 3, 1, 0))          # (3,3,Cin,Cout) HWIO
        w = w * scale                                     # fold BN scale (Cout)
        w = jnp.pad(w, ((0, 0), (0, 0), (0, cp - c), (0, cp - c)))
        return w.reshape(9 * cp, cp).astype(jnp.bfloat16)

    s1, b1 = bn_fold(ks[1], ks[2], ks[3], ks[4])
    s2, b2 = bn_fold(ks[6], ks[7], ks[8], ks[9])
    return {
        "w1": conv_weight(ks[0], s1),
        "b1": jnp.pad(b1, (0, cp - c)).reshape(1, cp),
        "w2": conv_weight(ks[5], s2),
        "b2": jnp.pad(b2, (0, cp - c)).reshape(1, cp),
    }


# --------------------------- pure-JAX reference ------------------------------ #

def _ref_forward(x_nchw, params):
    """lax.conv reference using the same folded (bf16) weights / f32 bias."""
    N, C, H, W = x_nchw.shape
    cp = params["b1"].shape[-1]
    x = jnp.transpose(x_nchw, (0, 2, 3, 1)).astype(jnp.float32)

    def conv(a, w_flat, b):
        w = w_flat.reshape(3, 3, cp, cp)[:, :, :C, :C]    # bf16 HWIO
        y = jax.lax.conv_general_dilated(
            a.astype(jnp.bfloat16), w, window_strides=(1, 1),
            padding=((1, 1), (1, 1)),
            dimension_numbers=("NHWC", "HWIO", "NHWC"),
            preferred_element_type=jnp.float32)
        return y + b[:, :C].reshape(1, 1, 1, C)

    y = jnp.maximum(conv(x, params["w1"], params["b1"]), 0.0)
    y = conv(y, params["w2"], params["b2"])
    y = jnp.maximum(y + x, 0.0)
    return jnp.transpose(y, (0, 3, 1, 2))


# ----------------------------------- main ------------------------------------ #

if __name__ == "__main__":
    key = jax.random.PRNGKey(0)
    k_x, k_p = jax.random.split(key)

    N, C, H, W = 2, 8, 16, 16            # small shapes consistent with the module
    x = jax.random.normal(k_x, (N, C, H, W), jnp.float32)   # NCHW like PyTorch
    params = init_params(k_p, C)

    out = jax.block_until_ready(basic_block_forward(x, params))
    ref = jax.block_until_ready(_ref_forward(x, params))

    assert out.shape == (N, C, H, W)
    assert jnp.allclose(out, ref, atol=1e-3, rtol=1e-3), (
        f"mismatch vs reference: max abs err={jnp.max(jnp.abs(out - ref)):.3e}")

    print("KERNEL_OK")
</pallas_src>

<mosaic_0001>
module attributes {stable_mosaic.version = 11 : i64} {
  func.func @_basic_block_kernel(%arg0: i32, %arg1: memref<1x256x128xf32, #tpu.memory_space<vmem>>, %arg2: memref<1152x128xbf16, #tpu.memory_space<vmem>>, %arg3: memref<1x128xf32, #tpu.memory_space<vmem>>, %arg4: memref<1152x128xbf16, #tpu.memory_space<vmem>>, %arg5: memref<1x128xf32, #tpu.memory_space<vmem>>, %arg6: memref<1x256x128xf32, #tpu.memory_space<vmem>>, %arg7: memref<18x18x128xf32, #tpu.memory_space<vmem>>) attributes {dimension_semantics = [#tpu.dimension_semantics<parallel>], iteration_bounds = array<i64: 2>, scalar_prefetch = 0 : i64, scratch_operands = 1 : i64, tpu.core_type = #tpu.core_type<tc>, window_params = [{transform_indices = @transform_0, window_bounds = array<i64: 1, 256, 128>}, {pipeline_mode = #tpu.pipeline_mode<synchronous>, transform_indices = @transform_1, window_bounds = array<i64: 1152, 128>}, {pipeline_mode = #tpu.pipeline_mode<synchronous>, transform_indices = @transform_2, window_bounds = array<i64: 1, 128>}, {pipeline_mode = #tpu.pipeline_mode<synchronous>, transform_indices = @transform_3, window_bounds = array<i64: 1152, 128>}, {pipeline_mode = #tpu.pipeline_mode<synchronous>, transform_indices = @transform_4, window_bounds = array<i64: 1, 128>}, {transform_indices = @transform_5, window_bounds = array<i64: 1, 256, 128>}]} {
    %c0_i32 = arith.constant 0 : i32
    %0 = arith.cmpi eq, %arg0, %c0_i32 : i32
    %1 = arith.extui %0 : i1 to i32
    %c0_i32_0 = arith.constant 0 : i32
    %2 = arith.cmpi ne, %1, %c0_i32_0 : i32
    scf.if %2 {
      %cst_185 = arith.constant 0.000000e+00 : f32
      %223 = vector.broadcast %cst_185 : f32 to vector<18x18x128xf32>
      %c0_186 = arith.constant 0 : index
      %c0_187 = arith.constant 0 : index
      %c0_188 = arith.constant 0 : index
      %224 = vector.load %arg7[%c0_186, %c0_187, %c0_188] : memref<18x18x128xf32, #tpu.memory_space<vmem>>, vector<18x18x128xf32>
      tpu.vector_store %arg7[%c0_186, %c0_187, %c0_188], %223 {strides = array<i32>} : memref<18x18x128xf32, #tpu.memory_space<vmem>>, vector<18x18x128xf32>,
    } else {
    }
    %c0 = arith.constant 0 : index
    %c0_1 = arith.constant 0 : index
    %c0_2 = arith.constant 0 : index
    %3 = vector.load %arg1[%c0, %c0_1, %c0_2] : memref<1x256x128xf32, #tpu.memory_space<vmem>>, vector<1x16x128xf32>
    %4 = vector.shape_cast %3 : vector<1x16x128xf32> to vector<16x128xf32>
    %c1 = arith.constant 1 : index
    %c1_3 = arith.constant 1 : index
    %c0_4 = arith.constant 0 : index
    %5 = vector.load %arg7[%c1, %c1_3, %c0_4] : memref<18x18x128xf32, #tpu.memory_space<vmem>>, vector<1x16x128xf32>
    %6 = vector.shape_cast %5 : vector<1x16x128xf32> to vector<16x128xf32>
    %7 = vector.shape_cast %4 : vector<16x128xf32> to vector<1x16x128xf32>
    tpu.vector_store %arg7[%c1, %c1_3, %c0_4], %7 {strides = array<i32>} : memref<18x18x128xf32, #tpu.memory_space<vmem>>, vector<1x16x128xf32>,
    %c0_5 = arith.constant 0 : index
    %c16 = arith.constant 16 : index
    %c0_6 = arith.constant 0 : index
    %8 = vector.load %arg1[%c0_5, %c16, %c0_6] : memref<1x256x128xf32, #tpu.memory_space<vmem>>, vector<1x16x128xf32>
    %9 = vector.shape_cast %8 : vector<1x16x128xf32> to vector<16x128xf32>
    %c2 = arith.constant 2 : index
    %c1_7 = arith.constant 1 : index
    %c0_8 = arith.constant 0 : index
    %10 = vector.load %arg7[%c2, %c1_7, %c0_8] : memref<18x18x128xf32, #tpu.memory_space<vmem>>, vector<1x16x128xf32>
    %11 = vector.shape_cast %10 : vector<1x16x128xf32> to vector<16x128xf32>
    %12 = vector.shape_cast %9 : vector<16x128xf32> to vector<1x16x128xf32>
    tpu.vector_store %arg7[%c2, %c1_7, %c0_8], %12 {strides = array<i32>} : memref<18x18x128xf32, #tpu.memory_space<vmem>>, vector<1x16x128xf32>,
    %c0_9 = arith.constant 0 : index
    %c32 = arith.constant 32 : index
    %c0_10 = arith.constant 0 : index
    %13 = vector.load %arg1[%c0_9, %c32, %c0_10] : memref<1x256x128xf32, #tpu.memory_space<vmem>>, vector<1x16x128xf32>
    %14 = vector.shape_cast %13 : vector<1x16x128xf32> to vector<16x128xf32>
    %c3 = arith.constant 3 : index
    %c1_11 = arith.constant 1 : index
    %c0_12 = arith.constant 0 : index
    %15 = vector.load %arg7[%c3, %c1_11, %c0_12] : memref<18x18x128xf32, #tpu.memory_space<vmem>>, vector<1x16x128xf32>
    %16 = vector.shape_cast %15 : vector<1x16x128xf32> to vector<16x128xf32>
    %17 = vector.shape_cast %14 : vector<16x128xf32> to vector<1x16x128xf32>
    tpu.vector_store %arg7[%c3, %c1_11, %c0_12], %17 {strides = array<i32>} : memref<18x18x128xf32, #tpu.memory_space<vmem>>, vector<1x16x128xf32>,
    %c0_13 = arith.constant 0 : index
    %c48 = arith.constant 48 : index
    %c0_14 = arith.constant 0 : index
    %18 = vector.load %arg1[%c0_13, %c48, %c0_14] : memref<1x256x128xf32, #tpu.memory_space<vmem>>, vector<1x16x128xf32>
    %19 = vector.shape_cast %18 : vector<1x16x128xf32> to vector<16x128xf32>
    %c4 = arith.constant 4 : index
    %c1_15 = arith.constant 1 : index
    %c0_16 = arith.constant 0 : index
    %20 = vector.load %arg7[%c4, %c1_15, %c0_16] : memref<18x18x128xf32, #tpu.memory_space<vmem>>, vector<1x16x128xf32>
    %21 = vector.shape_cast %20 : vector<1x16x128xf32> to vector<16x128xf32>
    %22 = vector.shape_cast %19 : vector<16x128xf32> to vector<1x16x128xf32>
    tpu.vector_store %arg7[%c4, %c1_15, %c0_16], %22 {strides = array<i32>} : memref<18x18x128xf32, #tpu.memory_space<vmem>>, vector<1x16x128xf32>,
    %c0_17 = arith.constant 0 : index
    %c64 = arith.constant 64 : index
    %c0_18 = arith.constant 0 : index
    %23 = vector.load %arg1[%c0_17, %c64, %c0_18] : memref<1x256x128xf32, #tpu.memory_space<vmem>>, vector<1x16x128xf32>
    %24 = vector.shape_cast %23 : vector<1x16x128xf32> to vector<16x128xf32>
    %c5 = arith.constant 5 : index
    %c1_19 = arith.constant 1 : index
    %c0_20 = arith.constant 0 : index
    %25 = vector.load %arg7[%c5, %c1_19, %c0_20] : memref<18x18x128xf32, #tpu.memory_space<vmem>>, vector<1x16x128xf32>
    %26 = vector.shape_cast %25 : vector<1x16x128xf32> to vector<16x128xf32>
    %27 = vector.shape_cast %24 : vector<16x128xf32> to vector<1x16x128xf32>
    tpu.vector_store %arg7[%c5, %c1_19, %c0_20], %27 {strides = array<i32>} : memref<18x18x128xf32, #tpu.memory_space<vmem>>, vector<1x16x128xf32>,
    %c0_21 = arith.constant 0 : index
    %c80 = arith.constant 80 : index
    %c0_22 = arith.constant 0 : index
    %28 = vector.load %arg1[%c0_21, %c80, %c0_22] : memref<1x256x128xf32, #tpu.memory_space<vmem>>, vector<1x16x128xf32>
    %29 = vector.shape_cast %28 : vector<1x16x128xf32> to vector<16x128xf32>
    %c6 = arith.constant 6 : index
    %c1_23 = arith.constant 1 : index
    %c0_24 = arith.constant 0 : index
    %30 = vector.load %arg7[%c6, %c1_23, %c0_24] : memref<18x18x128xf32, #tpu.memory_space<vmem>>, vector<1x16x128xf32>
    %31 = vector.shape_cast %30 : vector<1x16x128xf32> to vector<16x128xf32>
    %32 = vector.shape_cast %29 : vector<16x128xf32> to vector<1x16x128xf32>
    tpu.vector_store %arg7[%c6, %c1_23, %c0_24], %32 {strides = array<i32>} : memref<18x18x128xf32, #tpu.memory_space<vmem>>, vector<1x16x128xf32>,
    %c0_25 = arith.constant 0 : index
    %c96 = arith.constant 96 : index
    %c0_26 = arith.constant 0 : index
    %33 = vector.load %arg1[%c0_25, %c96, %c0_26] : memref<1x256x128xf32, #tpu.memory_space<vmem>>, vector<1x16x128xf32>
    %34 = vector.shape_cast %33 : vector<1x16x128xf32> to vector<16x128xf32>
    %c7 = arith.constant 7 : index
    %c1_27 = arith.constant 1 : index
    %c0_28 = arith.constant 0 : index
    %35 = vector.load %arg7[%c7, %c1_27, %c0_28] : memref<18x18x128xf32, #tpu.memory_space<vmem>>, vector<1x16x128xf32>
    %36 = vector.shape_cast %35 : vector<1x16x128xf32> to vector<16x128xf32>
    %37 = vector.shape_cast %34 : vector<16x128xf32> to vector<1x16x128xf32>
    tpu.vector_store %arg7[%c7, %c1_27, %c0_28], %37 {strides = array<i32>} : memref<18x18x128xf32, #tpu.memory_space<vmem>>, vector<1x16x128xf32>,
    %c0_29 = arith.constant 0 : index
    %c112 = arith.constant 112 : index
    %c0_30 = arith.constant 0 : index
    %38 = vector.load %arg1[%c0_29, %c112, %c0_30] : memref<1x256x128xf32, #tpu.memory_space<vmem>>, vector<1x16x128xf32>
    %39 = vector.shape_cast %38 : vector<1x16x128xf32> to vector<16x128xf32>
    %c8 = arith.constant 8 : index
    %c1_31 = arith.constant 1 : index
    %c0_32 = arith.constant 0 : index
    %40 = vector.load %arg7[%c8, %c1_31, %c0_32] : memref<18x18x128xf32, #tpu.memory_space<vmem>>, vector<1x16x128xf32>
    %41 = vector.shape_cast %40 : vector<1x16x128xf32> to vector<16x128xf32>
    %42 = vector.shape_cast %39 : vector<16x128xf32> to vector<1x16x128xf32>
    tpu.vector_store %arg7[%c8, %c1_31, %c0_32], %42 {strides = array<i32>} : memref<18x18x128xf32, #tpu.memory_space<vmem>>, vector<1x16x128xf32>,
    %c0_33 = arith.constant 0 : index
    %c128 = arith.constant 128 : index
    %c0_34 = arith.constant 0 : index
    %43 = vector.load %arg1[%c0_33, %c128, %c0_34] : memref<1x256x128xf32, #tpu.memory_space<vmem>>, vector<1x16x128xf32>
    %44 = vector.shape_cast %43 : vector<1x16x128xf32> to vector<16x128xf32>
    %c9 = arith.constant 9 : index
    %c1_35 = arith.constant 1 : index
    %c0_36 = arith.constant 0 : index
    %45 = vector.load %arg7[%c9, %c1_35, %c0_36] : memref<18x18x128xf32, #tpu.memory_space<vmem>>, vector<1x16x128xf32>
    %46 = vector.shape_cast %45 : vector<1x16x128xf32> to vector<16x128xf32>
    %47 = vector.shape_cast %44 : vector<16x128xf32> to vector<1x16x128xf32>
    tpu.vector_store %arg7[%c9, %c1_35, %c0_36], %47 {strides = array<i32>} : memref<18x18x128xf32, #tpu.memory_space<vmem>>, vector<1x16x128xf32>,
    %c0_37 = arith.constant 0 : index
    %c144 = arith.constant 144 : index
    %c0_38 = arith.constant 0 : index
    %48 = vector.load %arg1[%c0_37, %c144, %c0_38] : memref<1x256x128xf32, #tpu.memory_space<vmem>>, vector<1x16x128xf32>
    %49 = vector.shape_cast %48 : vector<1x16x128xf32> to vector<16x128xf32>
    %c10 = arith.constant 10 : index
    %c1_39 = arith.constant 1 : index
    %c0_40 = arith.constant 0 : index
    %50 = vector.load %arg7[%c10, %c1_39, %c0_40] : memref<18x18x128xf32, #tpu.memory_space<vmem>>, vector<1x16x128xf32>
    %51 = vector.shape_cast %50 : vector<1x16x128xf32> to vector<16x128xf32>
    %52 = vector.shape_cast %49 : vector<16x128xf32> to vector<1x16x128xf32>
    tpu.vector_store %arg7[%c10, %c1_39, %c0_40], %52 {strides = array<i32>} : memref<18x18x128xf32, #tpu.memory_space<vmem>>, vector<1x16x128xf32>,
    %c0_41 = arith.constant 0 : index
    %c160 = arith.constant 160 : index
    %c0_42 = arith.constant 0 : index
    %53 = vector.load %arg1[%c0_41, %c160, %c0_42] : memref<1x256x128xf32, #tpu.memory_space<vmem>>, vector<1x16x128xf32>
    %54 = vector.shape_cast %53 : vector<1x16x128xf32> to vector<16x128xf32>
    %c11 = arith.constant 11 : index
    %c1_43 = arith.constant 1 : index
    %c0_44 = arith.constant 0 : index
    %55 = vector.load %arg7[%c11, %c1_43, %c0_44] : memref<18x18x128xf32, #tpu.memory_space<vmem>>, vector<1x16x128xf32>
    %56 = vector.shape_cast %55 : vector<1x16x128xf32> to vector<16x128xf32>
    %57 = vector.shape_cast %54 : vector<16x128xf32> to vector<1x16x128xf32>
    tpu.vector_store %arg7[%c11, %c1_43, %c0_44], %57 {strides = array<i32>} : memref<18x18x128xf32, #tpu.memory_space<vmem>>, vector<1x16x128xf32>,
    %c0_45 = arith.constant 0 : index
    %c176 = arith.constant 176 : index
    %c0_46 = arith.constant 0 : index
    %58 = vector.load %arg1[%c0_45, %c176, %c0_46] : memref<1x256x128xf32, #tpu.memory_space<vmem>>, vector<1x16x128xf32>
    %59 = vector.shape_cast %58 : vector<1x16x128xf32> to vector<16x128xf32>
    %c12 = arith.constant 12 : index
    %c1_47 = arith.constant 1 : index
    %c0_48 = arith.constant 0 : index
    %60 = vector.load %arg7[%c12, %c1_47, %c0_48] : memref<18x18x128xf32, #tpu.memory_space<vmem>>, vector<1x16x128xf32>
    %61 = vector.shape_cast %60 : vector<1x16x128xf32> to vector<16x128xf32>
    %62 = vector.shape_cast %59 : vector<16x128xf32> to vector<1x16x128xf32>
    tpu.vector_store %arg7[%c12, %c1_47, %c0_48], %62 {strides = array<i32>} : memref<18x18x128xf32, #tpu.memory_space<vmem>>, vector<1x16x128xf32>,
    %c0_49 = arith.constant 0 : index
    %c192 = arith.constant 192 : index
    %c0_50 = arith.constant 0 : index
    %63 = vector.load %arg1[%c0_49, %c192, %c0_50] : memref<1x256x128xf32, #tpu.memory_space<vmem>>, vector<1x16x128xf32>
    %64 = vector.shape_cast %63 : vector<1x16x128xf32> to vector<16x128xf32>
    %c13 = arith.constant 13 : index
    %c1_51 = arith.constant 1 : index
    %c0_52 = arith.constant 0 : index
    %65 = vector.load %arg7[%c13, %c1_51, %c0_52] : memref<18x18x128xf32, #tpu.memory_space<vmem>>, vector<1x16x128xf32>
    %66 = vector.shape_cast %65 : vector<1x16x128xf32> to vector<16x128xf32>
    %67 = vector.shape_cast %64 : vector<16x128xf32> to vector<1x16x128xf32>
    tpu.vector_store %arg7[%c13, %c1_51, %c0_52], %67 {strides = array<i32>} : memref<18x18x128xf32, #tpu.memory_space<vmem>>, vector<1x16x128xf32>,
    %c0_53 = arith.constant 0 : index
    %c208 = arith.constant 208 : index
    %c0_54 = arith.constant 0 : index
    %68 = vector.load %arg1[%c0_53, %c208, %c0_54] : memref<1x256x128xf32, #tpu.memory_space<vmem>>, vector<1x16x128xf32>
    %69 = vector.shape_cast %68 : vector<1x16x128xf32> to vector<16x128xf32>
    %c14 = arith.constant 14 : index
    %c1_55 = arith.constant 1 : index
    %c0_56 = arith.constant 0 : index
    %70 = vector.load %arg7[%c14, %c1_55, %c0_56] : memref<18x18x128xf32, #tpu.memory_space<vmem>>, vector<1x16x128xf32>
    %71 = vector.shape_cast %70 : vector<1x16x128xf32> to vector<16x128xf32>
    %72 = vector.shape_cast %69 : vector<16x128xf32> to vector<1x16x128xf32>
    tpu.vector_store %arg7[%c14, %c1_55, %c0_56], %72 {strides = array<i32>} : memref<18x18x128xf32, #tpu.memory_space<vmem>>, vector<1x16x128xf32>,
    %c0_57 = arith.constant 0 : index
    %c224 = arith.constant 224 : index
    %c0_58 = arith.constant 0 : index
    %73 = vector.load %arg1[%c0_57, %c224, %c0_58] : memref<1x256x128xf32, #tpu.memory_space<vmem>>, vector<1x16x128xf32>
    %74 = vector.shape_cast %73 : vector<1x16x128xf32> to vector<16x128xf32>
    %c15 = arith.constant 15 : index
    %c1_59 = arith.constant 1 : index
    %c0_60 = arith.constant 0 : index
    %75 = vector.load %arg7[%c15, %c1_59, %c0_60] : memref<18x18x128xf32, #tpu.memory_space<vmem>>, vector<1x16x128xf32>
    %76 = vector.shape_cast %75 : vector<1x16x128xf32> to vector<16x128xf32>
    %77 = vector.shape_cast %74 : vector<16x128xf32> to vector<1x16x128xf32>
    tpu.vector_store %arg7[%c15, %c1_59, %c0_60], %77 {strides = array<i32>} : memref<18x18x128xf32, #tpu.memory_space<vmem>>, vector<1x16x128xf32>,
    %c0_61 = arith.constant 0 : index
    %c240 = arith.constant 240 : index
    %c0_62 = arith.constant 0 : index
    %78 = vector.load %arg1[%c0_61, %c240, %c0_62] : memref<1x256x128xf32, #tpu.memory_space<vmem>>, vector<1x16x128xf32>
    %79 = vector.shape_cast %78 : vector<1x16x128xf32> to vector<16x128xf32>
    %c16_63 = arith.constant 16 : index
    %c1_64 = arith.constant 1 : index
    %c0_65 = arith.constant 0 : index
    %80 = vector.load %arg7[%c16_63, %c1_64, %c0_65] : memref<18x18x128xf32, #tpu.memory_space<vmem>>, vector<1x16x128xf32>
    %81 = vector.shape_cast %80 : vector<1x16x128xf32> to vector<16x128xf32>
    %82 = vector.shape_cast %79 : vector<16x128xf32> to vector<1x16x128xf32>
    tpu.vector_store %arg7[%c16_63, %c1_64, %c0_65], %82 {strides = array<i32>} : memref<18x18x128xf32, #tpu.memory_space<vmem>>, vector<1x16x128xf32>,
    %c0_66 = arith.constant 0 : index
    %c0_67 = arith.constant 0 : index
    %c0_68 = arith.constant 0 : index
    %83 = vector.load %arg7[%c0_66, %c0_67, %c0_68] : memref<18x18x128xf32, #tpu.memory_space<vmem>>, vector<16x16x128xf32>
    %84 = vector.shape_cast %83 : vector<16x16x128xf32> to vector<256x128xf32>
    %85 = arith.truncf %84 : vector<256x128xf32> to vector<256x128xbf16>
    %c0_69 = arith.constant 0 : index
    %c1_70 = arith.constant 1 : index
    %c0_71 = arith.constant 0 : index
    %86 = vector.load %arg7[%c0_69, %c1_70, %c0_71] : memref<18x18x128xf32, #tpu.memory_space<vmem>>, vector<16x16x128xf32>
    %87 = vector.shape_cast %86 : vector<16x16x128xf32> to vector<256x128xf32>
    %88 = arith.truncf %87 : vector<256x128xf32> to vector<256x128xbf16>
    %c0_72 = arith.constant 0 : index
    %c2_73 = arith.constant 2 : index
    %c0_74 = arith.constant 0 : index
    %89 = vector.load %arg7[%c0_72, %c2_73, %c0_74] : memref<18x18x128xf32, #tpu.memory_space<vmem>>, vector<16x16x128xf32>
    %90 = vector.shape_cast %89 : vector<16x16x128xf32> to vector<256x128xf32>
    %91 = arith.truncf %90 : vector<256x128xf32> to vector<256x128xbf16>
    %c1_75 = arith.constant 1 : index
    %c0_76 = arith.constant 0 : index
    %c0_77 = arith.constant 0 : index
    %92 = vector.load %arg7[%c1_75, %c0_76, %c0_77] : memref<18x18x128xf32, #tpu.memory_space<vmem>>, vector<16x16x128xf32>
    %93 = vector.shape_cast %92 : vector<16x16x128xf32> to vector<256x128xf32>
    %94 = arith.truncf %93 : vector<256x128xf32> to vector<256x128xbf16>
    %c1_78 = arith.constant 1 : index
    %c1_79 = arith.constant 1 : index
    %c0_80 = arith.constant 0 : index
    %95 = vector.load %arg7[%c1_78, %c1_79, %c0_80] : memref<18x18x128xf32, #tpu.memory_space<vmem>>, vector<16x16x128xf32>
    %96 = vector.shape_cast %95 : vector<16x16x128xf32> to vector<256x128xf32>
    %97 = arith.truncf %96 : vector<256x128xf32> to vector<256x128xbf16>
    %c1_81 = arith.constant 1 : index
    %c2_82 = arith.constant 2 : index
    %c0_83 = arith.constant 0 : index
    %98 = vector.load %arg7[%c1_81, %c2_82, %c0_83] : memref<18x18x128xf32, #tpu.memory_space<vmem>>, vector<16x16x128xf32>
    %99 = vector.shape_cast %98 : vector<16x16x128xf32> to vector<256x128xf32>
    %100 = arith.truncf %99 : vector<256x128xf32> to vector<256x128xbf16>
    %c2_84 = arith.constant 2 : index
    %c0_85 = arith.constant 0 : index
    %c0_86 = arith.constant 0 : index
    %101 = vector.load %arg7[%c2_84, %c0_85, %c0_86] : memref<18x18x128xf32, #tpu.memory_space<vmem>>, vector<16x16x128xf32>
    %102 = vector.shape_cast %101 : vector<16x16x128xf32> to vector<256x128xf32>
    %103 = arith.truncf %102 : vector<256x128xf32> to vector<256x128xbf16>
    %c2_87 = arith.constant 2 : index
    %c1_88 = arith.constant 1 : index
    %c0_89 = arith.constant 0 : index
    %104 = vector.load %arg7[%c2_87, %c1_88, %c0_89] : memref<18x18x128xf32, #tpu.memory_space<vmem>>, vector<16x16x128xf32>
    %105 = vector.shape_cast %104 : vector<16x16x128xf32> to vector<256x128xf32>
    %106 = arith.truncf %105 : vector<256x128xf32> to vector<256x128xbf16>
    %c2_90 = arith.constant 2 : index
    %c2_91 = arith.constant 2 : index
    %c0_92 = arith.constant 0 : index
    %107 = vector.load %arg7[%c2_90, %c2_91, %c0_92] : memref<18x18x128xf32, #tpu.memory_space<vmem>>, vector<16x16x128xf32>
    %108 = vector.shape_cast %107 : vector<16x16x128xf32> to vector<256x128xf32>
    %109 = arith.truncf %108 : vector<256x128xf32> to vector<256x128xbf16>
    %110 = tpu.concatenate %85, %88, %91, %94, %97, %100, %103, %106, %109 in 1 : vector<256x128xbf16>, vector<256x128xbf16>, vector<256x128xbf16>, vector<256x128xbf16>, vector<256x128xbf16>, vector<256x128xbf16>, vector<256x128xbf16>, vector<256x128xbf16>, vector<256x128xbf16> -> vector<256x1152xbf16>
    %c0_93 = arith.constant 0 : index
    %c0_94 = arith.constant 0 : index
    %111 = vector.load %arg2[%c0_93, %c0_94] : memref<1152x128xbf16, #tpu.memory_space<vmem>>, vector<1152x128xbf16>
    %cst = arith.constant dense<0.000000e+00> : vector<256x128xf32>
    %112 = tpu.matmul %110, %111, %cst {dimension_numbers = #tpu.dot_dimension_numbers<[1], [0], [0], [1], [0, 0, 1, 1], [], []>} : vector<256x1152xbf16>, vector<1152x128xbf16>, vector<256x128xf32> -> vector<256x128xf32>
    %c0_95 = arith.constant 0 : index
    %c0_96 = arith.constant 0 : index
    %113 = vector.load %arg3[%c0_95, %c0_96] : memref<1x128xf32, #tpu.memory_space<vmem>>, vector<1x128xf32>
    %114 = vector.broadcast %113 : vector<1x128xf32> to vector<256x128xf32>
    %115 = arith.addf %112, %114 : vector<256x128xf32>
    %cst_97 = arith.constant 0.000000e+00 : f32
    %116 = vector.broadcast %cst_97 : f32 to vector<256x128xf32>
    %117 = arith.maximumf %115, %116 : vector<256x128xf32>
    %118 = vector.extract_strided_slice %117 {offsets = [0, 0], sizes = [16, 128], strides = [1, 1]} : vector<256x128xf32> to vector<16x128xf32>
    %c1_98 = arith.constant 1 : index
    %c1_99 = arith.constant 1 : index
    %c0_100 = arith.constant 0 : index
    %119 = vector.load %arg7[%c1_98, %c1_99, %c0_100] : memref<18x18x128xf32, #tpu.memory_space<vmem>>, vector<1x16x128xf32>
    %120 = vector.shape_cast %119 : vector<1x16x128xf32> to vector<16x128xf32>
    %121 = vector.shape_cast %118 : vector<16x128xf32> to vector<1x16x128xf32>
    tpu.vector_store %arg7[%c1_98, %c1_99, %c0_100], %121 {strides = array<i32>} : memref<18x18x128xf32, #tpu.memory_space<vmem>>, vector<1x16x128xf32>,
    %122 = vector.extract_strided_slice %117 {offsets = [16, 0], sizes = [16, 128], strides = [1, 1]} : vector<256x128xf32> to vector<16x128xf32>
    %c2_101 = arith.constant 2 : index
    %c1_102 = arith.constant 1 : index
    %c0_103 = arith.constant 0 : index
    %123 = vector.load %arg7[%c2_101, %c1_102, %c0_103] : memref<18x18x128xf32, #tpu.memory_space<vmem>>, vector<1x16x128xf32>
    %124 = vector.shape_cast %123 : vector<1x16x128xf32> to vector<16x128xf32>
    %125 = vector.shape_cast %122 : vector<16x128xf32> to vector<1x16x128xf32>
    tpu.vector_store %arg7[%c2_101, %c1_102, %c0_103], %125 {strides = array<i32>} : memref<18x18x128xf32, #tpu.memory_space<vmem>>, vector<1x16x128xf32>,
    %126 = vector.extract_strided_slice %117 {offsets = [32, 0], sizes = [16, 128], strides = [1, 1]} : vector<256x128xf32> to vector<16x128xf32>
    %c3_104 = arith.constant 3 : index
    %c1_105 = arith.constant 1 : index
    %c0_106 = arith.constant 0 : index
    %127 = vector.load %arg7[%c3_104, %c1_105, %c0_106] : memref<18x18x128xf32, #tpu.memory_space<vmem>>, vector<1x16x128xf32>
    %128 = vector.shape_cast %127 : vector<1x16x128xf32> to vector<16x128xf32>
    %129 = vector.shape_cast %126 : vector<16x128xf32> to vector<1x16x128xf32>
    tpu.vector_store %arg7[%c3_104, %c1_105, %c0_106], %129 {strides = array<i32>} : memref<18x18x128xf32, #tpu.memory_space<vmem>>, vector<1x16x128xf32>,
    %130 = vector.extract_strided_slice %117 {offsets = [48, 0], sizes = [16, 128], strides = [1, 1]} : vector<256x128xf32> to vector<16x128xf32>
    %c4_107 = arith.constant 4 : index
    %c1_108 = arith.constant 1 : index
    %c0_109 = arith.constant 0 : index
    %131 = vector.load %arg7[%c4_107, %c1_108, %c0_109] : memref<18x18x128xf32, #tpu.memory_space<vmem>>, vector<1x16x128xf32>
    %132 = vector.shape_cast %131 : vector<1x16x128xf32> to vector<16x128xf32>
    %133 = vector.shape_cast %130 : vector<16x128xf32> to vector<1x16x128xf32>
    tpu.vector_store %arg7[%c4_107, %c1_108, %c0_109], %133 {strides = array<i32>} : memref<18x18x128xf32, #tpu.memory_space<vmem>>, vector<1x16x128xf32>,
    %134 = vector.extract_strided_slice %117 {offsets = [64, 0], sizes = [16, 128], strides = [1, 1]} : vector<256x128xf32> to vector<16x128xf32>
    %c5_110 = arith.constant 5 : index
    %c1_111 = arith.constant 1 : index
    %c0_112 = arith.constant 0 : index
    %135 = vector.load %arg7[%c5_110, %c1_111, %c0_112] : memref<18x18x128xf32, #tpu.memory_space<vmem>>, vector<1x16x128xf32>
    %136 = vector.shape_cast %135 : vector<1x16x128xf32> to vector<16x128xf32>
    %137 = vector.shape_cast %134 : vector<16x128xf32> to vector<1x16x128xf32>
    tpu.vector_store %arg7[%c5_110, %c1_111, %c0_112], %137 {strides = array<i32>} : memref<18x18x128xf32, #tpu.memory_space<vmem>>, vector<1x16x128xf32>,
    %138 = vector.extract_strided_slice %117 {offsets = [80, 0], sizes = [16, 128], strides = [1, 1]} : vector<256x128xf32> to vector<16x128xf32>
    %c6_113 = arith.constant 6 : index
    %c1_114 = arith.constant 1 : index
    %c0_115 = arith.constant 0 : index
    %139 = vector.load %arg7[%c6_113, %c1_114, %c0_115] : memref<18x18x128xf32, #tpu.memory_space<vmem>>, vector<1x16x128xf32>
    %140 = vector.shape_cast %139 : vector<1x16x128xf32> to vector<16x128xf32>
    %141 = vector.shape_cast %138 : vector<16x128xf32> to vector<1x16x128xf32>
    tpu.vector_store %arg7[%c6_113, %c1_114, %c0_115], %141 {strides = array<i32>} : memref<18x18x128xf32, #tpu.memory_space<vmem>>, vector<1x16x128xf32>,
    %142 = vector.extract_strided_slice %117 {offsets = [96, 0], sizes = [16, 128], strides = [1, 1]} : vector<256x128xf32> to vector<16x128xf32>
    %c7_116 = arith.constant 7 : index
    %c1_117 = arith.constant 1 : index
    %c0_118 = arith.constant 0 : index
    %143 = vector.load %arg7[%c7_116, %c1_117, %c0_118] : memref<18x18x128xf32, #tpu.memory_space<vmem>>, vector<1x16x128xf32>
    %144 = vector.shape_cast %143 : vector<1x16x128xf32> to vector<16x128xf32>
    %145 = vector.shape_cast %142 : vector<16x128xf32> to vector<1x16x128xf32>
    tpu.vector_store %arg7[%c7_116, %c1_117, %c0_118], %145 {strides = array<i32>} : memref<18x18x128xf32, #tpu.memory_space<vmem>>, vector<1x16x128xf32>,
    %146 = vector.extract_strided_slice %117 {offsets = [112, 0], sizes = [16, 128], strides = [1, 1]} : vector<256x128xf32> to vector<16x128xf32>
    %c8_119 = arith.constant 8 : index
    %c1_120 = arith.constant 1 : index
    %c0_121 = arith.constant 0 : index
    %147 = vector.load %arg7[%c8_119, %c1_120, %c0_121] : memref<18x18x128xf32, #tpu.memory_space<vmem>>, vector<1x16x128xf32>
    %148 = vector.shape_cast %147 : vector<1x16x128xf32> to vector<16x128xf32>
    %149 = vector.shape_cast %146 : vector<16x128xf32> to vector<1x16x128xf32>
    tpu.vector_store %arg7[%c8_119, %c1_120, %c0_121], %149 {strides = array<i32>} : memref<18x18x128xf32, #tpu.memory_space<vmem>>, vector<1x16x128xf32>,
    %150 = vector.extract_strided_slice %117 {offsets = [128, 0], sizes = [16, 128], strides = [1, 1]} : vector<256x128xf32> to vector<16x128xf32>
    %c9_122 = arith.constant 9 : index
    %c1_123 = arith.constant 1 : index
    %c0_124 = arith.constant 0 : index
    %151 = vector.load %arg7[%c9_122, %c1_123, %c0_124] : memref<18x18x128xf32, #tpu.memory_space<vmem>>, vector<1x16x128xf32>
    %152 = vector.shape_cast %151 : vector<1x16x128xf32> to vector<16x128xf32>
    %153 = vector.shape_cast %150 : vector<16x128xf32> to vector<1x16x128xf32>
    tpu.vector_store %arg7[%c9_122, %c1_123, %c0_124], %153 {strides = array<i32>} : memref<18x18x128xf32, #tpu.memory_space<vmem>>, vector<1x16x128xf32>,
    %154 = vector.extract_strided_slice %117 {offsets = [144, 0], sizes = [16, 128], strides = [1, 1]} : vector<256x128xf32> to vector<16x128xf32>
    %c10_125 = arith.constant 10 : index
    %c1_126 = arith.constant 1 : index
    %c0_127 = arith.constant 0 : index
    %155 = vector.load %arg7[%c10_125, %c1_126, %c0_127] : memref<18x18x128xf32, #tpu.memory_space<vmem>>, vector<1x16x128xf32>
    %156 = vector.shape_cast %155 : vector<1x16x128xf32> to vector<16x128xf32>
    %157 = vector.shape_cast %154 : vector<16x128xf32> to vector<1x16x128xf32>
    tpu.vector_store %arg7[%c10_125, %c1_126, %c0_127], %157 {strides = array<i32>} : memref<18x18x128xf32, #tpu.memory_space<vmem>>, vector<1x16x128xf32>,
    %158 = vector.extract_strided_slice %117 {offsets = [160, 0], sizes = [16, 128], strides = [1, 1]} : vector<256x128xf32> to vector<16x128xf32>
    %c11_128 = arith.constant 11 : index
    %c1_129 = arith.constant 1 : index
    %c0_130 = arith.constant 0 : index
    %159 = vector.load %arg7[%c11_128, %c1_129, %c0_130] : memref<18x18x128xf32, #tpu.memory_space<vmem>>, vector<1x16x128xf32>
    %160 = vector.shape_cast %159 : vector<1x16x128xf32> to vector<16x128xf32>
    %161 = vector.shape_cast %158 : vector<16x128xf32> to vector<1x16x128xf32>
    tpu.vector_store %arg7[%c11_128, %c1_129, %c0_130], %161 {strides = array<i32>} : memref<18x18x128xf32, #tpu.memory_space<vmem>>, vector<1x16x128xf32>,
    %162 = vector.extract_strided_slice %117 {offsets = [176, 0], sizes = [16, 128], strides = [1, 1]} : vector<256x128xf32> to vector<16x128xf32>
    %c12_131 = arith.constant 12 : index
    %c1_132 = arith.constant 1 : index
    %c0_133 = arith.constant 0 : index
    %163 = vector.load %arg7[%c12_131, %c1_132, %c0_133] : memref<18x18x128xf32, #tpu.memory_space<vmem>>, vector<1x16x128xf32>
    %164 = vector.shape_cast %163 : vector<1x16x128xf32> to vector<16x128xf32>
    %165 = vector.shape_cast %162 : vector<16x128xf32> to vector<1x16x128xf32>
    tpu.vector_store %arg7[%c12_131, %c1_132, %c0_133], %165 {strides = array<i32>} : memref<18x18x128xf32, #tpu.memory_space<vmem>>, vector<1x16x128xf32>,
    %166 = vector.extract_strided_slice %117 {offsets = [192, 0], sizes = [16, 128], strides = [1, 1]} : vector<256x128xf32> to vector<16x128xf32>
    %c13_134 = arith.constant 13 : index
    %c1_135 = arith.constant 1 : index
    %c0_136 = arith.constant 0 : index
    %167 = vector.load %arg7[%c13_134, %c1_135, %c0_136] : memref<18x18x128xf32, #tpu.memory_space<vmem>>, vector<1x16x128xf32>
    %168 = vector.shape_cast %167 : vector<1x16x128xf32> to vector<16x128xf32>
    %169 = vector.shape_cast %166 : vector<16x128xf32> to vector<1x16x128xf32>
    tpu.vector_store %arg7[%c13_134, %c1_135, %c0_136], %169 {strides = array<i32>} : memref<18x18x128xf32, #tpu.memory_space<vmem>>, vector<1x16x128xf32>,
    %170 = vector.extract_strided_slice %117 {offsets = [208, 0], sizes = [16, 128], strides = [1, 1]} : vector<256x128xf32> to vector<16x128xf32>
    %c14_137 = arith.constant 14 : index
    %c1_138 = arith.constant 1 : index
    %c0_139 = arith.constant 0 : index
    %171 = vector.load %arg7[%c14_137, %c1_138, %c0_139] : memref<18x18x128xf32, #tpu.memory_space<vmem>>, vector<1x16x128xf32>
    %172 = vector.shape_cast %171 : vector<1x16x128xf32> to vector<16x128xf32>
    %173 = vector.shape_cast %170 : vector<16x128xf32> to vector<1x16x128xf32>
    tpu.vector_store %arg7[%c14_137, %c1_138, %c0_139], %173 {strides = array<i32>} : memref<18x18x128xf32, #tpu.memory_space<vmem>>, vector<1x16x128xf32>,
    %174 = vector.extract_strided_slice %117 {offsets = [224, 0], sizes = [16, 128], strides = [1, 1]} : vector<256x128xf32> to vector<16x128xf32>
    %c15_140 = arith.constant 15 : index
    %c1_141 = arith.constant 1 : index
    %c0_142 = arith.constant 0 : index
    %175 = vector.load %arg7[%c15_140, %c1_141, %c0_142] : memref<18x18x128xf32, #tpu.memory_space<vmem>>, vector<1x16x128xf32>
    %176 = vector.shape_cast %175 : vector<1x16x128xf32> to vector<16x128xf32>
    %177 = vector.shape_cast %174 : vector<16x128xf32> to vector<1x16x128xf32>
    tpu.vector_store %arg7[%c15_140, %c1_141, %c0_142], %177 {strides = array<i32>} : memref<18x18x128xf32, #tpu.memory_space<vmem>>, vector<1x16x128xf32>,
    %178 = vector.extract_strided_slice %117 {offsets = [240, 0], sizes = [16, 128], strides = [1, 1]} : vector<256x128xf32> to vector<16x128xf32>
    %c16_143 = arith.constant 16 : index
    %c1_144 = arith.constant 1 : index
    %c0_145 = arith.constant 0 : index
    %179 = vector.load %arg7[%c16_143, %c1_144, %c0_145] : memref<18x18x128xf32, #tpu.memory_space<vmem>>, vector<1x16x128xf32>
    %180 = vector.shape_cast %179 : vector<1x16x128xf32> to vector<16x128xf32>
    %181 = vector.shape_cast %178 : vector<16x128xf32> to vector<1x16x128xf32>
    tpu.vector_store %arg7[%c16_143, %c1_144, %c0_145], %181 {strides = array<i32>} : memref<18x18x128xf32, #tpu.memory_space<vmem>>, vector<1x16x128xf32>,
    %c0_146 = arith.constant 0 : index
    %c0_147 = arith.constant 0 : index
    %c0_148 = arith.constant 0 : index
    %182 = vector.load %arg7[%c0_146, %c0_147, %c0_148] : memref<18x18x128xf32, #tpu.memory_space<vmem>>, vector<16x16x128xf32>
    %183 = vector.shape_cast %182 : vector<16x16x128xf32> to vector<256x128xf32>
    %184 = arith.truncf %183 : vector<256x128xf32> to vector<256x128xbf16>
    %c0_149 = arith.constant 0 : index
    %c1_150 = arith.constant 1 : index
    %c0_151 = arith.constant 0 : index
    %185 = vector.load %arg7[%c0_149, %c1_150, %c0_151] : memref<18x18x128xf32, #tpu.memory_space<vmem>>, vector<16x16x128xf32>
    %186 = vector.shape_cast %185 : vector<16x16x128xf32> to vector<256x128xf32>
    %187 = arith.truncf %186 : vector<256x128xf32> to vector<256x128xbf16>
    %c0_152 = arith.constant 0 : index
    %c2_153 = arith.constant 2 : index
    %c0_154 = arith.constant 0 : index
    %188 = vector.load %arg7[%c0_152, %c2_153, %c0_154] : memref<18x18x128xf32, #tpu.memory_space<vmem>>, vector<16x16x128xf32>
    %189 = vector.shape_cast %188 : vector<16x16x128xf32> to vector<256x128xf32>
    %190 = arith.truncf %189 : vector<256x128xf32> to vector<256x128xbf16>
    %c1_155 = arith.constant 1 : index
    %c0_156 = arith.constant 0 : index
    %c0_157 = arith.constant 0 : index
    %191 = vector.load %arg7[%c1_155, %c0_156, %c0_157] : memref<18x18x128xf32, #tpu.memory_space<vmem>>, vector<16x16x128xf32>
    %192 = vector.shape_cast %191 : vector<16x16x128xf32> to vector<256x128xf32>
    %193 = arith.truncf %192 : vector<256x128xf32> to vector<256x128xbf16>
    %c1_158 = arith.constant 1 : index
    %c1_159 = arith.constant 1 : index
    %c0_160 = arith.constant 0 : index
    %194 = vector.load %arg7[%c1_158, %c1_159, %c0_160] : memref<18x18x128xf32, #tpu.memory_space<vmem>>, vector<16x16x128xf32>
    %195 = vector.shape_cast %194 : vector<16x16x128xf32> to vector<256x128xf32>
    %196 = arith.truncf %195 : vector<256x128xf32> to vector<256x128xbf16>
    %c1_161 = arith.constant 1 : index
    %c2_162 = arith.constant 2 : index
    %c0_163 = arith.constant 0 : index
    %197 = vector.load %arg7[%c1_161, %c2_162, %c0_163] : memref<18x18x128xf32, #tpu.memory_space<vmem>>, vector<16x16x128xf32>
    %198 = vector.shape_cast %197 : vector<16x16x128xf32> to vector<256x128xf32>
    %199 = arith.truncf %198 : vector<256x128xf32> to vector<256x128xbf16>
    %c2_164 = arith.constant 2 : index
    %c0_165 = arith.constant 0 : index
    %c0_166 = arith.constant 0 : index
    %200 = vector.load %arg7[%c2_164, %c0_165, %c0_166] : memref<18x18x128xf32, #tpu.memory_space<vmem>>, vector<16x16x128xf32>
    %201 = vector.shape_cast %200 : vector<16x16x128xf32> to vector<256x128xf32>
    %202 = arith.truncf %201 : vector<256x128xf32> to vector<256x128xbf16>
    %c2_167 = arith.constant 2 : index
    %c1_168 = arith.constant 1 : index
    %c0_169 = arith.constant 0 : index
    %203 = vector.load %arg7[%c2_167, %c1_168, %c0_169] : memref<18x18x128xf32, #tpu.memory_space<vmem>>, vector<16x16x128xf32>
    %204 = vector.shape_cast %203 : vector<16x16x128xf32> to vector<256x128xf32>
    %205 = arith.truncf %204 : vector<256x128xf32> to vector<256x128xbf16>
    %c2_170 = arith.constant 2 : index
    %c2_171 = arith.constant 2 : index
    %c0_172 = arith.constant 0 : index
    %206 = vector.load %arg7[%c2_170, %c2_171, %c0_172] : memref<18x18x128xf32, #tpu.memory_space<vmem>>, vector<16x16x128xf32>
    %207 = vector.shape_cast %206 : vector<16x16x128xf32> to vector<256x128xf32>
    %208 = arith.truncf %207 : vector<256x128xf32> to vector<256x128xbf16>
    %209 = tpu.concatenate %184, %187, %190, %193, %196, %199, %202, %205, %208 in 1 : vector<256x128xbf16>, vector<256x128xbf16>, vector<256x128xbf16>, vector<256x128xbf16>, vector<256x128xbf16>, vector<256x128xbf16>, vector<256x128xbf16>, vector<256x128xbf16>, vector<256x128xbf16> -> vector<256x1152xbf16>
    %c0_173 = arith.constant 0 : index
    %c0_174 = arith.constant 0 : index
    %210 = vector.load %arg4[%c0_173, %c0_174] : memref<1152x128xbf16, #tpu.memory_space<vmem>>, vector<1152x128xbf16>
    %cst_175 = arith.constant dense<0.000000e+00> : vector<256x128xf32>
    %211 = tpu.matmul %209, %210, %cst_175 {dimension_numbers = #tpu.dot_dimension_numbers<[1], [0], [0], [1], [0, 0, 1, 1], [], []>} : vector<256x1152xbf16>, vector<1152x128xbf16>, vector<256x128xf32> -> vector<256x128xf32>
    %c0_176 = arith.constant 0 : index
    %c0_177 = arith.constant 0 : index
    %212 = vector.load %arg5[%c0_176, %c0_177] : memref<1x128xf32, #tpu.memory_space<vmem>>, vector<1x128xf32>
    %213 = vector.broadcast %212 : vector<1x128xf32> to vector<256x128xf32>
    %214 = arith.addf %211, %213 : vector<256x128xf32>
    %c0_178 = arith.constant 0 : index
    %c0_179 = arith.constant 0 : index
    %c0_180 = arith.constant 0 : index
    %215 = vector.load %arg1[%c0_178, %c0_179, %c0_180] : memref<1x256x128xf32, #tpu.memory_space<vmem>>, vector<1x256x128xf32>
    %216 = vector.shape_cast %215 : vector<1x256x128xf32> to vector<256x128xf32>
    %217 = arith.addf %214, %216 : vector<256x128xf32>
    %cst_181 = arith.constant 0.000000e+00 : f32
    %218 = vector.broadcast %cst_181 : f32 to vector<256x128xf32>
    %219 = arith.maximumf %217, %218 : vector<256x128xf32>
    %c0_182 = arith.constant 0 : index
    %c0_183 = arith.constant 0 : index
    %c0_184 = arith.constant 0 : index
    %220 = vector.load %arg6[%c0_182, %c0_183, %c0_184] : memref<1x256x128xf32, #tpu.memory_space<vmem>>, vector<1x256x128xf32>
    %221 = vector.shape_cast %220 : vector<1x256x128xf32> to vector<256x128xf32>
    %222 = vector.shape_cast %219 : vector<256x128xf32> to vector<1x256x128xf32>
    tpu.vector_store %arg6[%c0_182, %c0_183, %c0_184], %222 {strides = array<i32>} : memref<1x256x128xf32, #tpu.memory_space<vmem>>, vector<1x256x128xf32>,
    return
  }
  func.func @transform_0(%arg0: i32) -> (i32, i32, i32) {
    %c0_i32 = arith.constant 0 : i32
    %c0_i32_0 = arith.constant 0 : i32
    %c0_i32_1 = arith.constant 0 : i32
    return %arg0, %c0_i32, %c0_i32_0 : i32, i32, i32
  }
  func.func @transform_1(%arg0: i32) -> (i32, i32) {
    %c0_i32 = arith.constant 0 : i32
    %c0_i32_0 = arith.constant 0 : i32
    %c0_i32_1 = arith.constant 0 : i32
    return %c0_i32, %c0_i32_0 : i32, i32
  }
  func.func @transform_2(%arg0: i32) -> (i32, i32) {
    %c0_i32 = arith.constant 0 : i32
    %c0_i32_0 = arith.constant 0 : i32
    %c0_i32_1 = arith.constant 0 : i32
    return %c0_i32, %c0_i32_0 : i32, i32
  }
  func.func @transform_3(%arg0: i32) -> (i32, i32) {
    %c0_i32 = arith.constant 0 : i32
    %c0_i32_0 = arith.constant 0 : i32
    %c0_i32_1 = arith.constant 0 : i32
    return %c0_i32, %c0_i32_0 : i32, i32
  }
  func.func @transform_4(%arg0: i32) -> (i32, i32) {
    %c0_i32 = arith.constant 0 : i32
    %c0_i32_0 = arith.constant 0 : i32
    %c0_i32_1 = arith.constant 0 : i32
    return %c0_i32, %c0_i32_0 : i32, i32
  }
  func.func @transform_5(%arg0: i32) -> (i32, i32, i32) {
    %c0_i32 = arith.constant 0 : i32
    %c0_i32_0 = arith.constant 0 : i32
    %c0_i32_1 = arith.constant 0 : i32
    return %arg0, %c0_i32, %c0_i32_0 : i32, i32, i32
  }
}

</mosaic_0001>

<llo_original>
// kernel: _forward.1
$region0: #{_forward.1}
  #allocation0 [shape = 'u32[]', space=smem, size = 0x4, offset = 0x4, fixed_abs, tag = 'smem constant byte address 0x4 - core index']
  #allocation1 [shape = 'u32[72,128]{1,0:T(1,128)}', space=vmem, size = 0x9000, scoped, tag = 'internal scratch']
  #allocation2 [shape = 'f32[18,18,128]{2,1,0:T(8,128)}', space=vmem, size = 0x36000, scoped, tag = 'scratch operand']
  %s0 = inlined_call_operand.vmem [shape: f32[2,256,128], index: 0, kind: input, shape index: {}, may-alias: {0,5}]
  %s1 = inlined_call_operand.vmem [shape: bf16[1152,128], index: 1, kind: input, shape index: {}]
  %s2 = inlined_call_operand.vmem [shape: f32[1,128], index: 2, kind: input, shape index: {}]
  %s3 = inlined_call_operand.vmem [shape: bf16[1152,128], index: 3, kind: input, shape index: {}]
  %s4 = inlined_call_operand.vmem [shape: f32[1,128], index: 4, kind: input, shape index: {}]
  %s5 = inlined_call_operand.vmem [shape: f32[2,256,128], index: 5, kind: output, shape index: {}, may-alias: {0,5}]
  %s6 = sld [smem:[#allocation0]]
  $region57: #{_forward.1} parent=0
    _
  %s8 = ssub.s32 1, %s6
  %s9 = scalar_select 0, %s8, %s6
  loop: start=0, step=1, limit=4
  $region2: #{_forward.1} parent=0 // loop_pre_header
    _
  $region3: #{_forward.1} parent=0 // loop_header
    %s11 = sphi 0, %s15
    %p12 = scmp.ge.s32.totalorder %s11, 4
    %s21 = sphi 0, %s23
    %s24 = sphi 0, %s21
    %s25 = sphi 0, %s24
    %s41 = sphi 0, %s25
    %s45 = sphi 0, %s45
    %s47 = sphi 0, %s45
    %s48 = sphi 0, %s47
    %s62 = sphi 0, %s48
    %s66 = sphi 0, %s66
    %s68 = sphi 0, %s66
    %s69 = sphi 0, %s68
    %s83 = sphi 0, %s69
    %s87 = sphi 0, %s87
    %s89 = sphi 0, %s87
    %s90 = sphi 0, %s89
    %s104 = sphi 0, %s90
    %s108 = sphi 0, %s108
    %s110 = sphi 0, %s108
    %s111 = sphi 0, %s110
    %s125 = sphi 0, %s111
    %s131 = sphi 0, %s133
    %s134 = sphi 0, %s131
    %s135 = sphi 0, %s134
    %s151 = sphi 0, %s135
  $region4: #{_forward.1} parent=0 // loop_header_branch
    %14 = sbr.rel (%p12) target = $region8
  $region5: #{_forward.1} parent=0 // loop_body
    %s16 = ssub.s32 %s11, 1
    %s17 = ssub.s32 %s11, 2
    %s18 = sadd.s32 %s11, 1
    %s19 = ssub.s32 %s11, %s18
    %p20 = scmp.eq.s32.totalorder %s19, 0
    %s22 = sadd.s32 %s21, 1
    %s23 = scalar_select %p20, %s21, %s22
    %p26 = pneg %p20
    %p27 = scmp.eq.s32.totalorder %s11, 1
    %p28 = por %p26, %p27
    %p29 = scmp.ne.s32.totalorder %s21, %s24
    %p30 = scmp.eq.s32.totalorder %s11, 0
    %p31 = por %p29, %p30
    %p32 = scmp.ne.s32.totalorder %s21, %s24
    %p33 = scmp.eq.s32.totalorder %s16, 1
    %p34 = por %p32, %p33
    %p35 = scmp.ne.s32.totalorder %s24, %s25
    %p36 = scmp.eq.s32.totalorder %s16, 0
    %p37 = por %p35, %p36
    %p38 = scmp.ne.s32.totalorder %s24, %s25
    %p39 = scmp.eq.s32.totalorder %s17, 1
    %p40 = por %p38, %p39
    %p42 = scmp.ne.s32.totalorder %s25, %s41
    %p43 = scmp.eq.s32.totalorder %s17, 0
    %p44 = por %p42, %p43
    %s46 = sadd.s32 %s45, 1
    %p49 = scmp.eq.s32.totalorder %s11, 1
    %p50 = scmp.ne.s32.totalorder %s45, %s47
    %p51 = scmp.eq.s32.totalorder %s11, 0
    %p52 = por %p50, %p51
    %p53 = scmp.ne.s32.totalorder %s45, %s47
    %p54 = scmp.eq.s32.totalorder %s16, 1
    %p55 = por %p53, %p54
    %p56 = scmp.ne.s32.totalorder %s47, %s48
    %p57 = scmp.eq.s32.totalorder %s16, 0
    %p58 = por %p56, %p57
    %p59 = scmp.ne.s32.totalorder %s47, %s48
    %p60 = scmp.eq.s32.totalorder %s17, 1
    %p61 = por %p59, %p60
    %p63 = scmp.ne.s32.totalorder %s48, %s62
    %p64 = scmp.eq.s32.totalorder %s17, 0
    %p65 = por %p63, %p64
    %s67 = sadd.s32 %s66, 1
    %p70 = scmp.eq.s32.totalorder %s11, 1
    %p71 = scmp.ne.s32.totalorder %s66, %s68
    %p72 = scmp.eq.s32.totalorder %s11, 0
    %p73 = por %p71, %p72
    %p74 = scmp.ne.s32.totalorder %s66, %s68
    %p75 = scmp.eq.s32.totalorder %s16, 1
    %p76 = por %p74, %p75
    %p77 = scmp.ne.s32.totalorder %s68, %s69
    %p78 = scmp.eq.s32.totalorder %s16, 0
    %p79 = por %p77, %p78
    %p80 = scmp.ne.s32.totalorder %s68, %s69
    %p81 = scmp.eq.s32.totalorder %s17, 1
    %p82 = por %p80, %p81
    %p84 = scmp.ne.s32.totalorder %s69, %s83
    %p85 = scmp.eq.s32.totalorder %s17, 0
    %p86 = por %p84, %p85
    %s88 = sadd.s32 %s87, 1
    %p91 = scmp.eq.s32.totalorder %s11, 1
    %p92 = scmp.ne.s32.totalorder %s87, %s89
    %p93 = scmp.eq.s32.totalorder %s11, 0
    %p94 = por %p92, %p93
    %p95 = scmp.ne.s32.totalorder %s87, %s89
    %p96 = scmp.eq.s32.totalorder %s16, 1
    %p97 = por %p95, %p96
    %p98 = scmp.ne.s32.totalorder %s89, %s90
    %p99 = scmp.eq.s32.totalorder %s16, 0
    %p100 = por %p98, %p99
    %p101 = scmp.ne.s32.totalorder %s89, %s90
    %p102 = scmp.eq.s32.totalorder %s17, 1
    %p103 = por %p101, %p102
    %p105 = scmp.ne.s32.totalorder %s90, %s104
    %p106 = scmp.eq.s32.totalorder %s17, 0
    %p107 = por %p105, %p106
    %s109 = sadd.s32 %s108, 1
    %p112 = scmp.eq.s32.totalorder %s11, 1
    %p113 = scmp.ne.s32.totalorder %s108, %s110
    %p114 = scmp.eq.s32.totalorder %s11, 0
    %p115 = por %p113, %p114
    %p116 = scmp.ne.s32.totalorder %s108, %s110
    %p117 = scmp.eq.s32.totalorder %s16, 1
    %p118 = por %p116, %p117
    %p119 = scmp.ne.s32.totalorder %s110, %s111
    %p120 = scmp.eq.s32.totalorder %s16, 0
    %p121 = por %p119, %p120
    %p122 = scmp.ne.s32.totalorder %s110, %s111
    %p123 = scmp.eq.s32.totalorder %s17, 1
    %p124 = por %p122, %p123
    %p126 = scmp.ne.s32.totalorder %s111, %s125
    %p127 = scmp.eq.s32.totalorder %s17, 0
    %p128 = por %p126, %p127
    %s129 = ssub.s32 %s11, %s18
    %p130 = scmp.eq.s32.totalorder %s129, 0
    %s132 = sadd.s32 %s131, 1
    %s133 = scalar_select %p130, %s131, %s132
    %p136 = pneg %p130
    %p137 = scmp.eq.s32.totalorder %s11, 1
    %p138 = por %p136, %p137
    %p139 = scmp.ne.s32.totalorder %s131, %s134
    %p140 = scmp.eq.s32.totalorder %s11, 0
    %p141 = por %p139, %p140
    %p142 = scmp.ne.s32.totalorder %s131, %s134
    %p143 = scmp.eq.s32.totalorder %s16, 1
    %p144 = por %p142, %p143
    %p145 = scmp.ne.s32.totalorder %s134, %s135
    %p146 = scmp.eq.s32.totalorder %s16, 0
    %p147 = por %p145, %p146
    %p148 = scmp.ne.s32.totalorder %s134, %s135
    %p149 = scmp.eq.s32.totalorder %s17, 1
    %p150 = por %p148, %p149
    %p152 = scmp.ne.s32.totalorder %s135, %s151
    %p153 = scmp.eq.s32.totalorder %s17, 0
    %p154 = por %p152, %p153
    %p155 = scmp.le.s32.totalorder 1, %s11
    %p156 = scmp.lt.s32.totalorder %s11, 3
    %p157 = pnand %p155, %p156
    %p158 = pneg %p157
    // Predicated region
    $region9: #{_forward.1} parent=5 // pred_check
      _
    $region10: #{_forward.1} parent=5 // pred_check_branch
      %160 = sbr.rel (%p157) target = $region12
    $region11: #{_forward.1} parent=5 // pred_region
      %s161 = ssub.s32 %s11, 1
      // Predicated region
      $region13: #{_forward.1} parent=11 // pred_check
        %p162 = pneg %p58
      $region14: #{_forward.1} parent=11 // pred_check_branch
        %164 = sbr.rel (%p162) target = $region16
      $region15: #{_forward.1} parent=11 // pred_region
        _
      $region16: #{_forward.1} parent=11 // pred_fallthru
        _
      // Predicated region
      $region17: #{_forward.1} parent=11 // pred_check
        %p165 = pneg %p79
      $region18: #{_forward.1} parent=11 // pred_check_branch
        %167 = sbr.rel (%p165) target = $region20
      $region19: #{_forward.1} parent=11 // pred_region
        _
      $region20: #{_forward.1} parent=11 // pred_fallthru
        _
      // Predicated region
      $region21: #{_forward.1} parent=11 // pred_check
        %p168 = pneg %p100
      $region22: #{_forward.1} parent=11 // pred_check_branch
        %170 = sbr.rel (%p168) target = $region24
      $region23: #{_forward.1} parent=11 // pred_region
        _
      $region24: #{_forward.1} parent=11 // pred_fallthru
        _
      // Predicated region
      $region25: #{_forward.1} parent=11 // pred_check
        %p171 = pneg %p121
      $region26: #{_forward.1} parent=11 // pred_check_branch
        %173 = sbr.rel (%p171) target = $region28
      $region27: #{_forward.1} parent=11 // pred_region
        _
      $region28: #{_forward.1} parent=11 // pred_fallthru
        _
    $region12: #{_forward.1} parent=5 // pred_fallthru
      _
    %p174 = scmp.lt.s32.totalorder %s11, 2
    // Predicated region
    $region29: #{_forward.1} parent=5 // pred_check
      %p175 = pneg %p174
    $region30: #{_forward.1} parent=5 // pred_check_branch
      %177 = sbr.rel (%p175) target = $region32
    $region31: #{_forward.1} parent=5 // pred_region
      // Predicated region
      $region33: #{_forward.1} parent=31 // pred_check
        %p178 = pneg %p31
      $region34: #{_forward.1} parent=31 // pred_check_branch
        %180 = sbr.rel (%p178) target = $region36
      $region35: #{_forward.1} parent=31 // pred_region
        %p181 = scmp.lt.s32.totalorder %s11, 1
        %s182 = scalar_select %p181, %s11, 1
        %s183 = smul.addr %s182, 32
        %s184 = smul.addr %s183, 8
        %s185 = scalar_lea.vmem %s0, %s184
      $region36: #{_forward.1} parent=31 // pred_fallthru
        _
    $region32: #{_forward.1} parent=5 // pred_fallthru
      _
    %p186 = scmp.le.s32.totalorder 1, %s11
    %p187 = scmp.lt.s32.totalorder %s11, 3
    %p188 = pnand %p186, %p187
    %p189 = pneg %p188
    // Predicated region
    $region37: #{_forward.1} parent=5 // pred_check
      _
    $region38: #{_forward.1} parent=5 // pred_check_branch
      %191 = sbr.rel (%p188) target = $region40
    $region39: #{_forward.1} parent=5 // pred_region
      %s192 = ssub.s32 %s11, 1
      %p193 = scmp.lt.s32.totalorder %s16, 1
      %s194 = scalar_select %p193, %s16, 1
      %s195 = smul.addr %s194, 32
      %s196 = smul.addr %s195, 8
      %s197 = scalar_lea.vmem %s0, %s196
      %p198 = pneg %p37
      %p199 = pneg %p34
      %p200 = pneg %p58
      %p201 = pneg %p55
      %p202 = pneg %p79
      %p203 = pneg %p76
      %p204 = pneg %p100
      %p205 = pneg %p97
      %p206 = pneg %p121
      %p207 = pneg %p118
      %p208 = pneg %p147
      %p209 = pneg %p144
      %p210 = scmp.lt.s32.totalorder %s16, 1
      %s211 = scalar_select %p210, %s16, 1
      %s212 = smul.addr %s211, 32
      %s213 = smul.addr %s212, 8
      %s214 = scalar_lea.vmem %s5, %s213
      %p215 = scmp.lt.s32.totalorder %s16, 1
      %s216 = scalar_select %p215, %s16, 1
      %s217 = smul.addr %s216, 32
      %s218 = smul.addr %s217, 8
      %s219 = scalar_lea.vmem %s0, %s218
      %p220 = scmp.lt.s32.totalorder %s16, 1
      %s221 = scalar_select %p220, %s16, 1
      %s222 = smul.addr %s221, 32
      %s223 = smul.addr %s222, 8
      %s224 = scalar_lea.vmem %s5, %s223
      %p225 = scmp.eq.s32.totalorder %s16, 0
      // Predicated region
      $region41: #{_forward.1} parent=39 // pred_check
        %p226 = pneg %p225
      $region42: #{_forward.1} parent=39 // pred_check_branch
        %228 = sbr.rel (%p226) target = $region44
      $region43: #{_forward.1} parent=39 // pred_region
        %229 = vst [vmem:[#allocation2] sm:$0xff] 0.0
        %230 = vst [vmem:[#allocation2 + $0x8] sm:$0xff] 0.0
        %231 = vst [vmem:[#allocation2 + $0x10] sm:$0x3] 0.0
        %232 = vst [vmem:[#allocation2 + $0x18] sm:$0xff] 0.0
        %233 = vst [vmem:[#allocation2 + $0x20] sm:$0xff] 0.0
        %234 = vst [vmem:[#allocation2 + $0x28] sm:$0x3] 0.0
        %235 = vst [vmem:[#allocation2 + $0x30] sm:$0xff] 0.0
        %236 = vst [vmem:[#allocation2 + $0x38] sm:$0xff] 0.0
        %237 = vst [vmem:[#allocation2 + $0x40] sm:$0x3] 0.0
        %238 = vst [vmem:[#allocation2 + $0x48] sm:$0xff] 0.0
        %239 = vst [vmem:[#allocation2 + $0x50] sm:$0xff] 0.0
        %240 = vst [vmem:[#allocation2 + $0x58] sm:$0x3] 0.0
        %241 = vst [vmem:[#allocation2 + $0x60] sm:$0xff] 0.0
        %242 = vst [vmem:[#allocation2 + $0x68] sm:$0xff] 0.0
        %243 = vst [vmem:[#allocation2 + $0x70] sm:$0x3] 0.0
        %244 = vst [vmem:[#allocation2 + $0x78] sm:$0xff] 0.0
        %245 = vst [vmem:[#allocation2 + $0x80] sm:$0xff] 0.0
        %246 = vst [vmem:[#allocation2 + $0x88] sm:$0x3] 0.0
        %247 = vst [vmem:[#allocation2 + $0x90] sm:$0xff] 0.0
        %248 = vst [vmem:[#allocation2 + $0x98] sm:$0xff] 0.0
        %249 = vst [vmem:[#allocation2 + $0xa0] sm:$0x3] 0.0
        %250 = vst [vmem:[#allocation2 + $0xa8] sm:$0xff] 0.0
        %251 = vst [vmem:[#allocation2 + $0xb0] sm:$0xff] 0.0
        %252 = vst [vmem:[#allocation2 + $0xb8] sm:$0x3] 0.0
        %253 = vst [vmem:[#allocation2 + $0xc0] sm:$0xff] 0.0
        %254 = vst [vmem:[#allocation2 + $0xc8] sm:$0xff] 0.0
        %255 = vst [vmem:[#allocation2 + $0xd0] sm:$0x3] 0.0
        %256 = vst [vmem:[#allocation2 + $0xd8] sm:$0xff] 0.0
        %257 = vst [vmem:[#allocation2 + $0xe0] sm:$0xff] 0.0
        %258 = vst [vmem:[#allocation2 + $0xe8] sm:$0x3] 0.0
        %259 = vst [vmem:[#allocation2 + $0xf0] sm:$0xff] 0.0
        %260 = vst [vmem:[#allocation2 + $0xf8] sm:$0xff] 0.0
        %261 = vst [vmem:[#allocation2 + $0x100] sm:$0x3] 0.0
        %262 = vst [vmem:[#allocation2 + $0x108] sm:$0xff] 0.0
        %263 = vst [vmem:[#allocation2 + $0x110] sm:$0xff] 0.0
        %264 = vst [vmem:[#allocation2 + $0x118] sm:$0x3] 0.0
        %265 = vst [vmem:[#allocation2 + $0x120] sm:$0xff] 0.0
        %266 = vst [vmem:[#allocation2 + $0x128] sm:$0xff] 0.0
        %267 = vst [vmem:[#allocation2 + $0x130] sm:$0x3] 0.0
        %268 = vst [vmem:[#allocation2 + $0x138] sm:$0xff] 0.0
        %269 = vst [vmem:[#allocation2 + $0x140] sm:$0xff] 0.0
        %270 = vst [vmem:[#allocation2 + $0x148] sm:$0x3] 0.0
        %271 = vst [vmem:[#allocation2 + $0x150] sm:$0xff] 0.0
        %272 = vst [vmem:[#allocation2 + $0x158] sm:$0xff] 0.0
        %273 = vst [vmem:[#allocation2 + $0x160] sm:$0x3] 0.0
        %274 = vst [vmem:[#allocation2 + $0x168] sm:$0xff] 0.0
        %275 = vst [vmem:[#allocation2 + $0x170] sm:$0xff] 0.0
        %276 = vst [vmem:[#allocation2 + $0x178] sm:$0x3] 0.0
        %277 = vst [vmem:[#allocation2 + $0x180] sm:$0xff] 0.0
        %278 = vst [vmem:[#allocation2 + $0x188] sm:$0xff] 0.0
        %279 = vst [vmem:[#allocation2 + $0x190] sm:$0x3] 0.0
        %280 = vst [vmem:[#allocation2 + $0x198] sm:$0xff] 0.0
        %281 = vst [vmem:[#allocation2 + $0x1a0] sm:$0xff] 0.0
        %282 = vst [vmem:[#allocation2 + $0x1a8] sm:$0x3] 0.0
      $region44: #{_forward.1} parent=39 // pred_fallthru
        _
      %v283 = vld [vmem:[%s219] sm:$0xff]
      %v284 = vld [vmem:[%s219 + $0x8] sm:$0xff]
      %s285 = scalar_lea.vmem [#allocation2], 24
      %286 = vst [vmem:[%s285 + $0x1] sm:$0xff] %v283
      %287 = vst [vmem:[%s285 + $0x9] sm:$0xff] %v284
      %v288 = vld [vmem:[%s219 + $0x10] sm:$0xff]
      %v289 = vld [vmem:[%s219 + $0x18] sm:$0xff]
      %s290 = scalar_lea.vmem [#allocation2], 48
      %291 = vst [vmem:[%s290 + $0x1] sm:$0xff] %v288
      %292 = vst [vmem:[%s290 + $0x9] sm:$0xff] %v289
      %v293 = vld [vmem:[%s219 + $0x20] sm:$0xff]
      %v294 = vld [vmem:[%s219 + $0x28] sm:$0xff]
      %s295 = scalar_lea.vmem [#allocation2], 72
      %296 = vst [vmem:[%s295 + $0x1] sm:$0xff] %v293
      %297 = vst [vmem:[%s295 + $0x9] sm:$0xff] %v294
      %v298 = vld [vmem:[%s219 + $0x30] sm:$0xff]
      %v299 = vld [vmem:[%s219 + $0x38] sm:$0xff]
      %s300 = scalar_lea.vmem [#allocation2], 96
      %301 = vst [vmem:[%s300 + $0x1] sm:$0xff] %v298
      %302 = vst [vmem:[%s300 + $0x9] sm:$0xff] %v299
      %v303 = vld [vmem:[%s219 + $0x40] sm:$0xff]
      %v304 = vld [vmem:[%s219 + $0x48] sm:$0xff]
      %s305 = scalar_lea.vmem [#allocation2], 120
      %306 = vst [vmem:[%s305 + $0x1] sm:$0xff] %v303
      %307 = vst [vmem:[%s305 + $0x9] sm:$0xff] %v304
      %v308 = vld [vmem:[%s219 + $0x50] sm:$0xff]
      %v309 = vld [vmem:[%s219 + $0x58] sm:$0xff]
      %s310 = scalar_lea.vmem [#allocation2], 144
      %311 = vst [vmem:[%s310 + $0x1] sm:$0xff] %v308
      %312 = vst [vmem:[%s310 + $0x9] sm:$0xff] %v309
      %v313 = vld [vmem:[%s219 + $0x60] sm:$0xff]
      %v314 = vld [vmem:[%s219 + $0x68] sm:$0xff]
      %s315 = scalar_lea.vmem [#allocation2], 168
      %316 = vst [vmem:[%s315 + $0x1] sm:$0xff] %v313
      %317 = vst [vmem:[%s315 + $0x9] sm:$0xff] %v314
      %v318 = vld [vmem:[%s219 + $0x70] sm:$0xff]
      %v319 = vld [vmem:[%s219 + $0x78] sm:$0xff]
      %s320 = scalar_lea.vmem [#allocation2], 192
      %321 = vst [vmem:[%s320 + $0x1] sm:$0xff] %v318
      %322 = vst [vmem:[%s320 + $0x9] sm:$0xff] %v319
      %v323 = vld [vmem:[%s219 + $0x80] sm:$0xff]
      %v324 = vld [vmem:[%s219 + $0x88] sm:$0xff]
      %s325 = scalar_lea.vmem [#allocation2], 216
      %326 = vst [vmem:[%s325 + $0x1] sm:$0xff] %v323
      %327 = vst [vmem:[%s325 + $0x9] sm:$0xff] %v324
      %v328 = vld [vmem:[%s219 + $0x90] sm:$0xff]
      %v329 = vld [vmem:[%s219 + $0x98] sm:$0xff]
      %s330 = scalar_lea.vmem [#allocation2], 240
      %331 = vst [vmem:[%s330 + $0x1] sm:$0xff] %v328
      %332 = vst [vmem:[%s330 + $0x9] sm:$0xff] %v329
      %v333 = vld [vmem:[%s219 + $0xa0] sm:$0xff]
      %v334 = vld [vmem:[%s219 + $0xa8] sm:$0xff]
      %s335 = scalar_lea.vmem [#allocation2], 264
      %336 = vst [vmem:[%s335 + $0x1] sm:$0xff] %v333
      %337 = vst [vmem:[%s335 + $0x9] sm:$0xff] %v334
      %v338 = vld [vmem:[%s219 + $0xb0] sm:$0xff]
      %v339 = vld [vmem:[%s219 + $0xb8] sm:$0xff]
      %s340 = scalar_lea.vmem [#allocation2], 288
      %341 = vst [vmem:[%s340 + $0x1] sm:$0xff] %v338
      %342 = vst [vmem:[%s340 + $0x9] sm:$0xff] %v339
      %v343 = vld [vmem:[%s219 + $0xc0] sm:$0xff]
      %v344 = vld [vmem:[%s219 + $0xc8] sm:$0xff]
      %s345 = scalar_lea.vmem [#allocation2], 312
      %346 = vst [vmem:[%s345 + $0x1] sm:$0xff] %v343
      %347 = vst [vmem:[%s345 + $0x9] sm:$0xff] %v344
      %v348 = vld [vmem:[%s219 + $0xd0] sm:$0xff]
      %v349 = vld [vmem:[%s219 + $0xd8] sm:$0xff]
      %s350 = scalar_lea.vmem [#allocation2], 336
      %351 = vst [vmem:[%s350 + $0x1] sm:$0xff] %v348
      %352 = vst [vmem:[%s350 + $0x9] sm:$0xff] %v349
      %v353 = vld [vmem:[%s219 + $0xe0] sm:$0xff]
      %v354 = vld [vmem:[%s219 + $0xe8] sm:$0xff]
      %s355 = scalar_lea.vmem [#allocation2], 360
      %356 = vst [vmem:[%s355 + $0x1] sm:$0xff] %v353
      %357 = vst [vmem:[%s355 + $0x9] sm:$0xff] %v354
      %v358 = vld [vmem:[%s219 + $0xf0] sm:$0xff]
      %v359 = vld [vmem:[%s219 + $0xf8] sm:$0xff]
      %s360 = scalar_lea.vmem [#allocation2], 384
      %361 = vst [vmem:[%s360 + $0x1] sm:$0xff] %v358
      %362 = vst [vmem:[%s360 + $0x9] sm:$0xff] %v359
      %v363 = vld [vmem:[#allocation2] sm:$0xff]
      %v364 = vld [vmem:[#allocation2 + $0x8] sm:$0xff]
      %v365 = vld [vmem:[#allocation2 + $0x18] sm:$0xff]
      %v366 = vld [vmem:[#allocation2 + $0x20] sm:$0xff]
      %v367 = vld [vmem:[#allocation2 + $0x30] sm:$0xff]
      %v368 = vld [vmem:[#allocation2 + $0x38] sm:$0xff]
      %v369 = vld [vmem:[#allocation2 + $0x48] sm:$0xff]
      %v370 = vld [vmem:[#allocation2 + $0x50] sm:$0xff]
      %v371 = vld [vmem:[#allocation2 + $0x60] sm:$0xff]
      %v372 = vld [vmem:[#allocation2 + $0x68] sm:$0xff]
      %v373 = vld [vmem:[#allocation2 + $0x78] sm:$0xff]
      %v374 = vld [vmem:[#allocation2 + $0x80] sm:$0xff]
      %v375 = vld [vmem:[#allocation2 + $0x90] sm:$0xff]
      %v376 = vld [vmem:[#allocation2 + $0x98] sm:$0xff]
      %v377 = vld [vmem:[#allocation2 + $0xa8] sm:$0xff]
      %v378 = vld [vmem:[#allocation2 + $0xb0] sm:$0xff]
      %v379 = vld [vmem:[#allocation2 + $0xc0] sm:$0xff]
      %v380 = vld [vmem:[#allocation2 + $0xc8] sm:$0xff]
      %v381 = vld [vmem:[#allocation2 + $0xd8] sm:$0xff]
      %v382 = vld [vmem:[#allocation2 + $0xe0] sm:$0xff]
      %v383 = vld [vmem:[#allocation2 + $0xf0] sm:$0xff]
      %v384 = vld [vmem:[#allocation2 + $0xf8] sm:$0xff]
      %v385 = vld [vmem:[#allocation2 + $0x108] sm:$0xff]
      %v386 = vld [vmem:[#allocation2 + $0x110] sm:$0xff]
      %v387 = vld [vmem:[#allocation2 + $0x120] sm:$0xff]
      %v388 = vld [vmem:[#allocation2 + $0x128] sm:$0xff]
      %v389 = vld [vmem:[#allocation2 + $0x138] sm:$0xff]
      %v390 = vld [vmem:[#allocation2 + $0x140] sm:$0xff]
      %v391 = vld [vmem:[#allocation2 + $0x150] sm:$0xff]
      %v392 = vld [vmem:[#allocation2 + $0x158] sm:$0xff]
      %v393 = vld [vmem:[#allocation2 + $0x168] sm:$0xff]
      %v394 = vld [vmem:[#allocation2 + $0x170] sm:$0xff]
      %v395 = vpack.c.bf16 %v363, %v363
      %v396 = vpack.c.bf16 %v364, %v364
      %v397 = vpack.c.bf16 %v365, %v365
      %v398 = vpack.c.bf16 %v366, %v366
      %v399 = vpack.c.bf16 %v367, %v367
      %v400 = vpack.c.bf16 %v368, %v368
      %v401 = vpack.c.bf16 %v369, %v369
      %v402 = vpack.c.bf16 %v370, %v370
      %v403 = vpack.c.bf16 %v371, %v371
      %v404 = vpack.c.bf16 %v372, %v372
      %v405 = vpack.c.bf16 %v373, %v373
      %v406 = vpack.c.bf16 %v374, %v374
      %v407 = vpack.c.bf16 %v375, %v375
      %v408 = vpack.c.bf16 %v376, %v376
      %v409 = vpack.c.bf16 %v377, %v377
      %v410 = vpack.c.bf16 %v378, %v378
      %v411 = vpack.c.bf16 %v379, %v379
      %v412 = vpack.c.bf16 %v380, %v380
      %v413 = vpack.c.bf16 %v381, %v381
      %v414 = vpack.c.bf16 %v382, %v382
      %v415 = vpack.c.bf16 %v383, %v383
      %v416 = vpack.c.bf16 %v384, %v384
      %v417 = vpack.c.bf16 %v385, %v385
      %v418 = vpack.c.bf16 %v386, %v386
      %v419 = vpack.c.bf16 %v387, %v387
      %v420 = vpack.c.bf16 %v388, %v388
      %v421 = vpack.c.bf16 %v389, %v389
      %v422 = vpack.c.bf16 %v390, %v390
      %v423 = vpack.c.bf16 %v391, %v391
      %v424 = vpack.c.bf16 %v392, %v392
      %v425 = vpack.c.bf16 %v393, %v393
      %v426 = vpack.c.bf16 %v394, %v394
      %v427 = vld [vmem:[#allocation2 + $0x1] sm:$0xff]
      %v428 = vld [vmem:[#allocation2 + $0x9] sm:$0xff]
      %v429 = vld [vmem:[#allocation2 + $0x19] sm:$0xff]
      %v430 = vld [vmem:[#allocation2 + $0x21] sm:$0xff]
      %v431 = vld [vmem:[#allocation2 + $0x31] sm:$0xff]
      %v432 = vld [vmem:[#allocation2 + $0x39] sm:$0xff]
      %v433 = vld [vmem:[#allocation2 + $0x49] sm:$0xff]
      %v434 = vld [vmem:[#allocation2 + $0x51] sm:$0xff]
      %v435 = vld [vmem:[#allocation2 + $0x61] sm:$0xff]
      %v436 = vld [vmem:[#allocation2 + $0x69] sm:$0xff]
      %v437 = vld [vmem:[#allocation2 + $0x79] sm:$0xff]
      %v438 = vld [vmem:[#allocation2 + $0x81] sm:$0xff]
      %v439 = vld [vmem:[#allocation2 + $0x91] sm:$0xff]
      %v440 = vld [vmem:[#allocation2 + $0x99] sm:$0xff]
      %v441 = vld [vmem:[#allocation2 + $0xa9] sm:$0xff]
      %v442 = vld [vmem:[#allocation2 + $0xb1] sm:$0xff]
      %v443 = vld [vmem:[#allocation2 + $0xc1] sm:$0xff]
      %v444 = vld [vmem:[#allocation2 + $0xc9] sm:$0xff]
      %v445 = vld [vmem:[#allocation2 + $0xd9] sm:$0xff]
      %v446 = vld [vmem:[#allocation2 + $0xe1] sm:$0xff]
      %v447 = vld [vmem:[#allocation2 + $0xf1] sm:$0xff]
      %v448 = vld [vmem:[#allocation2 + $0xf9] sm:$0xff]
      %v449 = vld [vmem:[#allocation2 + $0x109] sm:$0xff]
      %v450 = vld [vmem:[#allocation2 + $0x111] sm:$0xff]
      %v451 = vld [vmem:[#allocation2 + $0x121] sm:$0xff]
      %v452 = vld [vmem:[#allocation2 + $0x129] sm:$0xff]
      %v453 = vld [vmem:[#allocation2 + $0x139] sm:$0xff]
      %v454 = vld [vmem:[#allocation2 + $0x141] sm:$0xff]
      %v455 = vld [vmem:[#allocation2 + $0x151] sm:$0xff]
      %v456 = vld [vmem:[#allocation2 + $0x159] sm:$0xff]
      %v457 = vld [vmem:[#allocation2 + $0x169] sm:$0xff]
      %v458 = vld [vmem:[#allocation2 + $0x171] sm:$0xff]
      %v459 = vpack.c.bf16 %v427, %v427
      %v460 = vpack.c.bf16 %v428, %v428
      %v461 = vpack.c.bf16 %v429, %v429
      %v462 = vpack.c.bf16 %v430, %v430
      %v463 = vpack.c.bf16 %v431, %v431
      %v464 = vpack.c.bf16 %v432, %v432
      %v465 = vpack.c.bf16 %v433, %v433
      %v466 = vpack.c.bf16 %v434, %v434
      %v467 = vpack.c.bf16 %v435, %v435
      %v468 = vpack.c.bf16 %v436, %v436
      %v469 = vpack.c.bf16 %v437, %v437
      %v470 = vpack.c.bf16 %v438, %v438
      %v471 = vpack.c.bf16 %v439, %v439
      %v472 = vpack.c.bf16 %v440, %v440
      %v473 = vpack.c.bf16 %v441, %v441
      %v474 = vpack.c.bf16 %v442, %v442
      %v475 = vpack.c.bf16 %v443, %v443
      %v476 = vpack.c.bf16 %v444, %v444
      %v477 = vpack.c.bf16 %v445, %v445
      %v478 = vpack.c.bf16 %v446, %v446
      %v479 = vpack.c.bf16 %v447, %v447
      %v480 = vpack.c.bf16 %v448, %v448
      %v481 = vpack.c.bf16 %v449, %v449
      %v482 = vpack.c.bf16 %v450, %v450
      %v483 = vpack.c.bf16 %v451, %v451
      %v484 = vpack.c.bf16 %v452, %v452
      %v485 = vpack.c.bf16 %v453, %v453
      %v486 = vpack.c.bf16 %v454, %v454
      %v487 = vpack.c.bf16 %v455, %v455
      %v488 = vpack.c.bf16 %v456, %v456
      %v489 = vpack.c.bf16 %v457, %v457
      %v490 = vpack.c.bf16 %v458, %v458
      %v491 = vld [vmem:[#allocation2 + $0x2] sm:$0xff]
      %v492 = vld [vmem:[#allocation2 + $0xa] sm:$0xff]
      %v493 = vld [vmem:[#allocation2 + $0x1a] sm:$0xff]
      %v494 = vld [vmem:[#allocation2 + $0x22] sm:$0xff]
      %v495 = vld [vmem:[#allocation2 + $0x32] sm:$0xff]
      %v496 = vld [vmem:[#allocation2 + $0x3a] sm:$0xff]
      %v497 = vld [vmem:[#allocation2 + $0x4a] sm:$0xff]
      %v498 = vld [vmem:[#allocation2 + $0x52] sm:$0xff]
      %v499 = vld [vmem:[#allocation2 + $0x62] sm:$0xff]
      %v500 = vld [vmem:[#allocation2 + $0x6a] sm:$0xff]
      %v501 = vld [vmem:[#allocation2 + $0x7a] sm:$0xff]
      %v502 = vld [vmem:[#allocation2 + $0x82] sm:$0xff]
      %v503 = vld [vmem:[#allocation2 + $0x92] sm:$0xff]
      %v504 = vld [vmem:[#allocation2 + $0x9a] sm:$0xff]
      %v505 = vld [vmem:[#allocation2 + $0xaa] sm:$0xff]
      %v506 = vld [vmem:[#allocation2 + $0xb2] sm:$0xff]
      %v507 = vld [vmem:[#allocation2 + $0xc2] sm:$0xff]
      %v508 = vld [vmem:[#allocation2 + $0xca] sm:$0xff]
      %v509 = vld [vmem:[#allocation2 + $0xda] sm:$0xff]
      %v510 = vld [vmem:[#allocation2 + $0xe2] sm:$0xff]
      %v511 = vld [vmem:[#allocation2 + $0xf2] sm:$0xff]
      %v512 = vld [vmem:[#allocation2 + $0xfa] sm:$0xff]
      %v513 = vld [vmem:[#allocation2 + $0x10a] sm:$0xff]
      %v514 = vld [vmem:[#allocation2 + $0x112] sm:$0xff]
      %v515 = vld [vmem:[#allocation2 + $0x122] sm:$0xff]
      %v516 = vld [vmem:[#allocation2 + $0x12a] sm:$0xff]
      %v517 = vld [vmem:[#allocation2 + $0x13a] sm:$0xff]
      %v518 = vld [vmem:[#allocation2 + $0x142] sm:$0xff]
      %v519 = vld [vmem:[#allocation2 + $0x152] sm:$0xff]
      %v520 = vld [vmem:[#allocation2 + $0x15a] sm:$0xff]
      %v521 = vld [vmem:[#allocation2 + $0x16a] sm:$0xff]
      %v522 = vld [vmem:[#allocation2 + $0x172] sm:$0xff]
      %v523 = vpack.c.bf16 %v491, %v491
      %v524 = vpack.c.bf16 %v492, %v492
      %v525 = vpack.c.bf16 %v493, %v493
      %v526 = vpack.c.bf16 %v494, %v494
      %v527 = vpack.c.bf16 %v495, %v495
      %v528 = vpack.c.bf16 %v496, %v496
      %v529 = vpack.c.bf16 %v497, %v497
      %v530 = vpack.c.bf16 %v498, %v498
      %v531 = vpack.c.bf16 %v499, %v499
      %v532 = vpack.c.bf16 %v500, %v500
      %v533 = vpack.c.bf16 %v501, %v501
      %v534 = vpack.c.bf16 %v502, %v502
      %v535 = vpack.c.bf16 %v503, %v503
      %v536 = vpack.c.bf16 %v504, %v504
      %v537 = vpack.c.bf16 %v505, %v505
      %v538 = vpack.c.bf16 %v506, %v506
      %v539 = vpack.c.bf16 %v507, %v507
      %v540 = vpack.c.bf16 %v508, %v508
      %v541 = vpack.c.bf16 %v509, %v509
      %v542 = vpack.c.bf16 %v510, %v510
      %v543 = vpack.c.bf16 %v511, %v511
      %v544 = vpack.c.bf16 %v512, %v512
      %v545 = vpack.c.bf16 %v513, %v513
      %v546 = vpack.c.bf16 %v514, %v514
      %v547 = vpack.c.bf16 %v515, %v515
      %v548 = vpack.c.bf16 %v516, %v516
      %v549 = vpack.c.bf16 %v517, %v517
      %v550 = vpack.c.bf16 %v518, %v518
      %v551 = vpack.c.bf16 %v519, %v519
      %v552 = vpack.c.bf16 %v520, %v520
      %v553 = vpack.c.bf16 %v521, %v521
      %v554 = vpack.c.bf16 %v522, %v522
      %v555 = vld [vmem:[%s285] sm:$0xff]
      %v556 = vld [vmem:[%s285 + $0x8] sm:$0xff]
      %v557 = vld [vmem:[%s285 + $0x18] sm:$0xff]
      %v558 = vld [vmem:[%s285 + $0x20] sm:$0xff]
      %v559 = vld [vmem:[%s285 + $0x30] sm:$0xff]
      %v560 = vld [vmem:[%s285 + $0x38] sm:$0xff]
      %v561 = vld [vmem:[%s285 + $0x48] sm:$0xff]
      %v562 = vld [vmem:[%s285 + $0x50] sm:$0xff]
      %v563 = vld [vmem:[%s285 + $0x60] sm:$0xff]
      %v564 = vld [vmem:[%s285 + $0x68] sm:$0xff]
      %v565 = vld [vmem:[%s285 + $0x78] sm:$0xff]
      %v566 = vld [vmem:[%s285 + $0x80] sm:$0xff]
      %v567 = vld [vmem:[%s285 + $0x90] sm:$0xff]
      %v568 = vld [vmem:[%s285 + $0x98] sm:$0xff]
      %v569 = vld [vmem:[%s285 + $0xa8] sm:$0xff]
      %v570 = vld [vmem:[%s285 + $0xb0] sm:$0xff]
      %v571 = vld [vmem:[%s285 + $0xc0] sm:$0xff]
      %v572 = vld [vmem:[%s285 + $0xc8] sm:$0xff]
      %v573 = vld [vmem:[%s285 + $0xd8] sm:$0xff]
      %v574 = vld [vmem:[%s285 + $0xe0] sm:$0xff]
      %v575 = vld [vmem:[%s285 + $0xf0] sm:$0xff]
      %v576 = vld [vmem:[%s285 + $0xf8] sm:$0xff]
      %v577 = vld [vmem:[%s285 + $0x108] sm:$0xff]
      %v578 = vld [vmem:[%s285 + $0x110] sm:$0xff]
      %v579 = vld [vmem:[%s285 + $0x120] sm:$0xff]
      %v580 = vld [vmem:[%s285 + $0x128] sm:$0xff]
      %v581 = vld [vmem:[%s285 + $0x138] sm:$0xff]
      %v582 = vld [vmem:[%s285 + $0x140] sm:$0xff]
      %v583 = vld [vmem:[%s285 + $0x150] sm:$0xff]
      %v584 = vld [vmem:[%s285 + $0x158] sm:$0xff]
      %v585 = vld [vmem:[%s285 + $0x168] sm:$0xff]
      %v586 = vld [vmem:[%s285 + $0x170] sm:$0xff]
      %v587 = vpack.c.bf16 %v555, %v555
      %v588 = vpack.c.bf16 %v556, %v556
      %v589 = vpack.c.bf16 %v557, %v557
      %v590 = vpack.c.bf16 %v558, %v558
      %v591 = vpack.c.bf16 %v559, %v559
      %v592 = vpack.c.bf16 %v560, %v560
      %v593 = vpack.c.bf16 %v561, %v561
      %v594 = vpack.c.bf16 %v562, %v562
      %v595 = vpack.c.bf16 %v563, %v563
      %v596 = vpack.c.bf16 %v564, %v564
      %v597 = vpack.c.bf16 %v565, %v565
      %v598 = vpack.c.bf16 %v566, %v566
      %v599 = vpack.c.bf16 %v567, %v567
      %v600 = vpack.c.bf16 %v568, %v568
      %v601 = vpack.c.bf16 %v569, %v569
      %v602 = vpack.c.bf16 %v570, %v570
      %v603 = vpack.c.bf16 %v571, %v571
      %v604 = vpack.c.bf16 %v572, %v572
      %v605 = vpack.c.bf16 %v573, %v573
      %v606 = vpack.c.bf16 %v574, %v574
      %v607 = vpack.c.bf16 %v575, %v575
      %v608 = vpack.c.bf16 %v576, %v576
      %v609 = vpack.c.bf16 %v577, %v577
      %v610 = vpack.c.bf16 %v578, %v578
      %v611 = vpack.c.bf16 %v579, %v579
      %v612 = vpack.c.bf16 %v580, %v580
      %v613 = vpack.c.bf16 %v581, %v581
      %v614 = vpack.c.bf16 %v582, %v582
      %v615 = vpack.c.bf16 %v583, %v583
      %v616 = vpack.c.bf16 %v584, %v584
      %v617 = vpack.c.bf16 %v585, %v585
      %v618 = vpack.c.bf16 %v586, %v586
      %v619 = vld [vmem:[%s285 + $0x1] sm:$0xff]
      %v620 = vld [vmem:[%s285 + $0x9] sm:$0xff]
      %v621 = vld [vmem:[%s285 + $0x19] sm:$0xff]
      %v622 = vld [vmem:[%s285 + $0x21] sm:$0xff]
      %v623 = vld [vmem:[%s285 + $0x31] sm:$0xff]
      %v624 = vld [vmem:[%s285 + $0x39] sm:$0xff]
      %v625 = vld [vmem:[%s285 + $0x49] sm:$0xff]
      %v626 = vld [vmem:[%s285 + $0x51] sm:$0xff]
      %v627 = vld [vmem:[%s285 + $0x61] sm:$0xff]
      %v628 = vld [vmem:[%s285 + $0x69] sm:$0xff]
      %v629 = vld [vmem:[%s285 + $0x79] sm:$0xff]
      %v630 = vld [vmem:[%s285 + $0x81] sm:$0xff]
      %v631 = vld [vmem:[%s285 + $0x91] sm:$0xff]
      %v632 = vld [vmem:[%s285 + $0x99] sm:$0xff]
      %v633 = vld [vmem:[%s285 + $0xa9] sm:$0xff]
      %v634 = vld [vmem:[%s285 + $0xb1] sm:$0xff]
      %v635 = vld [vmem:[%s285 + $0xc1] sm:$0xff]
      %v636 = vld [vmem:[%s285 + $0xc9] sm:$0xff]
      %v637 = vld [vmem:[%s285 + $0xd9] sm:$0xff]
      %v638 = vld [vmem:[%s285 + $0xe1] sm:$0xff]
      %v639 = vld [vmem:[%s285 + $0xf1] sm:$0xff]
      %v640 = vld [vmem:[%s285 + $0xf9] sm:$0xff]
      %v641 = vld [vmem:[%s285 + $0x109] sm:$0xff]
      %v642 = vld [vmem:[%s285 + $0x111] sm:$0xff]
      %v643 = vld [vmem:[%s285 + $0x121] sm:$0xff]
      %v644 = vld [vmem:[%s285 + $0x129] sm:$0xff]
      %v645 = vld [vmem:[%s285 + $0x139] sm:$0xff]
      %v646 = vld [vmem:[%s285 + $0x141] sm:$0xff]
      %v647 = vld [vmem:[%s285 + $0x151] sm:$0xff]
      %v648 = vld [vmem:[%s285 + $0x159] sm:$0xff]
      %v649 = vld [vmem:[%s285 + $0x169] sm:$0xff]
      %v650 = vld [vmem:[%s285 + $0x171] sm:$0xff]
      %v651 = vpack.c.bf16 %v619, %v619
      %v652 = vpack.c.bf16 %v620, %v620
      %v653 = vpack.c.bf16 %v621, %v621
      %v654 = vpack.c.bf16 %v622, %v622
      %v655 = vpack.c.bf16 %v623, %v623
      %v656 = vpack.c.bf16 %v624, %v624
      %v657 = vpack.c.bf16 %v625, %v625
      %v658 = vpack.c.bf16 %v626, %v626
      %v659 = vpack.c.bf16 %v627, %v627
      %v660 = vpack.c.bf16 %v628, %v628
      %v661 = vpack.c.bf16 %v629, %v629
      %v662 = vpack.c.bf16 %v630, %v630
      %v663 = vpack.c.bf16 %v631, %v631
      %v664 = vpack.c.bf16 %v632, %v632
      %v665 = vpack.c.bf16 %v633, %v633
      %v666 = vpack.c.bf16 %v634, %v634
      %v667 = vpack.c.bf16 %v635, %v635
      %v668 = vpack.c.bf16 %v636, %v636
      %v669 = vpack.c.bf16 %v637, %v637
      %v670 = vpack.c.bf16 %v638, %v638
      %v671 = vpack.c.bf16 %v639, %v639
      %v672 = vpack.c.bf16 %v640, %v640
      %v673 = vpack.c.bf16 %v641, %v641
      %v674 = vpack.c.bf16 %v642, %v642
      %v675 = vpack.c.bf16 %v643, %v643
      %v676 = vpack.c.bf16 %v644, %v644
      %v677 = vpack.c.bf16 %v645, %v645
      %v678 = vpack.c.bf16 %v646, %v646
      %v679 = vpack.c.bf16 %v647, %v647
      %v680 = vpack.c.bf16 %v648, %v648
      %v681 = vpack.c.bf16 %v649, %v649
      %v682 = vpack.c.bf16 %v650, %v650
      %v683 = vld [vmem:[%s285 + $0x2] sm:$0xff]
      %v684 = vld [vmem:[%s285 + $0xa] sm:$0xff]
      %v685 = vld [vmem:[%s285 + $0x1a] sm:$0xff]
      %v686 = vld [vmem:[%s285 + $0x22] sm:$0xff]
      %v687 = vld [vmem:[%s285 + $0x32] sm:$0xff]
      %v688 = vld [vmem:[%s285 + $0x3a] sm:$0xff]
      %v689 = vld [vmem:[%s285 + $0x4a] sm:$0xff]
      %v690 = vld [vmem:[%s285 + $0x52] sm:$0xff]
      %v691 = vld [vmem:[%s285 + $0x62] sm:$0xff]
      %v692 = vld [vmem:[%s285 + $0x6a] sm:$0xff]
      %v693 = vld [vmem:[%s285 + $0x7a] sm:$0xff]
      %v694 = vld [vmem:[%s285 + $0x82] sm:$0xff]
      %v695 = vld [vmem:[%s285 + $0x92] sm:$0xff]
      %v696 = vld [vmem:[%s285 + $0x9a] sm:$0xff]
      %v697 = vld [vmem:[%s285 + $0xaa] sm:$0xff]
      %v698 = vld [vmem:[%s285 + $0xb2] sm:$0xff]
      %v699 = vld [vmem:[%s285 + $0xc2] sm:$0xff]
      %v700 = vld [vmem:[%s285 + $0xca] sm:$0xff]
      %v701 = vld [vmem:[%s285 + $0xda] sm:$0xff]
      %v702 = vld [vmem:[%s285 + $0xe2] sm:$0xff]
      %v703 = vld [vmem:[%s285 + $0xf2] sm:$0xff]
      %v704 = vld [vmem:[%s285 + $0xfa] sm:$0xff]
      %v705 = vld [vmem:[%s285 + $0x10a] sm:$0xff]
      %v706 = vld [vmem:[%s285 + $0x112] sm:$0xff]
      %v707 = vld [vmem:[%s285 + $0x122] sm:$0xff]
      %v708 = vld [vmem:[%s285 + $0x12a] sm:$0xff]
      %v709 = vld [vmem:[%s285 + $0x13a] sm:$0xff]
      %v710 = vld [vmem:[%s285 + $0x142] sm:$0xff]
      %v711 = vld [vmem:[%s285 + $0x152] sm:$0xff]
      %v712 = vld [vmem:[%s285 + $0x15a] sm:$0xff]
      %v713 = vld [vmem:[%s285 + $0x16a] sm:$0xff]
      %v714 = vld [vmem:[%s285 + $0x172] sm:$0xff]
      %v715 = vpack.c.bf16 %v683, %v683
      %v716 = vpack.c.bf16 %v684, %v684
      %v717 = vpack.c.bf16 %v685, %v685
      %v718 = vpack.c.bf16 %v686, %v686
      %v719 = vpack.c.bf16 %v687, %v687
      %v720 = vpack.c.bf16 %v688, %v688
      %v721 = vpack.c.bf16 %v689, %v689
      %v722 = vpack.c.bf16 %v690, %v690
      %v723 = vpack.c.bf16 %v691, %v691
      %v724 = vpack.c.bf16 %v692, %v692
      %v725 = vpack.c.bf16 %v693, %v693
      %v726 = vpack.c.bf16 %v694, %v694
      %v727 = vpack.c.bf16 %v695, %v695
      %v728 = vpack.c.bf16 %v696, %v696
      %v729 = vpack.c.bf16 %v697, %v697
      %v730 = vpack.c.bf16 %v698, %v698
      %v731 = vpack.c.bf16 %v699, %v699
      %v732 = vpack.c.bf16 %v700, %v700
      %v733 = vpack.c.bf16 %v701, %v701
      %v734 = vpack.c.bf16 %v702, %v702
      %v735 = vpack.c.bf16 %v703, %v703
      %v736 = vpack.c.bf16 %v704, %v704
      %v737 = vpack.c.bf16 %v705, %v705
      %v738 = vpack.c.bf16 %v706, %v706
      %v739 = vpack.c.bf16 %v707, %v707
      %v740 = vpack.c.bf16 %v708, %v708
      %v741 = vpack.c.bf16 %v709, %v709
      %v742 = vpack.c.bf16 %v710, %v710
      %v743 = vpack.c.bf16 %v711, %v711
      %v744 = vpack.c.bf16 %v712, %v712
      %v745 = vpack.c.bf16 %v713, %v713
      %v746 = vpack.c.bf16 %v714, %v714
      %v747 = vld [vmem:[%s290] sm:$0xff]
      %v748 = vld [vmem:[%s290 + $0x8] sm:$0xff]
      %v749 = vld [vmem:[%s290 + $0x18] sm:$0xff]
      %v750 = vld [vmem:[%s290 + $0x20] sm:$0xff]
      %v751 = vld [vmem:[%s290 + $0x30] sm:$0xff]
      %v752 = vld [vmem:[%s290 + $0x38] sm:$0xff]
      %v753 = vld [vmem:[%s290 + $0x48] sm:$0xff]
      %v754 = vld [vmem:[%s290 + $0x50] sm:$0xff]
      %v755 = vld [vmem:[%s290 + $0x60] sm:$0xff]
      %v756 = vld [vmem:[%s290 + $0x68] sm:$0xff]
      %v757 = vld [vmem:[%s290 + $0x78] sm:$0xff]
      %v758 = vld [vmem:[%s290 + $0x80] sm:$0xff]
      %v759 = vld [vmem:[%s290 + $0x90] sm:$0xff]
      %v760 = vld [vmem:[%s290 + $0x98] sm:$0xff]
      %v761 = vld [vmem:[%s290 + $0xa8] sm:$0xff]
      %v762 = vld [vmem:[%s290 + $0xb0] sm:$0xff]
      %v763 = vld [vmem:[%s290 + $0xc0] sm:$0xff]
      %v764 = vld [vmem:[%s290 + $0xc8] sm:$0xff]
      %v765 = vld [vmem:[%s290 + $0xd8] sm:$0xff]
      %v766 = vld [vmem:[%s290 + $0xe0] sm:$0xff]
      %v767 = vld [vmem:[%s290 + $0xf0] sm:$0xff]
      %v768 = vld [vmem:[%s290 + $0xf8] sm:$0xff]
      %v769 = vld [vmem:[%s290 + $0x108] sm:$0xff]
      %v770 = vld [vmem:[%s290 + $0x110] sm:$0xff]
      %v771 = vld [vmem:[%s290 + $0x120] sm:$0xff]
      %v772 = vld [vmem:[%s290 + $0x128] sm:$0xff]
      %v773 = vld [vmem:[%s290 + $0x138] sm:$0xff]
      %v774 = vld [vmem:[%s290 + $0x140] sm:$0xff]
      %v775 = vld [vmem:[%s290 + $0x150] sm:$0xff]
      %v776 = vld [vmem:[%s290 + $0x158] sm:$0xff]
      %v777 = vld [vmem:[%s290 + $0x168] sm:$0xff]
      %v778 = vld [vmem:[%s290 + $0x170] sm:$0xff]
      %v779 = vpack.c.bf16 %v747, %v747
      %v780 = vpack.c.bf16 %v748, %v748
      %v781 = vpack.c.bf16 %v749, %v749
      %v782 = vpack.c.bf16 %v750, %v750
      %v783 = vpack.c.bf16 %v751, %v751
      %v784 = vpack.c.bf16 %v752, %v752
      %v785 = vpack.c.bf16 %v753, %v753
      %v786 = vpack.c.bf16 %v754, %v754
      %v787 = vpack.c.bf16 %v755, %v755
      %v788 = vpack.c.bf16 %v756, %v756
      %v789 = vpack.c.bf16 %v757, %v757
      %v790 = vpack.c.bf16 %v758, %v758
      %v791 = vpack.c.bf16 %v759, %v759
      %v792 = vpack.c.bf16 %v760, %v760
      %v793 = vpack.c.bf16 %v761, %v761
      %v794 = vpack.c.bf16 %v762, %v762
      %v795 = vpack.c.bf16 %v763, %v763
      %v796 = vpack.c.bf16 %v764, %v764
      %v797 = vpack.c.bf16 %v765, %v765
      %v798 = vpack.c.bf16 %v766, %v766
      %v799 = vpack.c.bf16 %v767, %v767
      %v800 = vpack.c.bf16 %v768, %v768
      %v801 = vpack.c.bf16 %v769, %v769
      %v802 = vpack.c.bf16 %v770, %v770
      %v803 = vpack.c.bf16 %v771, %v771
      %v804 = vpack.c.bf16 %v772, %v772
      %v805 = vpack.c.bf16 %v773, %v773
      %v806 = vpack.c.bf16 %v774, %v774
      %v807 = vpack.c.bf16 %v775, %v775
      %v808 = vpack.c.bf16 %v776, %v776
      %v809 = vpack.c.bf16 %v777, %v777
      %v810 = vpack.c.bf16 %v778, %v778
      %v811 = vld [vmem:[%s290 + $0x1] sm:$0xff]
      %v812 = vld [vmem:[%s290 + $0x9] sm:$0xff]
      %v813 = vld [vmem:[%s290 + $0x19] sm:$0xff]
      %v814 = vld [vmem:[%s290 + $0x21] sm:$0xff]
      %v815 = vld [vmem:[%s290 + $0x31] sm:$0xff]
      %v816 = vld [vmem:[%s290 + $0x39] sm:$0xff]
      %v817 = vld [vmem:[%s290 + $0x49] sm:$0xff]
      %v818 = vld [vmem:[%s290 + $0x51] sm:$0xff]
      %v819 = vld [vmem:[%s290 + $0x61] sm:$0xff]
      %v820 = vld [vmem:[%s290 + $0x69] sm:$0xff]
      %v821 = vld [vmem:[%s290 + $0x79] sm:$0xff]
      %v822 = vld [vmem:[%s290 + $0x81] sm:$0xff]
      %v823 = vld [vmem:[%s290 + $0x91] sm:$0xff]
      %v824 = vld [vmem:[%s290 + $0x99] sm:$0xff]
      %v825 = vld [vmem:[%s290 + $0xa9] sm:$0xff]
      %v826 = vld [vmem:[%s290 + $0xb1] sm:$0xff]
      %v827 = vld [vmem:[%s290 + $0xc1] sm:$0xff]
      %v828 = vld [vmem:[%s290 + $0xc9] sm:$0xff]
      %v829 = vld [vmem:[%s290 + $0xd9] sm:$0xff]
      %v830 = vld [vmem:[%s290 + $0xe1] sm:$0xff]
      %v831 = vld [vmem:[%s290 + $0xf1] sm:$0xff]
      %v832 = vld [vmem:[%s290 + $0xf9] sm:$0xff]
      %v833 = vld [vmem:[%s290 + $0x109] sm:$0xff]
      %v834 = vld [vmem:[%s290 + $0x111] sm:$0xff]
      %v835 = vld [vmem:[%s290 + $0x121] sm:$0xff]
      %v836 = vld [vmem:[%s290 + $0x129] sm:$0xff]
      %v837 = vld [vmem:[%s290 + $0x139] sm:$0xff]
      %v838 = vld [vmem:[%s290 + $0x141] sm:$0xff]
      %v839 = vld [vmem:[%s290 + $0x151] sm:$0xff]
      %v840 = vld [vmem:[%s290 + $0x159] sm:$0xff]
      %v841 = vld [vmem:[%s290 + $0x169] sm:$0xff]
      %v842 = vld [vmem:[%s290 + $0x171] sm:$0xff]
      %v843 = vpack.c.bf16 %v811, %v811
      %v844 = vpack.c.bf16 %v812, %v812
      %v845 = vpack.c.bf16 %v813, %v813
      %v846 = vpack.c.bf16 %v814, %v814
      %v847 = vpack.c.bf16 %v815, %v815
      %v848 = vpack.c.bf16 %v816, %v816
      %v849 = vpack.c.bf16 %v817, %v817
      %v850 = vpack.c.bf16 %v818, %v818
      %v851 = vpack.c.bf16 %v819, %v819
      %v852 = vpack.c.bf16 %v820, %v820
      %v853 = vpack.c.bf16 %v821, %v821
      %v854 = vpack.c.bf16 %v822, %v822
      %v855 = vpack.c.bf16 %v823, %v823
      %v856 = vpack.c.bf16 %v824, %v824
      %v857 = vpack.c.bf16 %v825, %v825
      %v858 = vpack.c.bf16 %v826, %v826
      %v859 = vpack.c.bf16 %v827, %v827
      %v860 = vpack.c.bf16 %v828, %v828
      %v861 = vpack.c.bf16 %v829, %v829
      %v862 = vpack.c.bf16 %v830, %v830
      %v863 = vpack.c.bf16 %v831, %v831
      %v864 = vpack.c.bf16 %v832, %v832
      %v865 = vpack.c.bf16 %v833, %v833
      %v866 = vpack.c.bf16 %v834, %v834
      %v867 = vpack.c.bf16 %v835, %v835
      %v868 = vpack.c.bf16 %v836, %v836
      %v869 = vpack.c.bf16 %v837, %v837
      %v870 = vpack.c.bf16 %v838, %v838
      %v871 = vpack.c.bf16 %v839, %v839
      %v872 = vpack.c.bf16 %v840, %v840
      %v873 = vpack.c.bf16 %v841, %v841
      %v874 = vpack.c.bf16 %v842, %v842
      %v875 = vld [vmem:[%s290 + $0x2] sm:$0xff]
      %v876 = vld [vmem:[%s290 + $0xa] sm:$0xff]
      %v877 = vld [vmem:[%s290 + $0x1a] sm:$0xff]
      %v878 = vld [vmem:[%s290 + $0x22] sm:$0xff]
      %v879 = vld [vmem:[%s290 + $0x32] sm:$0xff]
      %v880 = vld [vmem:[%s290 + $0x3a] sm:$0xff]
      %v881 = vld [vmem:[%s290 + $0x4a] sm:$0xff]
      %v882 = vld [vmem:[%s290 + $0x52] sm:$0xff]
      %v883 = vld [vmem:[%s290 + $0x62] sm:$0xff]
      %v884 = vld [vmem:[%s290 + $0x6a] sm:$0xff]
      %v885 = vld [vmem:[%s290 + $0x7a] sm:$0xff]
      %v886 = vld [vmem:[%s290 + $0x82] sm:$0xff]
      %v887 = vld [vmem:[%s290 + $0x92] sm:$0xff]
      %v888 = vld [vmem:[%s290 + $0x9a] sm:$0xff]
      %v889 = vld [vmem:[%s290 + $0xaa] sm:$0xff]
      %v890 = vld [vmem:[%s290 + $0xb2] sm:$0xff]
      %v891 = vld [vmem:[%s290 + $0xc2] sm:$0xff]
      %v892 = vld [vmem:[%s290 + $0xca] sm:$0xff]
      %v893 = vld [vmem:[%s290 + $0xda] sm:$0xff]
      %v894 = vld [vmem:[%s290 + $0xe2] sm:$0xff]
      %v895 = vld [vmem:[%s290 + $0xf2] sm:$0xff]
      %v896 = vld [vmem:[%s290 + $0xfa] sm:$0xff]
      %v897 = vld [vmem:[%s290 + $0x10a] sm:$0xff]
      %v898 = vld [vmem:[%s290 + $0x112] sm:$0xff]
      %v899 = vld [vmem:[%s290 + $0x122] sm:$0xff]
      %v900 = vld [vmem:[%s290 + $0x12a] sm:$0xff]
      %v901 = vld [vmem:[%s290 + $0x13a] sm:$0xff]
      %v902 = vld [vmem:[%s290 + $0x142] sm:$0xff]
      %v903 = vld [vmem:[%s290 + $0x152] sm:$0xff]
      %v904 = vld [vmem:[%s290 + $0x15a] sm:$0xff]
      %v905 = vld [vmem:[%s290 + $0x16a] sm:$0xff]
      %v906 = vld [vmem:[%s290 + $0x172] sm:$0xff]
      %v907 = vpack.c.bf16 %v875, %v875
      %v908 = vpack.c.bf16 %v876, %v876
      %v909 = vpack.c.bf16 %v877, %v877
      %v910 = vpack.c.bf16 %v878, %v878
      %v911 = vpack.c.bf16 %v879, %v879
      %v912 = vpack.c.bf16 %v880, %v880
      %v913 = vpack.c.bf16 %v881, %v881
      %v914 = vpack.c.bf16 %v882, %v882
      %v915 = vpack.c.bf16 %v883, %v883
      %v916 = vpack.c.bf16 %v884, %v884
      %v917 = vpack.c.bf16 %v885, %v885
      %v918 = vpack.c.bf16 %v886, %v886
      %v919 = vpack.c.bf16 %v887, %v887
      %v920 = vpack.c.bf16 %v888, %v888
      %v921 = vpack.c.bf16 %v889, %v889
      %v922 = vpack.c.bf16 %v890, %v890
      %v923 = vpack.c.bf16 %v891, %v891
      %v924 = vpack.c.bf16 %v892, %v892
      %v925 = vpack.c.bf16 %v893, %v893
      %v926 = vpack.c.bf16 %v894, %v894
      %v927 = vpack.c.bf16 %v895, %v895
      %v928 = vpack.c.bf16 %v896, %v896
      %v929 = vpack.c.bf16 %v897, %v897
      %v930 = vpack.c.bf16 %v898, %v898
      %v931 = vpack.c.bf16 %v899, %v899
      %v932 = vpack.c.bf16 %v900, %v900
      %v933 = vpack.c.bf16 %v901, %v901
      %v934 = vpack.c.bf16 %v902, %v902
      %v935 = vpack.c.bf16 %v903, %v903
      %v936 = vpack.c.bf16 %v904, %v904
      %v937 = vpack.c.bf16 %v905, %v905
      %v938 = vpack.c.bf16 %v906, %v906
      %v971 = vunpack.c.l.b16 %v395
      %v972 = vunpack.c.l.b16 %v396
      %v973 = vunpack.c.l.b16 %v397
      %v974 = vunpack.c.l.b16 %v398
      %v975 = vunpack.c.l.b16 %v399
      %v976 = vunpack.c.l.b16 %v400
      %v977 = vunpack.c.l.b16 %v401
      %v978 = vunpack.c.l.b16 %v402
      %v979 = vunpack.c.l.b16 %v403
      %v980 = vunpack.c.l.b16 %v404
      %v981 = vunpack.c.l.b16 %v405
      %v982 = vunpack.c.l.b16 %v406
      %v983 = vunpack.c.l.b16 %v407
      %v984 = vunpack.c.l.b16 %v408
      %v985 = vunpack.c.l.b16 %v409
      %v986 = vunpack.c.l.b16 %v410
      %v987 = vunpack.c.l.b16 %v411
      %v988 = vunpack.c.l.b16 %v412
      %v989 = vunpack.c.l.b16 %v413
      %v990 = vunpack.c.l.b16 %v414
      %v991 = vunpack.c.l.b16 %v415
      %v992 = vunpack.c.l.b16 %v416
      %v993 = vunpack.c.l.b16 %v417
      %v994 = vunpack.c.l.b16 %v418
      %v995 = vunpack.c.l.b16 %v419
      %v996 = vunpack.c.l.b16 %v420
      %v997 = vunpack.c.l.b16 %v421
      %v998 = vunpack.c.l.b16 %v422
      %v999 = vunpack.c.l.b16 %v423
      %v1000 = vunpack.c.l.b16 %v424
      %v1001 = vunpack.c.l.b16 %v425
      %v1002 = vunpack.c.l.b16 %v426
      %v1003 = vpack.c.b16 %v972, %v971
      %v1004 = vpack.c.b16 %v974, %v973
      %v1005 = vpack.c.b16 %v976, %v975
      %v1006 = vpack.c.b16 %v978, %v977
      %v1007 = vpack.c.b16 %v980, %v979
      %v1008 = vpack.c.b16 %v982, %v981
      %v1009 = vpack.c.b16 %v984, %v983
      %v1010 = vpack.c.b16 %v986, %v985
      %v1011 = vpack.c.b16 %v988, %v987
      %v1012 = vpack.c.b16 %v990, %v989
      %v1013 = vpack.c.b16 %v992, %v991
      %v1014 = vpack.c.b16 %v994, %v993
      %v1015 = vpack.c.b16 %v996, %v995
      %v1016 = vpack.c.b16 %v998, %v997
      %v1017 = vpack.c.b16 %v1000, %v999
      %v1018 = vpack.c.b16 %v1002, %v1001
      %v1067 = vunpack.c.l.b16 %v459
      %v1068 = vunpack.c.l.b16 %v460
      %v1069 = vunpack.c.l.b16 %v461
      %v1070 = vunpack.c.l.b16 %v462
      %v1071 = vunpack.c.l.b16 %v463
      %v1072 = vunpack.c.l.b16 %v464
      %v1073 = vunpack.c.l.b16 %v465
      %v1074 = vunpack.c.l.b16 %v466
      %v1075 = vunpack.c.l.b16 %v467
      %v1076 = vunpack.c.l.b16 %v468
      %v1077 = vunpack.c.l.b16 %v469
      %v1078 = vunpack.c.l.b16 %v470
      %v1079 = vunpack.c.l.b16 %v471
      %v1080 = vunpack.c.l.b16 %v472
      %v1081 = vunpack.c.l.b16 %v473
      %v1082 = vunpack.c.l.b16 %v474
      %v1083 = vunpack.c.l.b16 %v475
      %v1084 = vunpack.c.l.b16 %v476
      %v1085 = vunpack.c.l.b16 %v477
      %v1086 = vunpack.c.l.b16 %v478
      %v1087 = vunpack.c.l.b16 %v479
      %v1088 = vunpack.c.l.b16 %v480
      %v1089 = vunpack.c.l.b16 %v481
      %v1090 = vunpack.c.l.b16 %v482
      %v1091 = vunpack.c.l.b16 %v483
      %v1092 = vunpack.c.l.b16 %v484
      %v1093 = vunpack.c.l.b16 %v485
      %v1094 = vunpack.c.l.b16 %v486
      %v1095 = vunpack.c.l.b16 %v487
      %v1096 = vunpack.c.l.b16 %v488
      %v1097 = vunpack.c.l.b16 %v489
      %v1098 = vunpack.c.l.b16 %v490
      %v1099 = vpack.c.b16 %v1068, %v1067
      %v1100 = vpack.c.b16 %v1070, %v1069
      %v1101 = vpack.c.b16 %v1072, %v1071
      %v1102 = vpack.c.b16 %v1074, %v1073
      %v1103 = vpack.c.b16 %v1076, %v1075
      %v1104 = vpack.c.b16 %v1078, %v1077
      %v1105 = vpack.c.b16 %v1080, %v1079
      %v1106 = vpack.c.b16 %v1082, %v1081
      %v1107 = vpack.c.b16 %v1084, %v1083
      %v1108 = vpack.c.b16 %v1086, %v1085
      %v1109 = vpack.c.b16 %v1088, %v1087
      %v1110 = vpack.c.b16 %v1090, %v1089
      %v1111 = vpack.c.b16 %v1092, %v1091
      %v1112 = vpack.c.b16 %v1094, %v1093
      %v1113 = vpack.c.b16 %v1096, %v1095
      %v1114 = vpack.c.b16 %v1098, %v1097
      %v1163 = vunpack.c.l.b16 %v523
      %v1164 = vunpack.c.l.b16 %v524
      %v1165 = vunpack.c.l.b16 %v525
      %v1166 = vunpack.c.l.b16 %v526
      %v1167 = vunpack.c.l.b16 %v527
      %v1168 = vunpack.c.l.b16 %v528
      %v1169 = vunpack.c.l.b16 %v529
      %v1170 = vunpack.c.l.b16 %v530
      %v1171 = vunpack.c.l.b16 %v531
      %v1172 = vunpack.c.l.b16 %v532
      %v1173 = vunpack.c.l.b16 %v533
      %v1174 = vunpack.c.l.b16 %v534
      %v1175 = vunpack.c.l.b16 %v535
      %v1176 = vunpack.c.l.b16 %v536
      %v1177 = vunpack.c.l.b16 %v537
      %v1178 = vunpack.c.l.b16 %v538
      %v1179 = vunpack.c.l.b16 %v539
      %v1180 = vunpack.c.l.b16 %v540
      %v1181 = vunpack.c.l.b16 %v541
      %v1182 = vunpack.c.l.b16 %v542
      %v1183 = vunpack.c.l.b16 %v543
      %v1184 = vunpack.c.l.b16 %v544
      %v1185 = vunpack.c.l.b16 %v545
      %v1186 = vunpack.c.l.b16 %v546
      %v1187 = vunpack.c.l.b16 %v547
      %v1188 = vunpack.c.l.b16 %v548
      %v1189 = vunpack.c.l.b16 %v549
      %v1190 = vunpack.c.l.b16 %v550
      %v1191 = vunpack.c.l.b16 %v551
      %v1192 = vunpack.c.l.b16 %v552
      %v1193 = vunpack.c.l.b16 %v553
      %v1194 = vunpack.c.l.b16 %v554
      %v1195 = vpack.c.b16 %v1164, %v1163
      %v1196 = vpack.c.b16 %v1166, %v1165
      %v1197 = vpack.c.b16 %v1168, %v1167
      %v1198 = vpack.c.b16 %v1170, %v1169
      %v1199 = vpack.c.b16 %v1172, %v1171
      %v1200 = vpack.c.b16 %v1174, %v1173
      %v1201 = vpack.c.b16 %v1176, %v1175
      %v1202 = vpack.c.b16 %v1178, %v1177
      %v1203 = vpack.c.b16 %v1180, %v1179
      %v1204 = vpack.c.b16 %v1182, %v1181
      %v1205 = vpack.c.b16 %v1184, %v1183
      %v1206 = vpack.c.b16 %v1186, %v1185
      %v1207 = vpack.c.b16 %v1188, %v1187
      %v1208 = vpack.c.b16 %v1190, %v1189
      %v1209 = vpack.c.b16 %v1192, %v1191
      %v1210 = vpack.c.b16 %v1194, %v1193
      %v1259 = vunpack.c.l.b16 %v587
      %v1260 = vunpack.c.l.b16 %v588
      %v1261 = vunpack.c.l.b16 %v589
      %v1262 = vunpack.c.l.b16 %v590
      %v1263 = vunpack.c.l.b16 %v591
      %v1264 = vunpack.c.l.b16 %v592
      %v1265 = vunpack.c.l.b16 %v593
      %v1266 = vunpack.c.l.b16 %v594
      %v1267 = vunpack.c.l.b16 %v595
      %v1268 = vunpack.c.l.b16 %v596
      %v1269 = vunpack.c.l.b16 %v597
      %v1270 = vunpack.c.l.b16 %v598
      %v1271 = vunpack.c.l.b16 %v599
      %v1272 = vunpack.c.l.b16 %v600
      %v1273 = vunpack.c.l.b16 %v601
      %v1274 = vunpack.c.l.b16 %v602
      %v1275 = vunpack.c.l.b16 %v603
      %v1276 = vunpack.c.l.b16 %v604
      %v1277 = vunpack.c.l.b16 %v605
      %v1278 = vunpack.c.l.b16 %v606
      %v1279 = vunpack.c.l.b16 %v607
      %v1280 = vunpack.c.l.b16 %v608
      %v1281 = vunpack.c.l.b16 %v609
      %v1282 = vunpack.c.l.b16 %v610
      %v1283 = vunpack.c.l.b16 %v611
      %v1284 = vunpack.c.l.b16 %v612
      %v1285 = vunpack.c.l.b16 %v613
      %v1286 = vunpack.c.l.b16 %v614
      %v1287 = vunpack.c.l.b16 %v615
      %v1288 = vunpack.c.l.b16 %v616
      %v1289 = vunpack.c.l.b16 %v617
      %v1290 = vunpack.c.l.b16 %v618
      %v1291 = vpack.c.b16 %v1260, %v1259
      %v1292 = vpack.c.b16 %v1262, %v1261
      %v1293 = vpack.c.b16 %v1264, %v1263
      %v1294 = vpack.c.b16 %v1266, %v1265
      %v1295 = vpack.c.b16 %v1268, %v1267
      %v1296 = vpack.c.b16 %v1270, %v1269
      %v1297 = vpack.c.b16 %v1272, %v1271
      %v1298 = vpack.c.b16 %v1274, %v1273
      %v1299 = vpack.c.b16 %v1276, %v1275
      %v1300 = vpack.c.b16 %v1278, %v1277
      %v1301 = vpack.c.b16 %v1280, %v1279
      %v1302 = vpack.c.b16 %v1282, %v1281
      %v1303 = vpack.c.b16 %v1284, %v1283
      %v1304 = vpack.c.b16 %v1286, %v1285
      %v1305 = vpack.c.b16 %v1288, %v1287
      %v1306 = vpack.c.b16 %v1290, %v1289
      %v1355 = vunpack.c.l.b16 %v651
      %v1356 = vunpack.c.l.b16 %v652
      %v1357 = vunpack.c.l.b16 %v653
      %v1358 = vunpack.c.l.b16 %v654
      %v1359 = vunpack.c.l.b16 %v655
      %v1360 = vunpack.c.l.b16 %v656
      %v1361 = vunpack.c.l.b16 %v657
      %v1362 = vunpack.c.l.b16 %v658
      %v1363 = vunpack.c.l.b16 %v659
      %v1364 = vunpack.c.l.b16 %v660
      %v1365 = vunpack.c.l.b16 %v661
      %v1366 = vunpack.c.l.b16 %v662
      %v1367 = vunpack.c.l.b16 %v663
      %v1368 = vunpack.c.l.b16 %v664
      %v1369 = vunpack.c.l.b16 %v665
      %v1370 = vunpack.c.l.b16 %v666
      %v1371 = vunpack.c.l.b16 %v667
      %v1372 = vunpack.c.l.b16 %v668
      %v1373 = vunpack.c.l.b16 %v669
      %v1374 = vunpack.c.l.b16 %v670
      %v1375 = vunpack.c.l.b16 %v671
      %v1376 = vunpack.c.l.b16 %v672
      %v1377 = vunpack.c.l.b16 %v673
      %v1378 = vunpack.c.l.b16 %v674
      %v1379 = vunpack.c.l.b16 %v675
      %v1380 = vunpack.c.l.b16 %v676
      %v1381 = vunpack.c.l.b16 %v677
      %v1382 = vunpack.c.l.b16 %v678
      %v1383 = vunpack.c.l.b16 %v679
      %v1384 = vunpack.c.l.b16 %v680
      %v1385 = vunpack.c.l.b16 %v681
      %v1386 = vunpack.c.l.b16 %v682
      %v1387 = vpack.c.b16 %v1356, %v1355
      %v1388 = vpack.c.b16 %v1358, %v1357
      %v1389 = vpack.c.b16 %v1360, %v1359
      %v1390 = vpack.c.b16 %v1362, %v1361
      %v1391 = vpack.c.b16 %v1364, %v1363
      %v1392 = vpack.c.b16 %v1366, %v1365
      %v1393 = vpack.c.b16 %v1368, %v1367
      %v1394 = vpack.c.b16 %v1370, %v1369
      %v1395 = vpack.c.b16 %v1372, %v1371
      %v1396 = vpack.c.b16 %v1374, %v1373
      %v1397 = vpack.c.b16 %v1376, %v1375
      %v1398 = vpack.c.b16 %v1378, %v1377
      %v1399 = vpack.c.b16 %v1380, %v1379
      %v1400 = vpack.c.b16 %v1382, %v1381
      %v1401 = vpack.c.b16 %v1384, %v1383
      %v1402 = vpack.c.b16 %v1386, %v1385
      %v1451 = vunpack.c.l.b16 %v715
      %v1452 = vunpack.c.l.b16 %v716
      %v1453 = vunpack.c.l.b16 %v717
      %v1454 = vunpack.c.l.b16 %v718
      %v1455 = vunpack.c.l.b16 %v719
      %v1456 = vunpack.c.l.b16 %v720
      %v1457 = vunpack.c.l.b16 %v721
      %v1458 = vunpack.c.l.b16 %v722
      %v1459 = vunpack.c.l.b16 %v723
      %v1460 = vunpack.c.l.b16 %v724
      %v1461 = vunpack.c.l.b16 %v725
      %v1462 = vunpack.c.l.b16 %v726
      %v1463 = vunpack.c.l.b16 %v727
      %v1464 = vunpack.c.l.b16 %v728
      %v1465 = vunpack.c.l.b16 %v729
      %v1466 = vunpack.c.l.b16 %v730
      %v1467 = vunpack.c.l.b16 %v731
      %v1468 = vunpack.c.l.b16 %v732
      %v1469 = vunpack.c.l.b16 %v733
      %v1470 = vunpack.c.l.b16 %v734
      %v1471 = vunpack.c.l.b16 %v735
      %v1472 = vunpack.c.l.b16 %v736
      %v1473 = vunpack.c.l.b16 %v737
      %v1474 = vunpack.c.l.b16 %v738
      %v1475 = vunpack.c.l.b16 %v739
      %v1476 = vunpack.c.l.b16 %v740
      %v1477 = vunpack.c.l.b16 %v741
      %v1478 = vunpack.c.l.b16 %v742
      %v1479 = vunpack.c.l.b16 %v743
      %v1480 = vunpack.c.l.b16 %v744
      %v1481 = vunpack.c.l.b16 %v745
      %v1482 = vunpack.c.l.b16 %v746
      %v1483 = vpack.c.b16 %v1452, %v1451
      %v1484 = vpack.c.b16 %v1454, %v1453
      %v1485 = vpack.c.b16 %v1456, %v1455
      %v1486 = vpack.c.b16 %v1458, %v1457
      %v1487 = vpack.c.b16 %v1460, %v1459
      %v1488 = vpack.c.b16 %v1462, %v1461
      %v1489 = vpack.c.b16 %v1464, %v1463
      %v1490 = vpack.c.b16 %v1466, %v1465
      %v1491 = vpack.c.b16 %v1468, %v1467
      %v1492 = vpack.c.b16 %v1470, %v1469
      %v1493 = vpack.c.b16 %v1472, %v1471
      %v1494 = vpack.c.b16 %v1474, %v1473
      %v1495 = vpack.c.b16 %v1476, %v1475
      %v1496 = vpack.c.b16 %v1478, %v1477
      %v1497 = vpack.c.b16 %v1480, %v1479
      %v1498 = vpack.c.b16 %v1482, %v1481
      %v1547 = vunpack.c.l.b16 %v779
      %v1548 = vunpack.c.l.b16 %v780
      %v1549 = vunpack.c.l.b16 %v781
      %v1550 = vunpack.c.l.b16 %v782
      %v1551 = vunpack.c.l.b16 %v783
      %v1552 = vunpack.c.l.b16 %v784
      %v1553 = vunpack.c.l.b16 %v785
      %v1554 = vunpack.c.l.b16 %v786
      %v1555 = vunpack.c.l.b16 %v787
      %v1556 = vunpack.c.l.b16 %v788
      %v1557 = vunpack.c.l.b16 %v789
      %v1558 = vunpack.c.l.b16 %v790
      %v1559 = vunpack.c.l.b16 %v791
      %v1560 = vunpack.c.l.b16 %v792
      %v1561 = vunpack.c.l.b16 %v793
      %v1562 = vunpack.c.l.b16 %v794
      %v1563 = vunpack.c.l.b16 %v795
      %v1564 = vunpack.c.l.b16 %v796
      %v1565 = vunpack.c.l.b16 %v797
      %v1566 = vunpack.c.l.b16 %v798
      %v1567 = vunpack.c.l.b16 %v799
      %v1568 = vunpack.c.l.b16 %v800
      %v1569 = vunpack.c.l.b16 %v801
      %v1570 = vunpack.c.l.b16 %v802
      %v1571 = vunpack.c.l.b16 %v803
      %v1572 = vunpack.c.l.b16 %v804
      %v1573 = vunpack.c.l.b16 %v805
      %v1574 = vunpack.c.l.b16 %v806
      %v1575 = vunpack.c.l.b16 %v807
      %v1576 = vunpack.c.l.b16 %v808
      %v1577 = vunpack.c.l.b16 %v809
      %v1578 = vunpack.c.l.b16 %v810
      %v1579 = vpack.c.b16 %v1548, %v1547
      %v1580 = vpack.c.b16 %v1550, %v1549
      %v1581 = vpack.c.b16 %v1552, %v1551
      %v1582 = vpack.c.b16 %v1554, %v1553
      %v1583 = vpack.c.b16 %v1556, %v1555
      %v1584 = vpack.c.b16 %v1558, %v1557
      %v1585 = vpack.c.b16 %v1560, %v1559
      %v1586 = vpack.c.b16 %v1562, %v1561
      %v1587 = vpack.c.b16 %v1564, %v1563
      %v1588 = vpack.c.b16 %v1566, %v1565
      %v1589 = vpack.c.b16 %v1568, %v1567
      %v1590 = vpack.c.b16 %v1570, %v1569
      %v1591 = vpack.c.b16 %v1572, %v1571
      %v1592 = vpack.c.b16 %v1574, %v1573
      %v1593 = vpack.c.b16 %v1576, %v1575
      %v1594 = vpack.c.b16 %v1578, %v1577
      %v1643 = vunpack.c.l.b16 %v843
      %v1644 = vunpack.c.l.b16 %v844
      %v1645 = vunpack.c.l.b16 %v845
      %v1646 = vunpack.c.l.b16 %v846
      %v1647 = vunpack.c.l.b16 %v847
      %v1648 = vunpack.c.l.b16 %v848
      %v1649 = vunpack.c.l.b16 %v849
      %v1650 = vunpack.c.l.b16 %v850
      %v1651 = vunpack.c.l.b16 %v851
      %v1652 = vunpack.c.l.b16 %v852
      %v1653 = vunpack.c.l.b16 %v853
      %v1654 = vunpack.c.l.b16 %v854
      %v1655 = vunpack.c.l.b16 %v855
      %v1656 = vunpack.c.l.b16 %v856
      %v1657 = vunpack.c.l.b16 %v857
      %v1658 = vunpack.c.l.b16 %v858
      %v1659 = vunpack.c.l.b16 %v859
      %v1660 = vunpack.c.l.b16 %v860
      %v1661 = vunpack.c.l.b16 %v861
      %v1662 = vunpack.c.l.b16 %v862
      %v1663 = vunpack.c.l.b16 %v863
      %v1664 = vunpack.c.l.b16 %v864
      %v1665 = vunpack.c.l.b16 %v865
      %v1666 = vunpack.c.l.b16 %v866
      %v1667 = vunpack.c.l.b16 %v867
      %v1668 = vunpack.c.l.b16 %v868
      %v1669 = vunpack.c.l.b16 %v869
      %v1670 = vunpack.c.l.b16 %v870
      %v1671 = vunpack.c.l.b16 %v871
      %v1672 = vunpack.c.l.b16 %v872
      %v1673 = vunpack.c.l.b16 %v873
      %v1674 = vunpack.c.l.b16 %v874
      %v1675 = vpack.c.b16 %v1644, %v1643
      %v1676 = vpack.c.b16 %v1646, %v1645
      %v1677 = vpack.c.b16 %v1648, %v1647
      %v1678 = vpack.c.b16 %v1650, %v1649
      %v1679 = vpack.c.b16 %v1652, %v1651
      %v1680 = vpack.c.b16 %v1654, %v1653
      %v1681 = vpack.c.b16 %v1656, %v1655
      %v1682 = vpack.c.b16 %v1658, %v1657
      %v1683 = vpack.c.b16 %v1660, %v1659
      %v1684 = vpack.c.b16 %v1662, %v1661
      %v1685 = vpack.c.b16 %v1664, %v1663
      %v1686 = vpack.c.b16 %v1666, %v1665
      %v1687 = vpack.c.b16 %v1668, %v1667
      %v1688 = vpack.c.b16 %v1670, %v1669
      %v1689 = vpack.c.b16 %v1672, %v1671
      %v1690 = vpack.c.b16 %v1674, %v1673
      %v1739 = vunpack.c.l.b16 %v907
      %v1740 = vunpack.c.l.b16 %v908
      %v1741 = vunpack.c.l.b16 %v909
      %v1742 = vunpack.c.l.b16 %v910
      %v1743 = vunpack.c.l.b16 %v911
      %v1744 = vunpack.c.l.b16 %v912
      %v1745 = vunpack.c.l.b16 %v913
      %v1746 = vunpack.c.l.b16 %v914
      %v1747 = vunpack.c.l.b16 %v915
      %v1748 = vunpack.c.l.b16 %v916
      %v1749 = vunpack.c.l.b16 %v917
      %v1750 = vunpack.c.l.b16 %v918
      %v1751 = vunpack.c.l.b16 %v919
      %v1752 = vunpack.c.l.b16 %v920
      %v1753 = vunpack.c.l.b16 %v921
      %v1754 = vunpack.c.l.b16 %v922
      %v1755 = vunpack.c.l.b16 %v923
      %v1756 = vunpack.c.l.b16 %v924
      %v1757 = vunpack.c.l.b16 %v925
      %v1758 = vunpack.c.l.b16 %v926
      %v1759 = vunpack.c.l.b16 %v927
      %v1760 = vunpack.c.l.b16 %v928
      %v1761 = vunpack.c.l.b16 %v929
      %v1762 = vunpack.c.l.b16 %v930
      %v1763 = vunpack.c.l.b16 %v931
      %v1764 = vunpack.c.l.b16 %v932
      %v1765 = vunpack.c.l.b16 %v933
      %v1766 = vunpack.c.l.b16 %v934
      %v1767 = vunpack.c.l.b16 %v935
      %v1768 = vunpack.c.l.b16 %v936
      %v1769 = vunpack.c.l.b16 %v937
      %v1770 = vunpack.c.l.b16 %v938
      %v1771 = vpack.c.b16 %v1740, %v1739
      %v1772 = vpack.c.b16 %v1742, %v1741
      %v1773 = vpack.c.b16 %v1744, %v1743
      %v1774 = vpack.c.b16 %v1746, %v1745
      %v1775 = vpack.c.b16 %v1748, %v1747
      %v1776 = vpack.c.b16 %v1750, %v1749
      %v1777 = vpack.c.b16 %v1752, %v1751
      %v1778 = vpack.c.b16 %v1754, %v1753
      %v1779 = vpack.c.b16 %v1756, %v1755
      %v1780 = vpack.c.b16 %v1758, %v1757
      %v1781 = vpack.c.b16 %v1760, %v1759
      %v1782 = vpack.c.b16 %v1762, %v1761
      %v1783 = vpack.c.b16 %v1764, %v1763
      %v1784 = vpack.c.b16 %v1766, %v1765
      %v1785 = vpack.c.b16 %v1768, %v1767
      %v1786 = vpack.c.b16 %v1770, %v1769
      %v1803 = vld [vmem:[%s1] sm:$0xf]
      %v1804 = vld [vmem:[%s1 + $0x4] sm:$0xf]
      %v1805 = vld [vmem:[%s1 + $0x8] sm:$0xf]
      %v1806 = vld [vmem:[%s1 + $0xc] sm:$0xf]
      %v1807 = vld [vmem:[%s1 + $0x10] sm:$0xf]
      %v1808 = vld [vmem:[%s1 + $0x14] sm:$0xf]
      %v1809 = vld [vmem:[%s1 + $0x18] sm:$0xf]
      %v1810 = vld [vmem:[%s1 + $0x1c] sm:$0xf]
      %v1811 = vld [vmem:[%s1 + $0x20] sm:$0xf]
      %v1812 = vld [vmem:[%s1 + $0x24] sm:$0xf]
      %v1813 = vld [vmem:[%s1 + $0x28] sm:$0xf]
      %v1814 = vld [vmem:[%s1 + $0x2c] sm:$0xf]
      %v1815 = vld [vmem:[%s1 + $0x30] sm:$0xf]
      %v1816 = vld [vmem:[%s1 + $0x34] sm:$0xf]
      %v1817 = vld [vmem:[%s1 + $0x38] sm:$0xf]
      %v1818 = vld [vmem:[%s1 + $0x3c] sm:$0xf]
      %v1819 = vld [vmem:[%s1 + $0x40] sm:$0xf]
      %v1820 = vld [vmem:[%s1 + $0x44] sm:$0xf]
      %v1821 = vld [vmem:[%s1 + $0x48] sm:$0xf]
      %v1822 = vld [vmem:[%s1 + $0x4c] sm:$0xf]
      %v1823 = vld [vmem:[%s1 + $0x50] sm:$0xf]
      %v1824 = vld [vmem:[%s1 + $0x54] sm:$0xf]
      %v1825 = vld [vmem:[%s1 + $0x58] sm:$0xf]
      %v1826 = vld [vmem:[%s1 + $0x5c] sm:$0xf]
      %v1827 = vld [vmem:[%s1 + $0x60] sm:$0xf]
      %v1828 = vld [vmem:[%s1 + $0x64] sm:$0xf]
      %v1829 = vld [vmem:[%s1 + $0x68] sm:$0xf]
      %v1830 = vld [vmem:[%s1 + $0x6c] sm:$0xf]
      %v1831 = vld [vmem:[%s1 + $0x70] sm:$0xf]
      %v1832 = vld [vmem:[%s1 + $0x74] sm:$0xf]
      %v1833 = vld [vmem:[%s1 + $0x78] sm:$0xf]
      %v1834 = vld [vmem:[%s1 + $0x7c] sm:$0xf]
      %v1835 = vld [vmem:[%s1 + $0x80] sm:$0xf]
      %v1836 = vld [vmem:[%s1 + $0x84] sm:$0xf]
      %v1837 = vld [vmem:[%s1 + $0x88] sm:$0xf]
      %v1838 = vld [vmem:[%s1 + $0x8c] sm:$0xf]
      %v1839 = vld [vmem:[%s1 + $0x90] sm:$0xf]
      %v1840 = vld [vmem:[%s1 + $0x94] sm:$0xf]
      %v1841 = vld [vmem:[%s1 + $0x98] sm:$0xf]
      %v1842 = vld [vmem:[%s1 + $0x9c] sm:$0xf]
      %v1843 = vld [vmem:[%s1 + $0xa0] sm:$0xf]
      %v1844 = vld [vmem:[%s1 + $0xa4] sm:$0xf]
      %v1845 = vld [vmem:[%s1 + $0xa8] sm:$0xf]
      %v1846 = vld [vmem:[%s1 + $0xac] sm:$0xf]
      %v1847 = vld [vmem:[%s1 + $0xb0] sm:$0xf]
      %v1848 = vld [vmem:[%s1 + $0xb4] sm:$0xf]
      %v1849 = vld [vmem:[%s1 + $0xb8] sm:$0xf]
      %v1850 = vld [vmem:[%s1 + $0xbc] sm:$0xf]
      %v1851 = vld [vmem:[%s1 + $0xc0] sm:$0xf]
      %v1852 = vld [vmem:[%s1 + $0xc4] sm:$0xf]
      %v1853 = vld [vmem:[%s1 + $0xc8] sm:$0xf]
      %v1854 = vld [vmem:[%s1 + $0xcc] sm:$0xf]
      %v1855 = vld [vmem:[%s1 + $0xd0] sm:$0xf]
      %v1856 = vld [vmem:[%s1 + $0xd4] sm:$0xf]
      %v1857 = vld [vmem:[%s1 + $0xd8] sm:$0xf]
      %v1858 = vld [vmem:[%s1 + $0xdc] sm:$0xf]
      %v1859 = vld [vmem:[%s1 + $0xe0] sm:$0xf]
      %v1860 = vld [vmem:[%s1 + $0xe4] sm:$0xf]
      %v1861 = vld [vmem:[%s1 + $0xe8] sm:$0xf]
      %v1862 = vld [vmem:[%s1 + $0xec] sm:$0xf]
      %v1863 = vld [vmem:[%s1 + $0xf0] sm:$0xf]
      %v1864 = vld [vmem:[%s1 + $0xf4] sm:$0xf]
      %v1865 = vld [vmem:[%s1 + $0xf8] sm:$0xf]
      %v1866 = vld [vmem:[%s1 + $0xfc] sm:$0xf]
      %v1867 = vld [vmem:[%s1 + $0x100] sm:$0xf]
      %v1868 = vld [vmem:[%s1 + $0x104] sm:$0xf]
      %v1869 = vld [vmem:[%s1 + $0x108] sm:$0xf]
      %v1870 = vld [vmem:[%s1 + $0x10c] sm:$0xf]
      %v1871 = vld [vmem:[%s1 + $0x110] sm:$0xf]
      %v1872 = vld [vmem:[%s1 + $0x114] sm:$0xf]
      %v1873 = vld [vmem:[%s1 + $0x118] sm:$0xf]
      %v1874 = vld [vmem:[%s1 + $0x11c] sm:$0xf]
      %v1875 = vld [vmem:[%s1 + $0x120] sm:$0xf]
      %v1876 = vld [vmem:[%s1 + $0x124] sm:$0xf]
      %v1877 = vld [vmem:[%s1 + $0x128] sm:$0xf]
      %v1878 = vld [vmem:[%s1 + $0x12c] sm:$0xf]
      %v1879 = vld [vmem:[%s1 + $0x130] sm:$0xf]
      %v1880 = vld [vmem:[%s1 + $0x134] sm:$0xf]
      %v1881 = vld [vmem:[%s1 + $0x138] sm:$0xf]
      %v1882 = vld [vmem:[%s1 + $0x13c] sm:$0xf]
      %v1883 = vld [vmem:[%s1 + $0x140] sm:$0xf]
      %v1884 = vld [vmem:[%s1 + $0x144] sm:$0xf]
      %v1885 = vld [vmem:[%s1 + $0x148] sm:$0xf]
      %v1886 = vld [vmem:[%s1 + $0x14c] sm:$0xf]
      %v1887 = vld [vmem:[%s1 + $0x150] sm:$0xf]
      %v1888 = vld [vmem:[%s1 + $0x154] sm:$0xf]
      %v1889 = vld [vmem:[%s1 + $0x158] sm:$0xf]
      %v1890 = vld [vmem:[%s1 + $0x15c] sm:$0xf]
      %v1891 = vld [vmem:[%s1 + $0x160] sm:$0xf]
      %v1892 = vld [vmem:[%s1 + $0x164] sm:$0xf]
      %v1893 = vld [vmem:[%s1 + $0x168] sm:$0xf]
      %v1894 = vld [vmem:[%s1 + $0x16c] sm:$0xf]
      %v1895 = vld [vmem:[%s1 + $0x170] sm:$0xf]
      %v1896 = vld [vmem:[%s1 + $0x174] sm:$0xf]
      %v1897 = vld [vmem:[%s1 + $0x178] sm:$0xf]
      %v1898 = vld [vmem:[%s1 + $0x17c] sm:$0xf]
      %v1899 = vld [vmem:[%s1 + $0x180] sm:$0xf]
      %v1900 = vld [vmem:[%s1 + $0x184] sm:$0xf]
      %v1901 = vld [vmem:[%s1 + $0x188] sm:$0xf]
      %v1902 = vld [vmem:[%s1 + $0x18c] sm:$0xf]
      %v1903 = vld [vmem:[%s1 + $0x190] sm:$0xf]
      %v1904 = vld [vmem:[%s1 + $0x194] sm:$0xf]
      %v1905 = vld [vmem:[%s1 + $0x198] sm:$0xf]
      %v1906 = vld [vmem:[%s1 + $0x19c] sm:$0xf]
      %v1907 = vld [vmem:[%s1 + $0x1a0] sm:$0xf]
      %v1908 = vld [vmem:[%s1 + $0x1a4] sm:$0xf]
      %v1909 = vld [vmem:[%s1 + $0x1a8] sm:$0xf]
      %v1910 = vld [vmem:[%s1 + $0x1ac] sm:$0xf]
      %v1911 = vld [vmem:[%s1 + $0x1b0] sm:$0xf]
      %v1912 = vld [vmem:[%s1 + $0x1b4] sm:$0xf]
      %v1913 = vld [vmem:[%s1 + $0x1b8] sm:$0xf]
      %v1914 = vld [vmem:[%s1 + $0x1bc] sm:$0xf]
      %v1915 = vld [vmem:[%s1 + $0x1c0] sm:$0xf]
      %v1916 = vld [vmem:[%s1 + $0x1c4] sm:$0xf]
      %v1917 = vld [vmem:[%s1 + $0x1c8] sm:$0xf]
      %v1918 = vld [vmem:[%s1 + $0x1cc] sm:$0xf]
      %v1919 = vld [vmem:[%s1 + $0x1d0] sm:$0xf]
      %v1920 = vld [vmem:[%s1 + $0x1d4] sm:$0xf]
      %v1921 = vld [vmem:[%s1 + $0x1d8] sm:$0xf]
      %v1922 = vld [vmem:[%s1 + $0x1dc] sm:$0xf]
      %v1923 = vld [vmem:[%s1 + $0x1e0] sm:$0xf]
      %v1924 = vld [vmem:[%s1 + $0x1e4] sm:$0xf]
      %v1925 = vld [vmem:[%s1 + $0x1e8] sm:$0xf]
      %v1926 = vld [vmem:[%s1 + $0x1ec] sm:$0xf]
      %v1927 = vld [vmem:[%s1 + $0x1f0] sm:$0xf]
      %v1928 = vld [vmem:[%s1 + $0x1f4] sm:$0xf]
      %v1929 = vld [vmem:[%s1 + $0x1f8] sm:$0xf]
      %v1930 = vld [vmem:[%s1 + $0x1fc] sm:$0xf]
      %v1931 = vld [vmem:[%s1 + $0x200] sm:$0xf]
      %v1932 = vld [vmem:[%s1 + $0x204] sm:$0xf]
      %v1933 = vld [vmem:[%s1 + $0x208] sm:$0xf]
      %v1934 = vld [vmem:[%s1 + $0x20c] sm:$0xf]
      %v1935 = vld [vmem:[%s1 + $0x210] sm:$0xf]
      %v1936 = vld [vmem:[%s1 + $0x214] sm:$0xf]
      %v1937 = vld [vmem:[%s1 + $0x218] sm:$0xf]
      %v1938 = vld [vmem:[%s1 + $0x21c] sm:$0xf]
      %v1939 = vld [vmem:[%s1 + $0x220] sm:$0xf]
      %v1940 = vld [vmem:[%s1 + $0x224] sm:$0xf]
      %v1941 = vld [vmem:[%s1 + $0x228] sm:$0xf]
      %v1942 = vld [vmem:[%s1 + $0x22c] sm:$0xf]
      %v1943 = vld [vmem:[%s1 + $0x230] sm:$0xf]
      %v1944 = vld [vmem:[%s1 + $0x234] sm:$0xf]
      %v1945 = vld [vmem:[%s1 + $0x238] sm:$0xf]
      %v1946 = vld [vmem:[%s1 + $0x23c] sm:$0xf]
      %v1947 = vld [vmem:[%s2] sm:$0x1]
      %v1949 = vperm.slane %v1947, 0
      %v2095 = vunpack.c.l.b16 %v1803
      %v2096 = vunpack.c.l.b16 %v1804
      %v2097 = vunpack.c.l.b16 %v1805
      %v2098 = vunpack.c.l.b16 %v1806
      %v2099 = vunpack.c.l.b16 %v1807
      %v2100 = vunpack.c.l.b16 %v1808
      %v2101 = vunpack.c.l.b16 %v1809
      %v2102 = vunpack.c.l.b16 %v1810
      %v2103 = vunpack.c.l.b16 %v1811
      %v2104 = vunpack.c.l.b16 %v1812
      %v2105 = vunpack.c.l.b16 %v1813
      %v2106 = vunpack.c.l.b16 %v1814
      %v2107 = vunpack.c.l.b16 %v1815
      %v2108 = vunpack.c.l.b16 %v1816
      %v2109 = vunpack.c.l.b16 %v1817
      %v2110 = vunpack.c.l.b16 %v1818
      %v2111 = vunpack.c.l.b16 %v1819
      %v2112 = vunpack.c.l.b16 %v1820
      %v2113 = vunpack.c.l.b16 %v1821
      %v2114 = vunpack.c.l.b16 %v1822
      %v2115 = vunpack.c.l.b16 %v1823
      %v2116 = vunpack.c.l.b16 %v1824
      %v2117 = vunpack.c.l.b16 %v1825
      %v2118 = vunpack.c.l.b16 %v1826
      %v2119 = vunpack.c.l.b16 %v1827
      %v2120 = vunpack.c.l.b16 %v1828
      %v2121 = vunpack.c.l.b16 %v1829
      %v2122 = vunpack.c.l.b16 %v1830
      %v2123 = vunpack.c.l.b16 %v1831
      %v2124 = vunpack.c.l.b16 %v1832
      %v2125 = vunpack.c.l.b16 %v1833
      %v2126 = vunpack.c.l.b16 %v1834
      %v2127 = vunpack.c.l.b16 %v1835
      %v2128 = vunpack.c.l.b16 %v1836
      %v2129 = vunpack.c.l.b16 %v1837
      %v2130 = vunpack.c.l.b16 %v1838
      %v2131 = vunpack.c.l.b16 %v1839
      %v2132 = vunpack.c.l.b16 %v1840
      %v2133 = vunpack.c.l.b16 %v1841
      %v2134 = vunpack.c.l.b16 %v1842
      %v2135 = vunpack.c.l.b16 %v1843
      %v2136 = vunpack.c.l.b16 %v1844
      %v2137 = vunpack.c.l.b16 %v1845
      %v2138 = vunpack.c.l.b16 %v1846
      %v2139 = vunpack.c.l.b16 %v1847
      %v2140 = vunpack.c.l.b16 %v1848
      %v2141 = vunpack.c.l.b16 %v1849
      %v2142 = vunpack.c.l.b16 %v1850
      %v2143 = vunpack.c.l.b16 %v1851
      %v2144 = vunpack.c.l.b16 %v1852
      %v2145 = vunpack.c.l.b16 %v1853
      %v2146 = vunpack.c.l.b16 %v1854
      %v2147 = vunpack.c.l.b16 %v1855
      %v2148 = vunpack.c.l.b16 %v1856
      %v2149 = vunpack.c.l.b16 %v1857
      %v2150 = vunpack.c.l.b16 %v1858
      %v2151 = vunpack.c.l.b16 %v1859
      %v2152 = vunpack.c.l.b16 %v1860
      %v2153 = vunpack.c.l.b16 %v1861
      %v2154 = vunpack.c.l.b16 %v1862
      %v2155 = vunpack.c.l.b16 %v1863
      %v2156 = vunpack.c.l.b16 %v1864
      %v2157 = vunpack.c.l.b16 %v1865
      %v2158 = vunpack.c.l.b16 %v1866
      %v2159 = vunpack.c.l.b16 %v1867
      %v2160 = vunpack.c.l.b16 %v1868
      %v2161 = vunpack.c.l.b16 %v1869
      %v2162 = vunpack.c.l.b16 %v1870
      %v2163 = vunpack.c.l.b16 %v1871
      %v2164 = vunpack.c.l.b16 %v1872
      %v2165 = vunpack.c.l.b16 %v1873
      %v2166 = vunpack.c.l.b16 %v1874
      %v2167 = vunpack.c.l.b16 %v1875
      %v2168 = vunpack.c.l.b16 %v1876
      %v2169 = vunpack.c.l.b16 %v1877
      %v2170 = vunpack.c.l.b16 %v1878
      %v2171 = vunpack.c.l.b16 %v1879
      %v2172 = vunpack.c.l.b16 %v1880
      %v2173 = vunpack.c.l.b16 %v1881
      %v2174 = vunpack.c.l.b16 %v1882
      %v2175 = vunpack.c.l.b16 %v1883
      %v2176 = vunpack.c.l.b16 %v1884
      %v2177 = vunpack.c.l.b16 %v1885
      %v2178 = vunpack.c.l.b16 %v1886
      %v2179 = vunpack.c.l.b16 %v1887
      %v2180 = vunpack.c.l.b16 %v1888
      %v2181 = vunpack.c.l.b16 %v1889
      %v2182 = vunpack.c.l.b16 %v1890
      %v2183 = vunpack.c.l.b16 %v1891
      %v2184 = vunpack.c.l.b16 %v1892
      %v2185 = vunpack.c.l.b16 %v1893
      %v2186 = vunpack.c.l.b16 %v1894
      %v2187 = vunpack.c.l.b16 %v1895
      %v2188 = vunpack.c.l.b16 %v1896
      %v2189 = vunpack.c.l.b16 %v1897
      %v2190 = vunpack.c.l.b16 %v1898
      %v2191 = vunpack.c.l.b16 %v1899
      %v2192 = vunpack.c.l.b16 %v1900
      %v2193 = vunpack.c.l.b16 %v1901
      %v2194 = vunpack.c.l.b16 %v1902
      %v2195 = vunpack.c.l.b16 %v1903
      %v2196 = vunpack.c.l.b16 %v1904
      %v2197 = vunpack.c.l.b16 %v1905
      %v2198 = vunpack.c.l.b16 %v1906
      %v2199 = vunpack.c.l.b16 %v1907
      %v2200 = vunpack.c.l.b16 %v1908
      %v2201 = vunpack.c.l.b16 %v1909
      %v2202 = vunpack.c.l.b16 %v1910
      %v2203 = vunpack.c.l.b16 %v1911
      %v2204 = vunpack.c.l.b16 %v1912
      %v2205 = vunpack.c.l.b16 %v1913
      %v2206 = vunpack.c.l.b16 %v1914
      %v2207 = vunpack.c.l.b16 %v1915
      %v2208 = vunpack.c.l.b16 %v1916
      %v2209 = vunpack.c.l.b16 %v1917
      %v2210 = vunpack.c.l.b16 %v1918
      %v2211 = vunpack.c.l.b16 %v1919
      %v2212 = vunpack.c.l.b16 %v1920
      %v2213 = vunpack.c.l.b16 %v1921
      %v2214 = vunpack.c.l.b16 %v1922
      %v2215 = vunpack.c.l.b16 %v1923
      %v2216 = vunpack.c.l.b16 %v1924
      %v2217 = vunpack.c.l.b16 %v1925
      %v2218 = vunpack.c.l.b16 %v1926
      %v2219 = vunpack.c.l.b16 %v1927
      %v2220 = vunpack.c.l.b16 %v1928
      %v2221 = vunpack.c.l.b16 %v1929
      %v2222 = vunpack.c.l.b16 %v1930
      %v2223 = vunpack.c.l.b16 %v1931
      %v2224 = vunpack.c.l.b16 %v1932
      %v2225 = vunpack.c.l.b16 %v1933
      %v2226 = vunpack.c.l.b16 %v1934
      %v2227 = vunpack.c.l.b16 %v1935
      %v2228 = vunpack.c.l.b16 %v1936
      %v2229 = vunpack.c.l.b16 %v1937
      %v2230 = vunpack.c.l.b16 %v1938
      %v2231 = vunpack.c.l.b16 %v1939
      %v2232 = vunpack.c.l.b16 %v1940
      %v2233 = vunpack.c.l.b16 %v1941
      %v2234 = vunpack.c.l.b16 %v1942
      %v2235 = vunpack.c.l.b16 %v1943
      %v2236 = vunpack.c.l.b16 %v1944
      %v2237 = vunpack.c.l.b16 %v1945
      %v2238 = vunpack.c.l.b16 %v1946
      %v2239 = vpack.c.b16 %v2096, %v2095
      %v2240 = vpack.c.b16 %v2098, %v2097
      %v2241 = vpack.c.b16 %v2100, %v2099
      %v2242 = vpack.c.b16 %v2102, %v2101
      %v2243 = vpack.c.b16 %v2104, %v2103
      %v2244 = vpack.c.b16 %v2106, %v2105
      %v2245 = vpack.c.b16 %v2108, %v2107
      %v2246 = vpack.c.b16 %v2110, %v2109
      %v2247 = vpack.c.b16 %v2112, %v2111
      %v2248 = vpack.c.b16 %v2114, %v2113
      %v2249 = vpack.c.b16 %v2116, %v2115
      %v2250 = vpack.c.b16 %v2118, %v2117
      %v2251 = vpack.c.b16 %v2120, %v2119
      %v2252 = vpack.c.b16 %v2122, %v2121
      %v2253 = vpack.c.b16 %v2124, %v2123
      %v2254 = vpack.c.b16 %v2126, %v2125
      %v2255 = vpack.c.b16 %v2128, %v2127
      %v2256 = vpack.c.b16 %v2130, %v2129
      %v2257 = vpack.c.b16 %v2132, %v2131
      %v2258 = vpack.c.b16 %v2134, %v2133
      %v2259 = vpack.c.b16 %v2136, %v2135
      %v2260 = vpack.c.b16 %v2138, %v2137
      %v2261 = vpack.c.b16 %v2140, %v2139
      %v2262 = vpack.c.b16 %v2142, %v2141
      %v2263 = vpack.c.b16 %v2144, %v2143
      %v2264 = vpack.c.b16 %v2146, %v2145
      %v2265 = vpack.c.b16 %v2148, %v2147
      %v2266 = vpack.c.b16 %v2150, %v2149
      %v2267 = vpack.c.b16 %v2152, %v2151
      %v2268 = vpack.c.b16 %v2154, %v2153
      %v2269 = vpack.c.b16 %v2156, %v2155
      %v2270 = vpack.c.b16 %v2158, %v2157
      %v2271 = vpack.c.b16 %v2160, %v2159
      %v2272 = vpack.c.b16 %v2162, %v2161
      %v2273 = vpack.c.b16 %v2164, %v2163
      %v2274 = vpack.c.b16 %v2166, %v2165
      %v2275 = vpack.c.b16 %v2168, %v2167
      %v2276 = vpack.c.b16 %v2170, %v2169
      %v2277 = vpack.c.b16 %v2172, %v2171
      %v2278 = vpack.c.b16 %v2174, %v2173
      %v2279 = vpack.c.b16 %v2176, %v2175
      %v2280 = vpack.c.b16 %v2178, %v2177
      %v2281 = vpack.c.b16 %v2180, %v2179
      %v2282 = vpack.c.b16 %v2182, %v2181
      %v2283 = vpack.c.b16 %v2184, %v2183
      %v2284 = vpack.c.b16 %v2186, %v2185
      %v2285 = vpack.c.b16 %v2188, %v2187
      %v2286 = vpack.c.b16 %v2190, %v2189
      %v2287 = vpack.c.b16 %v2192, %v2191
      %v2288 = vpack.c.b16 %v2194, %v2193
      %v2289 = vpack.c.b16 %v2196, %v2195
      %v2290 = vpack.c.b16 %v2198, %v2197
      %v2291 = vpack.c.b16 %v2200, %v2199
      %v2292 = vpack.c.b16 %v2202, %v2201
      %v2293 = vpack.c.b16 %v2204, %v2203
      %v2294 = vpack.c.b16 %v2206, %v2205
      %v2295 = vpack.c.b16 %v2208, %v2207
      %v2296 = vpack.c.b16 %v2210, %v2209
      %v2297 = vpack.c.b16 %v2212, %v2211
      %v2298 = vpack.c.b16 %v2214, %v2213
      %v2299 = vpack.c.b16 %v2216, %v2215
      %v2300 = vpack.c.b16 %v2218, %v2217
      %v2301 = vpack.c.b16 %v2220, %v2219
      %v2302 = vpack.c.b16 %v2222, %v2221
      %v2303 = vpack.c.b16 %v2224, %v2223
      %v2304 = vpack.c.b16 %v2226, %v2225
      %v2305 = vpack.c.b16 %v2228, %v2227
      %v2306 = vpack.c.b16 %v2230, %v2229
      %v2307 = vpack.c.b16 %v2232, %v2231
      %v2308 = vpack.c.b16 %v2234, %v2233
      %v2309 = vpack.c.b16 %v2236, %v2235
      %v2310 = vpack.c.b16 %v2238, %v2237
      %2383 = vmatpush.bf16.msra.mxu0 %v2246
      %2384 = vmatpush.bf16.msra.mxu0 %v2245
      %2385 = vmatpush.bf16.msra.mxu0 %v2244
      %2386 = vmatpush.bf16.msra.mxu0 %v2243
      %2387 = vmatpush.bf16.msra.mxu0 %v2242
      %2388 = vmatpush.bf16.msra.mxu0 %v2241
      %2389 = vmatpush.bf16.msra.mxu0 %v2240
      %2390 = vmatpush.bf16.msra.mxu0 %v2239
      %2391 = vmatmul.bf16.gmra.mxu0 %v1003
      %v2392 = vpop.f32.mrf.mxu0
      %v2393 = vadd.f32 %v1949, %v2392
      %v2394 = vpop.f32.mrf.mxu0
      %v2395 = vadd.f32 %v1949, %v2394
      %2396 = vmatmul.bf16.gmra.mxu0 %v1004
      %v2397 = vpop.f32.mrf.mxu0
      %v2398 = vadd.f32 %v1949, %v2397
      %v2399 = vpop.f32.mrf.mxu0
      %v2400 = vadd.f32 %v1949, %v2399
      %2401 = vmatmul.bf16.gmra.mxu0 %v1005
      %v2402 = vpop.f32.mrf.mxu0
      %v2403 = vadd.f32 %v1949, %v2402
      %v2404 = vpop.f32.mrf.mxu0
      %v2405 = vadd.f32 %v1949, %v2404
      %2406 = vmatmul.bf16.gmra.mxu0 %v1006
      %v2407 = vpop.f32.mrf.mxu0
      %v2408 = vadd.f32 %v1949, %v2407
      %v2409 = vpop.f32.mrf.mxu0
      %v2410 = vadd.f32 %v1949, %v2409
      %2411 = vmatmul.bf16.gmra.mxu0 %v1007
      %v2412 = vpop.f32.mrf.mxu0
      %v2413 = vadd.f32 %v1949, %v2412
      %v2414 = vpop.f32.mrf.mxu0
      %v2415 = vadd.f32 %v1949, %v2414
      %2416 = vmatmul.bf16.gmra.mxu0 %v1008
      %v2417 = vpop.f32.mrf.mxu0
      %v2418 = vadd.f32 %v1949, %v2417
      %v2419 = vpop.f32.mrf.mxu0
      %v2420 = vadd.f32 %v1949, %v2419
      %2421 = vmatmul.bf16.gmra.mxu0 %v1009
      %v2422 = vpop.f32.mrf.mxu0
      %v2423 = vadd.f32 %v1949, %v2422
      %v2424 = vpop.f32.mrf.mxu0
      %v2425 = vadd.f32 %v1949, %v2424
      %2426 = vmatmul.bf16.gmra.mxu0 %v1010
      %v2427 = vpop.f32.mrf.mxu0
      %v2428 = vadd.f32 %v1949, %v2427
      %v2429 = vpop.f32.mrf.mxu0
      %v2430 = vadd.f32 %v1949, %v2429
      %2431 = vmatmul.bf16.gmra.mxu0 %v1011
      %v2432 = vpop.f32.mrf.mxu0
      %v2433 = vadd.f32 %v1949, %v2432
      %v2434 = vpop.f32.mrf.mxu0
      %v2435 = vadd.f32 %v1949, %v2434
      %2436 = vmatmul.bf16.gmra.mxu0 %v1012
      %v2437 = vpop.f32.mrf.mxu0
      %v2438 = vadd.f32 %v1949, %v2437
      %v2439 = vpop.f32.mrf.mxu0
      %v2440 = vadd.f32 %v1949, %v2439
      %2441 = vmatmul.bf16.gmra.mxu0 %v1013
      %v2442 = vpop.f32.mrf.mxu0
      %v2443 = vadd.f32 %v1949, %v2442
      %v2444 = vpop.f32.mrf.mxu0
      %v2445 = vadd.f32 %v1949, %v2444
      %2446 = vmatmul.bf16.gmra.mxu0 %v1014
      %v2447 = vpop.f32.mrf.mxu0
      %v2448 = vadd.f32 %v1949, %v2447
      %v2449 = vpop.f32.mrf.mxu0
      %v2450 = vadd.f32 %v1949, %v2449
      %2451 = vmatmul.bf16.gmra.mxu0 %v1015
      %v2452 = vpop.f32.mrf.mxu0
      %v2453 = vadd.f32 %v1949, %v2452
      %v2454 = vpop.f32.mrf.mxu0
      %v2455 = vadd.f32 %v1949, %v2454
      %2456 = vmatmul.bf16.gmra.mxu0 %v1016
      %v2457 = vpop.f32.mrf.mxu0
      %v2458 = vadd.f32 %v1949, %v2457
      %v2459 = vpop.f32.mrf.mxu0
      %v2460 = vadd.f32 %v1949, %v2459
      %2461 = vmatmul.bf16.gmra.mxu0 %v1017
      %v2462 = vpop.f32.mrf.mxu0
      %v2463 = vadd.f32 %v1949, %v2462
      %v2464 = vpop.f32.mrf.mxu0
      %v2465 = vadd.f32 %v1949, %v2464
      %2466 = vmatmul.bf16.gmra.mxu0 %v1018
      %v2467 = vpop.f32.mrf.mxu0
      %v2468 = vadd.f32 %v1949, %v2467
      %v2469 = vpop.f32.mrf.mxu0
      %v2470 = vadd.f32 %v1949, %v2469
      %2471 = vdwg.mxu0
      %2472 = vmatpush.bf16.msra.mxu0 %v2254
      %2473 = vmatpush.bf16.msra.mxu0 %v2253
      %2474 = vmatpush.bf16.msra.mxu0 %v2252
      %2475 = vmatpush.bf16.msra.mxu0 %v2251
      %2476 = vmatpush.bf16.msra.mxu0 %v2250
      %2477 = vmatpush.bf16.msra.mxu0 %v2249
      %2478 = vmatpush.bf16.msra.mxu0 %v2248
      %2479 = vmatpush.bf16.msra.mxu0 %v2247
      %2480 = vmatmul.bf16.gmra.mxu0 %v1099
      %v2481 = vpop.f32.mrf.mxu0
      %v2482 = vadd.f32 %v2393, %v2481
      %v2483 = vpop.f32.mrf.mxu0
      %v2484 = vadd.f32 %v2395, %v2483
      %2485 = vmatmul.bf16.gmra.mxu0 %v1100
      %v2486 = vpop.f32.mrf.mxu0
      %v2487 = vadd.f32 %v2398, %v2486
      %v2488 = vpop.f32.mrf.mxu0
      %v2489 = vadd.f32 %v2400, %v2488
      %2490 = vmatmul.bf16.gmra.mxu0 %v1101
      %v2491 = vpop.f32.mrf.mxu0
      %v2492 = vadd.f32 %v2403, %v2491
      %v2493 = vpop.f32.mrf.mxu0
      %v2494 = vadd.f32 %v2405, %v2493
      %2495 = vmatmul.bf16.gmra.mxu0 %v1102
      %v2496 = vpop.f32.mrf.mxu0
      %v2497 = vadd.f32 %v2408, %v2496
      %v2498 = vpop.f32.mrf.mxu0
      %v2499 = vadd.f32 %v2410, %v2498
      %2500 = vmatmul.bf16.gmra.mxu0 %v1103
      %v2501 = vpop.f32.mrf.mxu0
      %v2502 = vadd.f32 %v2413, %v2501
      %v2503 = vpop.f32.mrf.mxu0
      %v2504 = vadd.f32 %v2415, %v2503
      %2505 = vmatmul.bf16.gmra.mxu0 %v1104
      %v2506 = vpop.f32.mrf.mxu0
      %v2507 = vadd.f32 %v2418, %v2506
      %v2508 = vpop.f32.mrf.mxu0
      %v2509 = vadd.f32 %v2420, %v2508
      %2510 = vmatmul.bf16.gmra.mxu0 %v1105
      %v2511 = vpop.f32.mrf.mxu0
      %v2512 = vadd.f32 %v2423, %v2511
      %v2513 = vpop.f32.mrf.mxu0
      %v2514 = vadd.f32 %v2425, %v2513
      %2515 = vmatmul.bf16.gmra.mxu0 %v1106
      %v2516 = vpop.f32.mrf.mxu0
      %v2517 = vadd.f32 %v2428, %v2516
      %v2518 = vpop.f32.mrf.mxu0
      %v2519 = vadd.f32 %v2430, %v2518
      %2520 = vmatmul.bf16.gmra.mxu0 %v1107
      %v2521 = vpop.f32.mrf.mxu0
      %v2522 = vadd.f32 %v2433, %v2521
      %v2523 = vpop.f32.mrf.mxu0
      %v2524 = vadd.f32 %v2435, %v2523
      %2525 = vmatmul.bf16.gmra.mxu0 %v1108
      %v2526 = vpop.f32.mrf.mxu0
      %v2527 = vadd.f32 %v2438, %v2526
      %v2528 = vpop.f32.mrf.mxu0
      %v2529 = vadd.f32 %v2440, %v2528
      %2530 = vmatmul.bf16.gmra.mxu0 %v1109
      %v2531 = vpop.f32.mrf.mxu0
      %v2532 = vadd.f32 %v2443, %v2531
      %v2533 = vpop.f32.mrf.mxu0
      %v2534 = vadd.f32 %v2445, %v2533
      %2535 = vmatmul.bf16.gmra.mxu0 %v1110
      %v2536 = vpop.f32.mrf.mxu0
      %v2537 = vadd.f32 %v2448, %v2536
      %v2538 = vpop.f32.mrf.mxu0
      %v2539 = vadd.f32 %v2450, %v2538
      %2540 = vmatmul.bf16.gmra.mxu0 %v1111
      %v2541 = vpop.f32.mrf.mxu0
      %v2542 = vadd.f32 %v2453, %v2541
      %v2543 = vpop.f32.mrf.mxu0
      %v2544 = vadd.f32 %v2455, %v2543
      %2545 = vmatmul.bf16.gmra.mxu0 %v1112
      %v2546 = vpop.f32.mrf.mxu0
      %v2547 = vadd.f32 %v2458, %v2546
      %v2548 = vpop.f32.mrf.mxu0
      %v2549 = vadd.f32 %v2460, %v2548
      %2550 = vmatmul.bf16.gmra.mxu0 %v1113
      %v2551 = vpop.f32.mrf.mxu0
      %v2552 = vadd.f32 %v2463, %v2551
      %v2553 = vpop.f32.mrf.mxu0
      %v2554 = vadd.f32 %v2465, %v2553
      %2555 = vmatmul.bf16.gmra.mxu0 %v1114
      %v2556 = vpop.f32.mrf.mxu0
      %v2557 = vadd.f32 %v2468, %v2556
      %v2558 = vpop.f32.mrf.mxu0
      %v2559 = vadd.f32 %v2470, %v2558
      %2560 = vdwg.mxu0
      %2561 = vmatpush.bf16.msra.mxu0 %v2262
      %2562 = vmatpush.bf16.msra.mxu0 %v2261
      %2563 = vmatpush.bf16.msra.mxu0 %v2260
      %2564 = vmatpush.bf16.msra.mxu0 %v2259
      %2565 = vmatpush.bf16.msra.mxu0 %v2258
      %2566 = vmatpush.bf16.msra.mxu0 %v2257
      %2567 = vmatpush.bf16.msra.mxu0 %v2256
      %2568 = vmatpush.bf16.msra.mxu0 %v2255
      %2569 = vmatmul.bf16.gmra.mxu0 %v1195
      %v2570 = vpop.f32.mrf.mxu0
      %v2571 = vadd.f32 %v2482, %v2570
      %v2572 = vpop.f32.mrf.mxu0
      %v2573 = vadd.f32 %v2484, %v2572
      %2574 = vmatmul.bf16.gmra.mxu0 %v1196
      %v2575 = vpop.f32.mrf.mxu0
      %v2576 = vadd.f32 %v2487, %v2575
      %v2577 = vpop.f32.mrf.mxu0
      %v2578 = vadd.f32 %v2489, %v2577
      %2579 = vmatmul.bf16.gmra.mxu0 %v1197
      %v2580 = vpop.f32.mrf.mxu0
      %v2581 = vadd.f32 %v2492, %v2580
      %v2582 = vpop.f32.mrf.mxu0
      %v2583 = vadd.f32 %v2494, %v2582
      %2584 = vmatmul.bf16.gmra.mxu0 %v1198
      %v2585 = vpop.f32.mrf.mxu0
      %v2586 = vadd.f32 %v2497, %v2585
      %v2587 = vpop.f32.mrf.mxu0
      %v2588 = vadd.f32 %v2499, %v2587
      %2589 = vmatmul.bf16.gmra.mxu0 %v1199
      %v2590 = vpop.f32.mrf.mxu0
      %v2591 = vadd.f32 %v2502, %v2590
      %v2592 = vpop.f32.mrf.mxu0
      %v2593 = vadd.f32 %v2504, %v2592
      %2594 = vmatmul.bf16.gmra.mxu0 %v1200
      %v2595 = vpop.f32.mrf.mxu0
      %v2596 = vadd.f32 %v2507, %v2595
      %v2597 = vpop.f32.mrf.mxu0
      %v2598 = vadd.f32 %v2509, %v2597
      %2599 = vmatmul.bf16.gmra.mxu0 %v1201
      %v2600 = vpop.f32.mrf.mxu0
      %v2601 = vadd.f32 %v2512, %v2600
      %v2602 = vpop.f32.mrf.mxu0
      %v2603 = vadd.f32 %v2514, %v2602
      %2604 = vmatmul.bf16.gmra.mxu0 %v1202
      %v2605 = vpop.f32.mrf.mxu0
      %v2606 = vadd.f32 %v2517, %v2605
      %v2607 = vpop.f32.mrf.mxu0
      %v2608 = vadd.f32 %v2519, %v2607
      %2609 = vmatmul.bf16.gmra.mxu0 %v1203
      %v2610 = vpop.f32.mrf.mxu0
      %v2611 = vadd.f32 %v2522, %v2610
      %v2612 = vpop.f32.mrf.mxu0
      %v2613 = vadd.f32 %v2524, %v2612
      %2614 = vmatmul.bf16.gmra.mxu0 %v1204
      %v2615 = vpop.f32.mrf.mxu0
      %v2616 = vadd.f32 %v2527, %v2615
      %v2617 = vpop.f32.mrf.mxu0
      %v2618 = vadd.f32 %v2529, %v2617
      %2619 = vmatmul.bf16.gmra.mxu0 %v1205
      %v2620 = vpop.f32.mrf.mxu0
      %v2621 = vadd.f32 %v2532, %v2620
      %v2622 = vpop.f32.mrf.mxu0
      %v2623 = vadd.f32 %v2534, %v2622
      %2624 = vmatmul.bf16.gmra.mxu0 %v1206
      %v2625 = vpop.f32.mrf.mxu0
      %v2626 = vadd.f32 %v2537, %v2625
      %v2627 = vpop.f32.mrf.mxu0
      %v2628 = vadd.f32 %v2539, %v2627
      %2629 = vmatmul.bf16.gmra.mxu0 %v1207
      %v2630 = vpop.f32.mrf.mxu0
      %v2631 = vadd.f32 %v2542, %v2630
      %v2632 = vpop.f32.mrf.mxu0
      %v2633 = vadd.f32 %v2544, %v2632
      %2634 = vmatmul.bf16.gmra.mxu0 %v1208
      %v2635 = vpop.f32.mrf.mxu0
      %v2636 = vadd.f32 %v2547, %v2635
      %v2637 = vpop.f32.mrf.mxu0
      %v2638 = vadd.f32 %v2549, %v2637
      %2639 = vmatmul.bf16.gmra.mxu0 %v1209
      %v2640 = vpop.f32.mrf.mxu0
      %v2641 = vadd.f32 %v2552, %v2640
      %v2642 = vpop.f32.mrf.mxu0
      %v2643 = vadd.f32 %v2554, %v2642
      %2644 = vmatmul.bf16.gmra.mxu0 %v1210
      %v2645 = vpop.f32.mrf.mxu0
      %v2646 = vadd.f32 %v2557, %v2645
      %v2647 = vpop.f32.mrf.mxu0
      %v2648 = vadd.f32 %v2559, %v2647
      %2649 = vdwg.mxu0
      %2650 = vmatpush.bf16.msra.mxu0 %v2270
      %2651 = vmatpush.bf16.msra.mxu0 %v2269
      %2652 = vmatpush.bf16.msra.mxu0 %v2268
      %2653 = vmatpush.bf16.msra.mxu0 %v2267
      %2654 = vmatpush.bf16.msra.mxu0 %v2266
      %2655 = vmatpush.bf16.msra.mxu0 %v2265
      %2656 = vmatpush.bf16.msra.mxu0 %v2264
      %2657 = vmatpush.bf16.msra.mxu0 %v2263
      %2658 = vmatmul.bf16.gmra.mxu0 %v1291
      %v2659 = vpop.f32.mrf.mxu0
      %v2660 = vadd.f32 %v2571, %v2659
      %v2661 = vpop.f32.mrf.mxu0
      %v2662 = vadd.f32 %v2573, %v2661
      %2663 = vmatmul.bf16.gmra.mxu0 %v1292
      %v2664 = vpop.f32.mrf.mxu0
      %v2665 = vadd.f32 %v2576, %v2664
      %v2666 = vpop.f32.mrf.mxu0
      %v2667 = vadd.f32 %v2578, %v2666
      %2668 = vmatmul.bf16.gmra.mxu0 %v1293
      %v2669 = vpop.f32.mrf.mxu0
      %v2670 = vadd.f32 %v2581, %v2669
      %v2671 = vpop.f32.mrf.mxu0
      %v2672 = vadd.f32 %v2583, %v2671
      %2673 = vmatmul.bf16.gmra.mxu0 %v1294
      %v2674 = vpop.f32.mrf.mxu0
      %v2675 = vadd.f32 %v2586, %v2674
      %v2676 = vpop.f32.mrf.mxu0
      %v2677 = vadd.f32 %v2588, %v2676
      %2678 = vmatmul.bf16.gmra.mxu0 %v1295
      %v2679 = vpop.f32.mrf.mxu0
      %v2680 = vadd.f32 %v2591, %v2679
      %v2681 = vpop.f32.mrf.mxu0
      %v2682 = vadd.f32 %v2593, %v2681
      %2683 = vmatmul.bf16.gmra.mxu0 %v1296
      %v2684 = vpop.f32.mrf.mxu0
      %v2685 = vadd.f32 %v2596, %v2684
      %v2686 = vpop.f32.mrf.mxu0
      %v2687 = vadd.f32 %v2598, %v2686
      %2688 = vmatmul.bf16.gmra.mxu0 %v1297
      %v2689 = vpop.f32.mrf.mxu0
      %v2690 = vadd.f32 %v2601, %v2689
      %v2691 = vpop.f32.mrf.mxu0
      %v2692 = vadd.f32 %v2603, %v2691
      %2693 = vmatmul.bf16.gmra.mxu0 %v1298
      %v2694 = vpop.f32.mrf.mxu0
      %v2695 = vadd.f32 %v2606, %v2694
      %v2696 = vpop.f32.mrf.mxu0
      %v2697 = vadd.f32 %v2608, %v2696
      %2698 = vmatmul.bf16.gmra.mxu0 %v1299
      %v2699 = vpop.f32.mrf.mxu0
      %v2700 = vadd.f32 %v2611, %v2699
      %v2701 = vpop.f32.mrf.mxu0
      %v2702 = vadd.f32 %v2613, %v2701
      %2703 = vmatmul.bf16.gmra.mxu0 %v1300
      %v2704 = vpop.f32.mrf.mxu0
      %v2705 = vadd.f32 %v2616, %v2704
      %v2706 = vpop.f32.mrf.mxu0
      %v2707 = vadd.f32 %v2618, %v2706
      %2708 = vmatmul.bf16.gmra.mxu0 %v1301
      %v2709 = vpop.f32.mrf.mxu0
      %v2710 = vadd.f32 %v2621, %v2709
      %v2711 = vpop.f32.mrf.mxu0
      %v2712 = vadd.f32 %v2623, %v2711
      %2713 = vmatmul.bf16.gmra.mxu0 %v1302
      %v2714 = vpop.f32.mrf.mxu0
      %v2715 = vadd.f32 %v2626, %v2714
      %v2716 = vpop.f32.mrf.mxu0
      %v2717 = vadd.f32 %v2628, %v2716
      %2718 = vmatmul.bf16.gmra.mxu0 %v1303
      %v2719 = vpop.f32.mrf.mxu0
      %v2720 = vadd.f32 %v2631, %v2719
      %v2721 = vpop.f32.mrf.mxu0
      %v2722 = vadd.f32 %v2633, %v2721
      %2723 = vmatmul.bf16.gmra.mxu0 %v1304
      %v2724 = vpop.f32.mrf.mxu0
      %v2725 = vadd.f32 %v2636, %v2724
      %v2726 = vpop.f32.mrf.mxu0
      %v2727 = vadd.f32 %v2638, %v2726
      %2728 = vmatmul.bf16.gmra.mxu0 %v1305
      %v2729 = vpop.f32.mrf.mxu0
      %v2730 = vadd.f32 %v2641, %v2729
      %v2731 = vpop.f32.mrf.mxu0
      %v2732 = vadd.f32 %v2643, %v2731
      %2733 = vmatmul.bf16.gmra.mxu0 %v1306
      %v2734 = vpop.f32.mrf.mxu0
      %v2735 = vadd.f32 %v2646, %v2734
      %v2736 = vpop.f32.mrf.mxu0
      %v2737 = vadd.f32 %v2648, %v2736
      %2738 = vdwg.mxu0
      %2739 = vmatpush.bf16.msra.mxu0 %v2278
      %2740 = vmatpush.bf16.msra.mxu0 %v2277
      %2741 = vmatpush.bf16.msra.mxu0 %v2276
      %2742 = vmatpush.bf16.msra.mxu0 %v2275
      %2743 = vmatpush.bf16.msra.mxu0 %v2274
      %2744 = vmatpush.bf16.msra.mxu0 %v2273
      %2745 = vmatpush.bf16.msra.mxu0 %v2272
      %2746 = vmatpush.bf16.msra.mxu0 %v2271
      %2747 = vmatmul.bf16.gmra.mxu0 %v1387
      %v2748 = vpop.f32.mrf.mxu0
      %v2749 = vadd.f32 %v2660, %v2748
      %v2750 = vpop.f32.mrf.mxu0
      %v2751 = vadd.f32 %v2662, %v2750
      %2752 = vmatmul.bf16.gmra.mxu0 %v1388
      %v2753 = vpop.f32.mrf.mxu0
      %v2754 = vadd.f32 %v2665, %v2753
      %v2755 = vpop.f32.mrf.mxu0
      %v2756 = vadd.f32 %v2667, %v2755
      %2757 = vmatmul.bf16.gmra.mxu0 %v1389
      %v2758 = vpop.f32.mrf.mxu0
      %v2759 = vadd.f32 %v2670, %v2758
      %v2760 = vpop.f32.mrf.mxu0
      %v2761 = vadd.f32 %v2672, %v2760
      %2762 = vmatmul.bf16.gmra.mxu0 %v1390
      %v2763 = vpop.f32.mrf.mxu0
      %v2764 = vadd.f32 %v2675, %v2763
      %v2765 = vpop.f32.mrf.mxu0
      %v2766 = vadd.f32 %v2677, %v2765
      %2767 = vmatmul.bf16.gmra.mxu0 %v1391
      %v2768 = vpop.f32.mrf.mxu0
      %v2769 = vadd.f32 %v2680, %v2768
      %v2770 = vpop.f32.mrf.mxu0
      %v2771 = vadd.f32 %v2682, %v2770
      %2772 = vmatmul.bf16.gmra.mxu0 %v1392
      %v2773 = vpop.f32.mrf.mxu0
      %v2774 = vadd.f32 %v2685, %v2773
      %v2775 = vpop.f32.mrf.mxu0
      %v2776 = vadd.f32 %v2687, %v2775
      %2777 = vmatmul.bf16.gmra.mxu0 %v1393
      %v2778 = vpop.f32.mrf.mxu0
      %v2779 = vadd.f32 %v2690, %v2778
      %v2780 = vpop.f32.mrf.mxu0
      %v2781 = vadd.f32 %v2692, %v2780
      %2782 = vmatmul.bf16.gmra.mxu0 %v1394
      %v2783 = vpop.f32.mrf.mxu0
      %v2784 = vadd.f32 %v2695, %v2783
      %v2785 = vpop.f32.mrf.mxu0
      %v2786 = vadd.f32 %v2697, %v2785
      %2787 = vmatmul.bf16.gmra.mxu0 %v1395
      %v2788 = vpop.f32.mrf.mxu0
      %v2789 = vadd.f32 %v2700, %v2788
      %v2790 = vpop.f32.mrf.mxu0
      %v2791 = vadd.f32 %v2702, %v2790
      %2792 = vmatmul.bf16.gmra.mxu0 %v1396
      %v2793 = vpop.f32.mrf.mxu0
      %v2794 = vadd.f32 %v2705, %v2793
      %v2795 = vpop.f32.mrf.mxu0
      %v2796 = vadd.f32 %v2707, %v2795
      %2797 = vmatmul.bf16.gmra.mxu0 %v1397
      %v2798 = vpop.f32.mrf.mxu0
      %v2799 = vadd.f32 %v2710, %v2798
      %v2800 = vpop.f32.mrf.mxu0
      %v2801 = vadd.f32 %v2712, %v2800
      %2802 = vmatmul.bf16.gmra.mxu0 %v1398
      %v2803 = vpop.f32.mrf.mxu0
      %v2804 = vadd.f32 %v2715, %v2803
      %v2805 = vpop.f32.mrf.mxu0
      %v2806 = vadd.f32 %v2717, %v2805
      %2807 = vmatmul.bf16.gmra.mxu0 %v1399
      %v2808 = vpop.f32.mrf.mxu0
      %v2809 = vadd.f32 %v2720, %v2808
      %v2810 = vpop.f32.mrf.mxu0
      %v2811 = vadd.f32 %v2722, %v2810
      %2812 = vmatmul.bf16.gmra.mxu0 %v1400
      %v2813 = vpop.f32.mrf.mxu0
      %v2814 = vadd.f32 %v2725, %v2813
      %v2815 = vpop.f32.mrf.mxu0
      %v2816 = vadd.f32 %v2727, %v2815
      %2817 = vmatmul.bf16.gmra.mxu0 %v1401
      %v2818 = vpop.f32.mrf.mxu0
      %v2819 = vadd.f32 %v2730, %v2818
      %v2820 = vpop.f32.mrf.mxu0
      %v2821 = vadd.f32 %v2732, %v2820
      %2822 = vmatmul.bf16.gmra.mxu0 %v1402
      %v2823 = vpop.f32.mrf.mxu0
      %v2824 = vadd.f32 %v2735, %v2823
      %v2825 = vpop.f32.mrf.mxu0
      %v2826 = vadd.f32 %v2737, %v2825
      %2827 = vdwg.mxu0
      %2828 = vmatpush.bf16.msra.mxu0 %v2286
      %2829 = vmatpush.bf16.msra.mxu0 %v2285
      %2830 = vmatpush.bf16.msra.mxu0 %v2284
      %2831 = vmatpush.bf16.msra.mxu0 %v2283
      %2832 = vmatpush.bf16.msra.mxu0 %v2282
      %2833 = vmatpush.bf16.msra.mxu0 %v2281
      %2834 = vmatpush.bf16.msra.mxu0 %v2280
      %2835 = vmatpush.bf16.msra.mxu0 %v2279
      %2836 = vmatmul.bf16.gmra.mxu0 %v1483
      %v2837 = vpop.f32.mrf.mxu0
      %v2838 = vadd.f32 %v2749, %v2837
      %v2839 = vpop.f32.mrf.mxu0
      %v2840 = vadd.f32 %v2751, %v2839
      %2841 = vmatmul.bf16.gmra.mxu0 %v1484
      %v2842 = vpop.f32.mrf.mxu0
      %v2843 = vadd.f32 %v2754, %v2842
      %v2844 = vpop.f32.mrf.mxu0
      %v2845 = vadd.f32 %v2756, %v2844
      %2846 = vmatmul.bf16.gmra.mxu0 %v1485
      %v2847 = vpop.f32.mrf.mxu0
      %v2848 = vadd.f32 %v2759, %v2847
      %v2849 = vpop.f32.mrf.mxu0
      %v2850 = vadd.f32 %v2761, %v2849
      %2851 = vmatmul.bf16.gmra.mxu0 %v1486
      %v2852 = vpop.f32.mrf.mxu0
      %v2853 = vadd.f32 %v2764, %v2852
      %v2854 = vpop.f32.mrf.mxu0
      %v2855 = vadd.f32 %v2766, %v2854
      %2856 = vmatmul.bf16.gmra.mxu0 %v1487
      %v2857 = vpop.f32.mrf.mxu0
      %v2858 = vadd.f32 %v2769, %v2857
      %v2859 = vpop.f32.mrf.mxu0
      %v2860 = vadd.f32 %v2771, %v2859
      %2861 = vmatmul.bf16.gmra.mxu0 %v1488
      %v2862 = vpop.f32.mrf.mxu0
      %v2863 = vadd.f32 %v2774, %v2862
      %v2864 = vpop.f32.mrf.mxu0
      %v2865 = vadd.f32 %v2776, %v2864
      %2866 = vmatmul.bf16.gmra.mxu0 %v1489
      %v2867 = vpop.f32.mrf.mxu0
      %v2868 = vadd.f32 %v2779, %v2867
      %v2869 = vpop.f32.mrf.mxu0
      %v2870 = vadd.f32 %v2781, %v2869
      %2871 = vmatmul.bf16.gmra.mxu0 %v1490
      %v2872 = vpop.f32.mrf.mxu0
      %v2873 = vadd.f32 %v2784, %v2872
      %v2874 = vpop.f32.mrf.mxu0
      %v2875 = vadd.f32 %v2786, %v2874
      %2876 = vmatmul.bf16.gmra.mxu0 %v1491
      %v2877 = vpop.f32.mrf.mxu0
      %v2878 = vadd.f32 %v2789, %v2877
      %v2879 = vpop.f32.mrf.mxu0
      %v2880 = vadd.f32 %v2791, %v2879
      %2881 = vmatmul.bf16.gmra.mxu0 %v1492
      %v2882 = vpop.f32.mrf.mxu0
      %v2883 = vadd.f32 %v2794, %v2882
      %v2884 = vpop.f32.mrf.mxu0
      %v2885 = vadd.f32 %v2796, %v2884
      %2886 = vmatmul.bf16.gmra.mxu0 %v1493
      %v2887 = vpop.f32.mrf.mxu0
      %v2888 = vadd.f32 %v2799, %v2887
      %v2889 = vpop.f32.mrf.mxu0
      %v2890 = vadd.f32 %v2801, %v2889
      %2891 = vmatmul.bf16.gmra.mxu0 %v1494
      %v2892 = vpop.f32.mrf.mxu0
      %v2893 = vadd.f32 %v2804, %v2892
      %v2894 = vpop.f32.mrf.mxu0
      %v2895 = vadd.f32 %v2806, %v2894
      %2896 = vmatmul.bf16.gmra.mxu0 %v1495
      %v2897 = vpop.f32.mrf.mxu0
      %v2898 = vadd.f32 %v2809, %v2897
      %v2899 = vpop.f32.mrf.mxu0
      %v2900 = vadd.f32 %v2811, %v2899
      %2901 = vmatmul.bf16.gmra.mxu0 %v1496
      %v2902 = vpop.f32.mrf.mxu0
      %v2903 = vadd.f32 %v2814, %v2902
      %v2904 = vpop.f32.mrf.mxu0
      %v2905 = vadd.f32 %v2816, %v2904
      %2906 = vmatmul.bf16.gmra.mxu0 %v1497
      %v2907 = vpop.f32.mrf.mxu0
      %v2908 = vadd.f32 %v2819, %v2907
      %v2909 = vpop.f32.mrf.mxu0
      %v2910 = vadd.f32 %v2821, %v2909
      %2911 = vmatmul.bf16.gmra.mxu0 %v1498
      %v2912 = vpop.f32.mrf.mxu0
      %v2913 = vadd.f32 %v2824, %v2912
      %v2914 = vpop.f32.mrf.mxu0
      %v2915 = vadd.f32 %v2826, %v2914
      %2916 = vdwg.mxu0
      %2917 = vmatpush.bf16.msra.mxu0 %v2294
      %2918 = vmatpush.bf16.msra.mxu0 %v2293
      %2919 = vmatpush.bf16.msra.mxu0 %v2292
      %2920 = vmatpush.bf16.msra.mxu0 %v2291
      %2921 = vmatpush.bf16.msra.mxu0 %v2290
      %2922 = vmatpush.bf16.msra.mxu0 %v2289
      %2923 = vmatpush.bf16.msra.mxu0 %v2288
      %2924 = vmatpush.bf16.msra.mxu0 %v2287
      %2925 = vmatmul.bf16.gmra.mxu0 %v1579
      %v2926 = vpop.f32.mrf.mxu0
      %v2927 = vadd.f32 %v2838, %v2926
      %v2928 = vpop.f32.mrf.mxu0
      %v2929 = vadd.f32 %v2840, %v2928
      %2930 = vmatmul.bf16.gmra.mxu0 %v1580
      %v2931 = vpop.f32.mrf.mxu0
      %v2932 = vadd.f32 %v2843, %v2931
      %v2933 = vpop.f32.mrf.mxu0
      %v2934 = vadd.f32 %v2845, %v2933
      %2935 = vmatmul.bf16.gmra.mxu0 %v1581
      %v2936 = vpop.f32.mrf.mxu0
      %v2937 = vadd.f32 %v2848, %v2936
      %v2938 = vpop.f32.mrf.mxu0
      %v2939 = vadd.f32 %v2850, %v2938
      %2940 = vmatmul.bf16.gmra.mxu0 %v1582
      %v2941 = vpop.f32.mrf.mxu0
      %v2942 = vadd.f32 %v2853, %v2941
      %v2943 = vpop.f32.mrf.mxu0
      %v2944 = vadd.f32 %v2855, %v2943
      %2945 = vmatmul.bf16.gmra.mxu0 %v1583
      %v2946 = vpop.f32.mrf.mxu0
      %v2947 = vadd.f32 %v2858, %v2946
      %v2948 = vpop.f32.mrf.mxu0
      %v2949 = vadd.f32 %v2860, %v2948
      %2950 = vmatmul.bf16.gmra.mxu0 %v1584
      %v2951 = vpop.f32.mrf.mxu0
      %v2952 = vadd.f32 %v2863, %v2951
      %v2953 = vpop.f32.mrf.mxu0
      %v2954 = vadd.f32 %v2865, %v2953
      %2955 = vmatmul.bf16.gmra.mxu0 %v1585
      %v2956 = vpop.f32.mrf.mxu0
      %v2957 = vadd.f32 %v2868, %v2956
      %v2958 = vpop.f32.mrf.mxu0
      %v2959 = vadd.f32 %v2870, %v2958
      %2960 = vmatmul.bf16.gmra.mxu0 %v1586
      %v2961 = vpop.f32.mrf.mxu0
      %v2962 = vadd.f32 %v2873, %v2961
      %v2963 = vpop.f32.mrf.mxu0
      %v2964 = vadd.f32 %v2875, %v2963
      %2965 = vmatmul.bf16.gmra.mxu0 %v1587
      %v2966 = vpop.f32.mrf.mxu0
      %v2967 = vadd.f32 %v2878, %v2966
      %v2968 = vpop.f32.mrf.mxu0
      %v2969 = vadd.f32 %v2880, %v2968
      %2970 = vmatmul.bf16.gmra.mxu0 %v1588
      %v2971 = vpop.f32.mrf.mxu0
      %v2972 = vadd.f32 %v2883, %v2971
      %v2973 = vpop.f32.mrf.mxu0
      %v2974 = vadd.f32 %v2885, %v2973
      %2975 = vmatmul.bf16.gmra.mxu0 %v1589
      %v2976 = vpop.f32.mrf.mxu0
      %v2977 = vadd.f32 %v2888, %v2976
      %v2978 = vpop.f32.mrf.mxu0
      %v2979 = vadd.f32 %v2890, %v2978
      %2980 = vmatmul.bf16.gmra.mxu0 %v1590
      %v2981 = vpop.f32.mrf.mxu0
      %v2982 = vadd.f32 %v2893, %v2981
      %v2983 = vpop.f32.mrf.mxu0
      %v2984 = vadd.f32 %v2895, %v2983
      %2985 = vmatmul.bf16.gmra.mxu0 %v1591
      %v2986 = vpop.f32.mrf.mxu0
      %v2987 = vadd.f32 %v2898, %v2986
      %v2988 = vpop.f32.mrf.mxu0
      %v2989 = vadd.f32 %v2900, %v2988
      %2990 = vmatmul.bf16.gmra.mxu0 %v1592
      %v2991 = vpop.f32.mrf.mxu0
      %v2992 = vadd.f32 %v2903, %v2991
      %v2993 = vpop.f32.mrf.mxu0
      %v2994 = vadd.f32 %v2905, %v2993
      %2995 = vmatmul.bf16.gmra.mxu0 %v1593
      %v2996 = vpop.f32.mrf.mxu0
      %v2997 = vadd.f32 %v2908, %v2996
      %v2998 = vpop.f32.mrf.mxu0
      %v2999 = vadd.f32 %v2910, %v2998
      %3000 = vmatmul.bf16.gmra.mxu0 %v1594
      %v3001 = vpop.f32.mrf.mxu0
      %v3002 = vadd.f32 %v2913, %v3001
      %v3003 = vpop.f32.mrf.mxu0
      %v3004 = vadd.f32 %v2915, %v3003
      %3005 = vdwg.mxu0
      %3006 = vmatpush.bf16.msra.mxu0 %v2302
      %3007 = vmatpush.bf16.msra.mxu0 %v2301
      %3008 = vmatpush.bf16.msra.mxu0 %v2300
      %3009 = vmatpush.bf16.msra.mxu0 %v2299
      %3010 = vmatpush.bf16.msra.mxu0 %v2298
      %3011 = vmatpush.bf16.msra.mxu0 %v2297
      %3012 = vmatpush.bf16.msra.mxu0 %v2296
      %3013 = vmatpush.bf16.msra.mxu0 %v2295
      %3014 = vmatmul.bf16.gmra.mxu0 %v1675
      %v3015 = vpop.f32.mrf.mxu0
      %v3016 = vadd.f32 %v2927, %v3015
      %v3017 = vpop.f32.mrf.mxu0
      %v3018 = vadd.f32 %v2929, %v3017
      %3019 = vmatmul.bf16.gmra.mxu0 %v1676
      %v3020 = vpop.f32.mrf.mxu0
      %v3021 = vadd.f32 %v2932, %v3020
      %v3022 = vpop.f32.mrf.mxu0
      %v3023 = vadd.f32 %v2934, %v3022
      %3024 = vmatmul.bf16.gmra.mxu0 %v1677
      %v3025 = vpop.f32.mrf.mxu0
      %v3026 = vadd.f32 %v2937, %v3025
      %v3027 = vpop.f32.mrf.mxu0
      %v3028 = vadd.f32 %v2939, %v3027
      %3029 = vmatmul.bf16.gmra.mxu0 %v1678
      %v3030 = vpop.f32.mrf.mxu0
      %v3031 = vadd.f32 %v2942, %v3030
      %v3032 = vpop.f32.mrf.mxu0
      %v3033 = vadd.f32 %v2944, %v3032
      %3034 = vmatmul.bf16.gmra.mxu0 %v1679
      %v3035 = vpop.f32.mrf.mxu0
      %v3036 = vadd.f32 %v2947, %v3035
      %v3037 = vpop.f32.mrf.mxu0
      %v3038 = vadd.f32 %v2949, %v3037
      %3039 = vmatmul.bf16.gmra.mxu0 %v1680
      %v3040 = vpop.f32.mrf.mxu0
      %v3041 = vadd.f32 %v2952, %v3040
      %v3042 = vpop.f32.mrf.mxu0
      %v3043 = vadd.f32 %v2954, %v3042
      %3044 = vmatmul.bf16.gmra.mxu0 %v1681
      %v3045 = vpop.f32.mrf.mxu0
      %v3046 = vadd.f32 %v2957, %v3045
      %v3047 = vpop.f32.mrf.mxu0
      %v3048 = vadd.f32 %v2959, %v3047
      %3049 = vmatmul.bf16.gmra.mxu0 %v1682
      %v3050 = vpop.f32.mrf.mxu0
      %v3051 = vadd.f32 %v2962, %v3050
      %v3052 = vpop.f32.mrf.mxu0
      %v3053 = vadd.f32 %v2964, %v3052
      %3054 = vmatmul.bf16.gmra.mxu0 %v1683
      %v3055 = vpop.f32.mrf.mxu0
      %v3056 = vadd.f32 %v2967, %v3055
      %v3057 = vpop.f32.mrf.mxu0
      %v3058 = vadd.f32 %v2969, %v3057
      %3059 = vmatmul.bf16.gmra.mxu0 %v1684
      %v3060 = vpop.f32.mrf.mxu0
      %v3061 = vadd.f32 %v2972, %v3060
      %v3062 = vpop.f32.mrf.mxu0
      %v3063 = vadd.f32 %v2974, %v3062
      %3064 = vmatmul.bf16.gmra.mxu0 %v1685
      %v3065 = vpop.f32.mrf.mxu0
      %v3066 = vadd.f32 %v2977, %v3065
      %v3067 = vpop.f32.mrf.mxu0
      %v3068 = vadd.f32 %v2979, %v3067
      %3069 = vmatmul.bf16.gmra.mxu0 %v1686
      %v3070 = vpop.f32.mrf.mxu0
      %v3071 = vadd.f32 %v2982, %v3070
      %v3072 = vpop.f32.mrf.mxu0
      %v3073 = vadd.f32 %v2984, %v3072
      %3074 = vmatmul.bf16.gmra.mxu0 %v1687
      %v3075 = vpop.f32.mrf.mxu0
      %v3076 = vadd.f32 %v2987, %v3075
      %v3077 = vpop.f32.mrf.mxu0
      %v3078 = vadd.f32 %v2989, %v3077
      %3079 = vmatmul.bf16.gmra.mxu0 %v1688
      %v3080 = vpop.f32.mrf.mxu0
      %v3081 = vadd.f32 %v2992, %v3080
      %v3082 = vpop.f32.mrf.mxu0
      %v3083 = vadd.f32 %v2994, %v3082
      %3084 = vmatmul.bf16.gmra.mxu0 %v1689
      %v3085 = vpop.f32.mrf.mxu0
      %v3086 = vadd.f32 %v2997, %v3085
      %v3087 = vpop.f32.mrf.mxu0
      %v3088 = vadd.f32 %v2999, %v3087
      %3089 = vmatmul.bf16.gmra.mxu0 %v1690
      %v3090 = vpop.f32.mrf.mxu0
      %v3091 = vadd.f32 %v3002, %v3090
      %v3092 = vpop.f32.mrf.mxu0
      %v3093 = vadd.f32 %v3004, %v3092
      %3094 = vdwg.mxu0
      %3095 = vmatpush.bf16.msra.mxu0 %v2310
      %3096 = vmatpush.bf16.msra.mxu0 %v2309
      %3097 = vmatpush.bf16.msra.mxu0 %v2308
      %3098 = vmatpush.bf16.msra.mxu0 %v2307
      %3099 = vmatpush.bf16.msra.mxu0 %v2306
      %3100 = vmatpush.bf16.msra.mxu0 %v2305
      %3101 = vmatpush.bf16.msra.mxu0 %v2304
      %3102 = vmatpush.bf16.msra.mxu0 %v2303
      %3103 = vmatmul.bf16.gmra.mxu0 %v1771
      %v3104 = vpop.f32.mrf.mxu0
      %v3105 = vadd.f32 %v3016, %v3104
      %v3106 = vpop.f32.mrf.mxu0
      %v3107 = vadd.f32 %v3018, %v3106
      %3108 = vmatmul.bf16.gmra.mxu0 %v1772
      %v3109 = vpop.f32.mrf.mxu0
      %v3110 = vadd.f32 %v3021, %v3109
      %v3111 = vpop.f32.mrf.mxu0
      %v3112 = vadd.f32 %v3023, %v3111
      %3113 = vmatmul.bf16.gmra.mxu0 %v1773
      %v3114 = vpop.f32.mrf.mxu0
      %v3115 = vadd.f32 %v3026, %v3114
      %v3116 = vpop.f32.mrf.mxu0
      %v3117 = vadd.f32 %v3028, %v3116
      %3118 = vmatmul.bf16.gmra.mxu0 %v1774
      %v3119 = vpop.f32.mrf.mxu0
      %v3120 = vadd.f32 %v3031, %v3119
      %v3121 = vpop.f32.mrf.mxu0
      %v3122 = vadd.f32 %v3033, %v3121
      %3123 = vmatmul.bf16.gmra.mxu0 %v1775
      %v3124 = vpop.f32.mrf.mxu0
      %v3125 = vadd.f32 %v3036, %v3124
      %v3126 = vpop.f32.mrf.mxu0
      %v3127 = vadd.f32 %v3038, %v3126
      %3128 = vmatmul.bf16.gmra.mxu0 %v1776
      %v3129 = vpop.f32.mrf.mxu0
      %v3130 = vadd.f32 %v3041, %v3129
      %v3131 = vpop.f32.mrf.mxu0
      %v3132 = vadd.f32 %v3043, %v3131
      %3133 = vmatmul.bf16.gmra.mxu0 %v1777
      %v3134 = vpop.f32.mrf.mxu0
      %v3135 = vadd.f32 %v3046, %v3134
      %v3136 = vpop.f32.mrf.mxu0
      %v3137 = vadd.f32 %v3048, %v3136
      %3138 = vmatmul.bf16.gmra.mxu0 %v1778
      %v3139 = vpop.f32.mrf.mxu0
      %v3140 = vadd.f32 %v3051, %v3139
      %v3141 = vpop.f32.mrf.mxu0
      %v3142 = vadd.f32 %v3053, %v3141
      %3143 = vmatmul.bf16.gmra.mxu0 %v1779
      %v3144 = vpop.f32.mrf.mxu0
      %v3145 = vadd.f32 %v3056, %v3144
      %v3146 = vpop.f32.mrf.mxu0
      %v3147 = vadd.f32 %v3058, %v3146
      %3148 = vmatmul.bf16.gmra.mxu0 %v1780
      %v3149 = vpop.f32.mrf.mxu0
      %v3150 = vadd.f32 %v3061, %v3149
      %v3151 = vpop.f32.mrf.mxu0
      %v3152 = vadd.f32 %v3063, %v3151
      %3153 = vmatmul.bf16.gmra.mxu0 %v1781
      %v3154 = vpop.f32.mrf.mxu0
      %v3155 = vadd.f32 %v3066, %v3154
      %v3156 = vpop.f32.mrf.mxu0
      %v3157 = vadd.f32 %v3068, %v3156
      %3158 = vmatmul.bf16.gmra.mxu0 %v1782
      %v3159 = vpop.f32.mrf.mxu0
      %v3160 = vadd.f32 %v3071, %v3159
      %v3161 = vpop.f32.mrf.mxu0
      %v3162 = vadd.f32 %v3073, %v3161
      %3163 = vmatmul.bf16.gmra.mxu0 %v1783
      %v3164 = vpop.f32.mrf.mxu0
      %v3165 = vadd.f32 %v3076, %v3164
      %v3166 = vpop.f32.mrf.mxu0
      %v3167 = vadd.f32 %v3078, %v3166
      %3168 = vmatmul.bf16.gmra.mxu0 %v1784
      %v3169 = vpop.f32.mrf.mxu0
      %v3170 = vadd.f32 %v3081, %v3169
      %v3171 = vpop.f32.mrf.mxu0
      %v3172 = vadd.f32 %v3083, %v3171
      %3173 = vmatmul.bf16.gmra.mxu0 %v1785
      %v3174 = vpop.f32.mrf.mxu0
      %v3175 = vadd.f32 %v3086, %v3174
      %v3176 = vpop.f32.mrf.mxu0
      %v3177 = vadd.f32 %v3088, %v3176
      %3178 = vmatmul.bf16.gmra.mxu0 %v1786
      %v3179 = vpop.f32.mrf.mxu0
      %v3180 = vadd.f32 %v3091, %v3179
      %v3181 = vpop.f32.mrf.mxu0
      %v3182 = vadd.f32 %v3093, %v3181
      %3183 = vdwg.mxu0
      %v3184 = vmax.f32 %v3105, 0.0
      %v3185 = vmax.f32 %v3107, 0.0
      %v3186 = vmax.f32 %v3110, 0.0
      %v3187 = vmax.f32 %v3112, 0.0
      %v3188 = vmax.f32 %v3115, 0.0
      %v3189 = vmax.f32 %v3117, 0.0
      %v3190 = vmax.f32 %v3120, 0.0
      %v3191 = vmax.f32 %v3122, 0.0
      %v3192 = vmax.f32 %v3125, 0.0
      %v3193 = vmax.f32 %v3127, 0.0
      %v3194 = vmax.f32 %v3130, 0.0
      %v3195 = vmax.f32 %v3132, 0.0
      %v3196 = vmax.f32 %v3135, 0.0
      %v3197 = vmax.f32 %v3137, 0.0
      %v3198 = vmax.f32 %v3140, 0.0
      %v3199 = vmax.f32 %v3142, 0.0
      %v3200 = vmax.f32 %v3145, 0.0
      %v3201 = vmax.f32 %v3147, 0.0
      %v3202 = vmax.f32 %v3150, 0.0
      %v3203 = vmax.f32 %v3152, 0.0
      %v3204 = vmax.f32 %v3155, 0.0
      %v3205 = vmax.f32 %v3157, 0.0
      %v3206 = vmax.f32 %v3160, 0.0
      %v3207 = vmax.f32 %v3162, 0.0
      %v3208 = vmax.f32 %v3165, 0.0
      %v3209 = vmax.f32 %v3167, 0.0
      %v3210 = vmax.f32 %v3170, 0.0
      %v3211 = vmax.f32 %v3172, 0.0
      %v3212 = vmax.f32 %v3175, 0.0
      %v3213 = vmax.f32 %v3177, 0.0
      %v3214 = vmax.f32 %v3180, 0.0
      %v3215 = vmax.f32 %v3182, 0.0
      %3216 = vst [vmem:[%s285 + $0x1] sm:$0xff] %v3184
      %3217 = vst [vmem:[%s285 + $0x9] sm:$0xff] %v3185
      %3218 = vst [vmem:[%s290 + $0x1] sm:$0xff] %v3186
      %3219 = vst [vmem:[%s290 + $0x9] sm:$0xff] %v3187
      %3220 = vst [vmem:[%s295 + $0x1] sm:$0xff] %v3188
      %3221 = vst [vmem:[%s295 + $0x9] sm:$0xff] %v3189
      %3222 = vst [vmem:[%s300 + $0x1] sm:$0xff] %v3190
      %3223 = vst [vmem:[%s300 + $0x9] sm:$0xff] %v3191
      %3224 = vst [vmem:[%s305 + $0x1] sm:$0xff] %v3192
      %3225 = vst [vmem:[%s305 + $0x9] sm:$0xff] %v3193
      %3226 = vst [vmem:[%s310 + $0x1] sm:$0xff] %v3194
      %3227 = vst [vmem:[%s310 + $0x9] sm:$0xff] %v3195
      %3228 = vst [vmem:[%s315 + $0x1] sm:$0xff] %v3196
      %3229 = vst [vmem:[%s315 + $0x9] sm:$0xff] %v3197
      %3230 = vst [vmem:[%s320 + $0x1] sm:$0xff] %v3198
      %3231 = vst [vmem:[%s320 + $0x9] sm:$0xff] %v3199
      %3232 = vst [vmem:[%s325 + $0x1] sm:$0xff] %v3200
      %3233 = vst [vmem:[%s325 + $0x9] sm:$0xff] %v3201
      %3234 = vst [vmem:[%s330 + $0x1] sm:$0xff] %v3202
      %3235 = vst [vmem:[%s330 + $0x9] sm:$0xff] %v3203
      %3236 = vst [vmem:[%s335 + $0x1] sm:$0xff] %v3204
      %3237 = vst [vmem:[%s335 + $0x9] sm:$0xff] %v3205
      %3238 = vst [vmem:[%s340 + $0x1] sm:$0xff] %v3206
      %3239 = vst [vmem:[%s340 + $0x9] sm:$0xff] %v3207
      %3240 = vst [vmem:[%s345 + $0x1] sm:$0xff] %v3208
      %3241 = vst [vmem:[%s345 + $0x9] sm:$0xff] %v3209
      %3242 = vst [vmem:[%s350 + $0x1] sm:$0xff] %v3210
      %3243 = vst [vmem:[%s350 + $0x9] sm:$0xff] %v3211
      %3244 = vst [vmem:[%s355 + $0x1] sm:$0xff] %v3212
      %3245 = vst [vmem:[%s355 + $0x9] sm:$0xff] %v3213
      %3246 = vst [vmem:[%s360 + $0x1] sm:$0xff] %v3214
      %3247 = vst [vmem:[%s360 + $0x9] sm:$0xff] %v3215
      %v3248 = vld [vmem:[#allocation2] sm:$0xff]
      %v3249 = vld [vmem:[#allocation2 + $0x8] sm:$0xff]
      %v3250 = vld [vmem:[#allocation2 + $0x18] sm:$0xff]
      %v3251 = vld [vmem:[#allocation2 + $0x20] sm:$0xff]
      %v3252 = vld [vmem:[#allocation2 + $0x30] sm:$0xff]
      %v3253 = vld [vmem:[#allocation2 + $0x38] sm:$0xff]
      %v3254 = vld [vmem:[#allocation2 + $0x48] sm:$0xff]
      %v3255 = vld [vmem:[#allocation2 + $0x50] sm:$0xff]
      %v3256 = vld [vmem:[#allocation2 + $0x60] sm:$0xff]
      %v3257 = vld [vmem:[#allocation2 + $0x68] sm:$0xff]
      %v3258 = vld [vmem:[#allocation2 + $0x78] sm:$0xff]
      %v3259 = vld [vmem:[#allocation2 + $0x80] sm:$0xff]
      %v3260 = vld [vmem:[#allocation2 + $0x90] sm:$0xff]
      %v3261 = vld [vmem:[#allocation2 + $0x98] sm:$0xff]
      %v3262 = vld [vmem:[#allocation2 + $0xa8] sm:$0xff]
      %v3263 = vld [vmem:[#allocation2 + $0xb0] sm:$0xff]
      %v3264 = vld [vmem:[#allocation2 + $0xc0] sm:$0xff]
      %v3265 = vld [vmem:[#allocation2 + $0xc8] sm:$0xff]
      %v3266 = vld [vmem:[#allocation2 + $0xd8] sm:$0xff]
      %v3267 = vld [vmem:[#allocation2 + $0xe0] sm:$0xff]
      %v3268 = vld [vmem:[#allocation2 + $0xf0] sm:$0xff]
      %v3269 = vld [vmem:[#allocation2 + $0xf8] sm:$0xff]
      %v3270 = vld [vmem:[#allocation2 + $0x108] sm:$0xff]
      %v3271 = vld [vmem:[#allocation2 + $0x110] sm:$0xff]
      %v3272 = vld [vmem:[#allocation2 + $0x120] sm:$0xff]
      %v3273 = vld [vmem:[#allocation2 + $0x128] sm:$0xff]
      %v3274 = vld [vmem:[#allocation2 + $0x138] sm:$0xff]
      %v3275 = vld [vmem:[#allocation2 + $0x140] sm:$0xff]
      %v3276 = vld [vmem:[#allocation2 + $0x150] sm:$0xff]
      %v3277 = vld [vmem:[#allocation2 + $0x158] sm:$0xff]
      %v3278 = vld [vmem:[#allocation2 + $0x168] sm:$0xff]
      %v3279 = vld [vmem:[#allocation2 + $0x170] sm:$0xff]
      %v3280 = vpack.c.bf16 %v3248, %v3248
      %v3281 = vpack.c.bf16 %v3249, %v3249
      %v3282 = vpack.c.bf16 %v3250, %v3250
      %v3283 = vpack.c.bf16 %v3251, %v3251
      %v3284 = vpack.c.bf16 %v3252, %v3252
      %v3285 = vpack.c.bf16 %v3253, %v3253
      %v3286 = vpack.c.bf16 %v3254, %v3254
      %v3287 = vpack.c.bf16 %v3255, %v3255
      %v3288 = vpack.c.bf16 %v3256, %v3256
      %v3289 = vpack.c.bf16 %v3257, %v3257
      %v3290 = vpack.c.bf16 %v3258, %v3258
      %v3291 = vpack.c.bf16 %v3259, %v3259
      %v3292 = vpack.c.bf16 %v3260, %v3260
      %v3293 = vpack.c.bf16 %v3261, %v3261
      %v3294 = vpack.c.bf16 %v3262, %v3262
      %v3295 = vpack.c.bf16 %v3263, %v3263
      %v3296 = vpack.c.bf16 %v3264, %v3264
      %v3297 = vpack.c.bf16 %v3265, %v3265
      %v3298 = vpack.c.bf16 %v3266, %v3266
      %v3299 = vpack.c.bf16 %v3267, %v3267
      %v3300 = vpack.c.bf16 %v3268, %v3268
      %v3301 = vpack.c.bf16 %v3269, %v3269
      %v3302 = vpack.c.bf16 %v3270, %v3270
      %v3303 = vpack.c.bf16 %v3271, %v3271
      %v3304 = vpack.c.bf16 %v3272, %v3272
      %v3305 = vpack.c.bf16 %v3273, %v3273
      %v3306 = vpack.c.bf16 %v3274, %v3274
      %v3307 = vpack.c.bf16 %v3275, %v3275
      %v3308 = vpack.c.bf16 %v3276, %v3276
      %v3309 = vpack.c.bf16 %v3277, %v3277
      %v3310 = vpack.c.bf16 %v3278, %v3278
      %v3311 = vpack.c.bf16 %v3279, %v3279
      %v3312 = vld [vmem:[#allocation2 + $0x1] sm:$0xff]
      %v3313 = vld [vmem:[#allocation2 + $0x9] sm:$0xff]
      %v3314 = vld [vmem:[#allocation2 + $0x19] sm:$0xff]
      %v3315 = vld [vmem:[#allocation2 + $0x21] sm:$0xff]
      %v3316 = vld [vmem:[#allocation2 + $0x31] sm:$0xff]
      %v3317 = vld [vmem:[#allocation2 + $0x39] sm:$0xff]
      %v3318 = vld [vmem:[#allocation2 + $0x49] sm:$0xff]
      %v3319 = vld [vmem:[#allocation2 + $0x51] sm:$0xff]
      %v3320 = vld [vmem:[#allocation2 + $0x61] sm:$0xff]
      %v3321 = vld [vmem:[#allocation2 + $0x69] sm:$0xff]
      %v3322 = vld [vmem:[#allocation2 + $0x79] sm:$0xff]
      %v3323 = vld [vmem:[#allocation2 + $0x81] sm:$0xff]
      %v3324 = vld [vmem:[#allocation2 + $0x91] sm:$0xff]
      %v3325 = vld [vmem:[#allocation2 + $0x99] sm:$0xff]
      %v3326 = vld [vmem:[#allocation2 + $0xa9] sm:$0xff]
      %v3327 = vld [vmem:[#allocation2 + $0xb1] sm:$0xff]
      %v3328 = vld [vmem:[#allocation2 + $0xc1] sm:$0xff]
      %v3329 = vld [vmem:[#allocation2 + $0xc9] sm:$0xff]
      %v3330 = vld [vmem:[#allocation2 + $0xd9] sm:$0xff]
      %v3331 = vld [vmem:[#allocation2 + $0xe1] sm:$0xff]
      %v3332 = vld [vmem:[#allocation2 + $0xf1] sm:$0xff]
      %v3333 = vld [vmem:[#allocation2 + $0xf9] sm:$0xff]
      %v3334 = vld [vmem:[#allocation2 + $0x109] sm:$0xff]
      %v3335 = vld [vmem:[#allocation2 + $0x111] sm:$0xff]
      %v3336 = vld [vmem:[#allocation2 + $0x121] sm:$0xff]
      %v3337 = vld [vmem:[#allocation2 + $0x129] sm:$0xff]
      %v3338 = vld [vmem:[#allocation2 + $0x139] sm:$0xff]
      %v3339 = vld [vmem:[#allocation2 + $0x141] sm:$0xff]
      %v3340 = vld [vmem:[#allocation2 + $0x151] sm:$0xff]
      %v3341 = vld [vmem:[#allocation2 + $0x159] sm:$0xff]
      %v3342 = vld [vmem:[#allocation2 + $0x169] sm:$0xff]
      %v3343 = vld [vmem:[#allocation2 + $0x171] sm:$0xff]
      %v3344 = vpack.c.bf16 %v3312, %v3312
      %v3345 = vpack.c.bf16 %v3313, %v3313
      %v3346 = vpack.c.bf16 %v3314, %v3314
      %v3347 = vpack.c.bf16 %v3315, %v3315
      %v3348 = vpack.c.bf16 %v3316, %v3316
      %v3349 = vpack.c.bf16 %v3317, %v3317
      %v3350 = vpack.c.bf16 %v3318, %v3318
      %v3351 = vpack.c.bf16 %v3319, %v3319
      %v3352 = vpack.c.bf16 %v3320, %v3320
      %v3353 = vpack.c.bf16 %v3321, %v3321
      %v3354 = vpack.c.bf16 %v3322, %v3322
      %v3355 = vpack.c.bf16 %v3323, %v3323
      %v3356 = vpack.c.bf16 %v3324, %v3324
      %v3357 = vpack.c.bf16 %v3325, %v3325
      %v3358 = vpack.c.bf16 %v3326, %v3326
      %v3359 = vpack.c.bf16 %v3327, %v3327
      %v3360 = vpack.c.bf16 %v3328, %v3328
      %v3361 = vpack.c.bf16 %v3329, %v3329
      %v3362 = vpack.c.bf16 %v3330, %v3330
      %v3363 = vpack.c.bf16 %v3331, %v3331
      %v3364 = vpack.c.bf16 %v3332, %v3332
      %v3365 = vpack.c.bf16 %v3333, %v3333
      %v3366 = vpack.c.bf16 %v3334, %v3334
      %v3367 = vpack.c.bf16 %v3335, %v3335
      %v3368 = vpack.c.bf16 %v3336, %v3336
      %v3369 = vpack.c.bf16 %v3337, %v3337
      %v3370 = vpack.c.bf16 %v3338, %v3338
      %v3371 = vpack.c.bf16 %v3339, %v3339
      %v3372 = vpack.c.bf16 %v3340, %v3340
      %v3373 = vpack.c.bf16 %v3341, %v3341
      %v3374 = vpack.c.bf16 %v3342, %v3342
      %v3375 = vpack.c.bf16 %v3343, %v3343
      %v3376 = vld [vmem:[#allocation2 + $0x2] sm:$0xff]
      %v3377 = vld [vmem:[#allocation2 + $0xa] sm:$0xff]
      %v3378 = vld [vmem:[#allocation2 + $0x1a] sm:$0xff]
      %v3379 = vld [vmem:[#allocation2 + $0x22] sm:$0xff]
      %v3380 = vld [vmem:[#allocation2 + $0x32] sm:$0xff]
      %v3381 = vld [vmem:[#allocation2 + $0x3a] sm:$0xff]
      %v3382 = vld [vmem:[#allocation2 + $0x4a] sm:$0xff]
      %v3383 = vld [vmem:[#allocation2 + $0x52] sm:$0xff]
      %v3384 = vld [vmem:[#allocation2 + $0x62] sm:$0xff]
      %v3385 = vld [vmem:[#allocation2 + $0x6a] sm:$0xff]
      %v3386 = vld [vmem:[#allocation2 + $0x7a] sm:$0xff]
      %v3387 = vld [vmem:[#allocation2 + $0x82] sm:$0xff]
      %v3388 = vld [vmem:[#allocation2 + $0x92] sm:$0xff]
      %v3389 = vld [vmem:[#allocation2 + $0x9a] sm:$0xff]
      %v3390 = vld [vmem:[#allocation2 + $0xaa] sm:$0xff]
      %v3391 = vld [vmem:[#allocation2 + $0xb2] sm:$0xff]
      %v3392 = vld [vmem:[#allocation2 + $0xc2] sm:$0xff]
      %v3393 = vld [vmem:[#allocation2 + $0xca] sm:$0xff]
      %v3394 = vld [vmem:[#allocation2 + $0xda] sm:$0xff]
      %v3395 = vld [vmem:[#allocation2 + $0xe2] sm:$0xff]
      %v3396 = vld [vmem:[#allocation2 + $0xf2] sm:$0xff]
      %v3397 = vld [vmem:[#allocation2 + $0xfa] sm:$0xff]
      %v3398 = vld [vmem:[#allocation2 + $0x10a] sm:$0xff]
      %v3399 = vld [vmem:[#allocation2 + $0x112] sm:$0xff]
      %v3400 = vld [vmem:[#allocation2 + $0x122] sm:$0xff]
      %v3401 = vld [vmem:[#allocation2 + $0x12a] sm:$0xff]
      %v3402 = vld [vmem:[#allocation2 + $0x13a] sm:$0xff]
      %v3403 = vld [vmem:[#allocation2 + $0x142] sm:$0xff]
      %v3404 = vld [vmem:[#allocation2 + $0x152] sm:$0xff]
      %v3405 = vld [vmem:[#allocation2 + $0x15a] sm:$0xff]
      %v3406 = vld [vmem:[#allocation2 + $0x16a] sm:$0xff]
      %v3407 = vld [vmem:[#allocation2 + $0x172] sm:$0xff]
      %v3408 = vpack.c.bf16 %v3376, %v3376
      %v3409 = vpack.c.bf16 %v3377, %v3377
      %v3410 = vpack.c.bf16 %v3378, %v3378
      %v3411 = vpack.c.bf16 %v3379, %v3379
      %v3412 = vpack.c.bf16 %v3380, %v3380
      %v3413 = vpack.c.bf16 %v3381, %v3381
      %v3414 = vpack.c.bf16 %v3382, %v3382
      %v3415 = vpack.c.bf16 %v3383, %v3383
      %v3416 = vpack.c.bf16 %v3384, %v3384
      %v3417 = vpack.c.bf16 %v3385, %v3385
      %v3418 = vpack.c.bf16 %v3386, %v3386
      %v3419 = vpack.c.bf16 %v3387, %v3387
      %v3420 = vpack.c.bf16 %v3388, %v3388
      %v3421 = vpack.c.bf16 %v3389, %v3389
      %v3422 = vpack.c.bf16 %v3390, %v3390
      %v3423 = vpack.c.bf16 %v3391, %v3391
      %v3424 = vpack.c.bf16 %v3392, %v3392
      %v3425 = vpack.c.bf16 %v3393, %v3393
      %v3426 = vpack.c.bf16 %v3394, %v3394
      %v3427 = vpack.c.bf16 %v3395, %v3395
      %v3428 = vpack.c.bf16 %v3396, %v3396
      %v3429 = vpack.c.bf16 %v3397, %v3397
      %v3430 = vpack.c.bf16 %v3398, %v3398
      %v3431 = vpack.c.bf16 %v3399, %v3399
      %v3432 = vpack.c.bf16 %v3400, %v3400
      %v3433 = vpack.c.bf16 %v3401, %v3401
      %v3434 = vpack.c.bf16 %v3402, %v3402
      %v3435 = vpack.c.bf16 %v3403, %v3403
      %v3436 = vpack.c.bf16 %v3404, %v3404
      %v3437 = vpack.c.bf16 %v3405, %v3405
      %v3438 = vpack.c.bf16 %v3406, %v3406
      %v3439 = vpack.c.bf16 %v3407, %v3407
      %v3440 = vld [vmem:[%s285] sm:$0xff]
      %v3441 = vld [vmem:[%s285 + $0x8] sm:$0xff]
      %v3442 = vld [vmem:[%s285 + $0x18] sm:$0xff]
      %v3443 = vld [vmem:[%s285 + $0x20] sm:$0xff]
      %v3444 = vld [vmem:[%s285 + $0x30] sm:$0xff]
      %v3445 = vld [vmem:[%s285 + $0x38] sm:$0xff]
      %v3446 = vld [vmem:[%s285 + $0x48] sm:$0xff]
      %v3447 = vld [vmem:[%s285 + $0x50] sm:$0xff]
      %v3448 = vld [vmem:[%s285 + $0x60] sm:$0xff]
      %v3449 = vld [vmem:[%s285 + $0x68] sm:$0xff]
      %v3450 = vld [vmem:[%s285 + $0x78] sm:$0xff]
      %v3451 = vld [vmem:[%s285 + $0x80] sm:$0xff]
      %v3452 = vld [vmem:[%s285 + $0x90] sm:$0xff]
      %v3453 = vld [vmem:[%s285 + $0x98] sm:$0xff]
      %v3454 = vld [vmem:[%s285 + $0xa8] sm:$0xff]
      %v3455 = vld [vmem:[%s285 + $0xb0] sm:$0xff]
      %v3456 = vld [vmem:[%s285 + $0xc0] sm:$0xff]
      %v3457 = vld [vmem:[%s285 + $0xc8] sm:$0xff]
      %v3458 = vld [vmem:[%s285 + $0xd8] sm:$0xff]
      %v3459 = vld [vmem:[%s285 + $0xe0] sm:$0xff]
      %v3460 = vld [vmem:[%s285 + $0xf0] sm:$0xff]
      %v3461 = vld [vmem:[%s285 + $0xf8] sm:$0xff]
      %v3462 = vld [vmem:[%s285 + $0x108] sm:$0xff]
      %v3463 = vld [vmem:[%s285 + $0x110] sm:$0xff]
      %v3464 = vld [vmem:[%s285 + $0x120] sm:$0xff]
      %v3465 = vld [vmem:[%s285 + $0x128] sm:$0xff]
      %v3466 = vld [vmem:[%s285 + $0x138] sm:$0xff]
      %v3467 = vld [vmem:[%s285 + $0x140] sm:$0xff]
      %v3468 = vld [vmem:[%s285 + $0x150] sm:$0xff]
      %v3469 = vld [vmem:[%s285 + $0x158] sm:$0xff]
      %v3470 = vld [vmem:[%s285 + $0x168] sm:$0xff]
      %v3471 = vld [vmem:[%s285 + $0x170] sm:$0xff]
      %v3472 = vpack.c.bf16 %v3440, %v3440
      %v3473 = vpack.c.bf16 %v3441, %v3441
      %v3474 = vpack.c.bf16 %v3442, %v3442
      %v3475 = vpack.c.bf16 %v3443, %v3443
      %v3476 = vpack.c.bf16 %v3444, %v3444
      %v3477 = vpack.c.bf16 %v3445, %v3445
      %v3478 = vpack.c.bf16 %v3446, %v3446
      %v3479 = vpack.c.bf16 %v3447, %v3447
      %v3480 = vpack.c.bf16 %v3448, %v3448
      %v3481 = vpack.c.bf16 %v3449, %v3449
      %v3482 = vpack.c.bf16 %v3450, %v3450
      %v3483 = vpack.c.bf16 %v3451, %v3451
      %v3484 = vpack.c.bf16 %v3452, %v3452
      %v3485 = vpack.c.bf16 %v3453, %v3453
      %v3486 = vpack.c.bf16 %v3454, %v3454
      %v3487 = vpack.c.bf16 %v3455, %v3455
      %v3488 = vpack.c.bf16 %v3456, %v3456
      %v3489 = vpack.c.bf16 %v3457, %v3457
      %v3490 = vpack.c.bf16 %v3458, %v3458
      %v3491 = vpack.c.bf16 %v3459, %v3459
      %v3492 = vpack.c.bf16 %v3460, %v3460
      %v3493 = vpack.c.bf16 %v3461, %v3461
      %v3494 = vpack.c.bf16 %v3462, %v3462
      %v3495 = vpack.c.bf16 %v3463, %v3463
      %v3496 = vpack.c.bf16 %v3464, %v3464
      %v3497 = vpack.c.bf16 %v3465, %v3465
      %v3498 = vpack.c.bf16 %v3466, %v3466
      %v3499 = vpack.c.bf16 %v3467, %v3467
      %v3500 = vpack.c.bf16 %v3468, %v3468
      %v3501 = vpack.c.bf16 %v3469, %v3469
      %v3502 = vpack.c.bf16 %v3470, %v3470
      %v3503 = vpack.c.bf16 %v3471, %v3471
      %v3504 = vld [vmem:[%s285 + $0x1] sm:$0xff]
      %v3505 = vld [vmem:[%s285 + $0x9] sm:$0xff]
      %v3506 = vld [vmem:[%s285 + $0x19] sm:$0xff]
      %v3507 = vld [vmem:[%s285 + $0x21] sm:$0xff]
      %v3508 = vld [vmem:[%s285 + $0x31] sm:$0xff]
      %v3509 = vld [vmem:[%s285 + $0x39] sm:$0xff]
      %v3510 = vld [vmem:[%s285 + $0x49] sm:$0xff]
      %v3511 = vld [vmem:[%s285 + $0x51] sm:$0xff]
      %v3512 = vld [vmem:[%s285 + $0x61] sm:$0xff]
      %v3513 = vld [vmem:[%s285 + $0x69] sm:$0xff]
      %v3514 = vld [vmem:[%s285 + $0x79] sm:$0xff]
      %v3515 = vld [vmem:[%s285 + $0x81] sm:$0xff]
      %v3516 = vld [vmem:[%s285 + $0x91] sm:$0xff]
      %v3517 = vld [vmem:[%s285 + $0x99] sm:$0xff]
      %v3518 = vld [vmem:[%s285 + $0xa9] sm:$0xff]
      %v3519 = vld [vmem:[%s285 + $0xb1] sm:$0xff]
      %v3520 = vld [vmem:[%s285 + $0xc1] sm:$0xff]
      %v3521 = vld [vmem:[%s285 + $0xc9] sm:$0xff]
      %v3522 = vld [vmem:[%s285 + $0xd9] sm:$0xff]
      %v3523 = vld [vmem:[%s285 + $0xe1] sm:$0xff]
      %v3524 = vld [vmem:[%s285 + $0xf1] sm:$0xff]
      %v3525 = vld [vmem:[%s285 + $0xf9] sm:$0xff]
      %v3526 = vld [vmem:[%s285 + $0x109] sm:$0xff]
      %v3527 = vld [vmem:[%s285 + $0x111] sm:$0xff]
      %v3528 = vld [vmem:[%s285 + $0x121] sm:$0xff]
      %v3529 = vld [vmem:[%s285 + $0x129] sm:$0xff]
      %v3530 = vld [vmem:[%s285 + $0x139] sm:$0xff]
      %v3531 = vld [vmem:[%s285 + $0x141] sm:$0xff]
      %v3532 = vld [vmem:[%s285 + $0x151] sm:$0xff]
      %v3533 = vld [vmem:[%s285 + $0x159] sm:$0xff]
      %v3534 = vld [vmem:[%s285 + $0x169] sm:$0xff]
      %v3535 = vld [vmem:[%s285 + $0x171] sm:$0xff]
      %v3536 = vpack.c.bf16 %v3504, %v3504
      %v3537 = vpack.c.bf16 %v3505, %v3505
      %v3538 = vpack.c.bf16 %v3506, %v3506
      %v3539 = vpack.c.bf16 %v3507, %v3507
      %v3540 = vpack.c.bf16 %v3508, %v3508
      %v3541 = vpack.c.bf16 %v3509, %v3509
      %v3542 = vpack.c.bf16 %v3510, %v3510
      %v3543 = vpack.c.bf16 %v3511, %v3511
      %v3544 = vpack.c.bf16 %v3512, %v3512
      %v3545 = vpack.c.bf16 %v3513, %v3513
      %v3546 = vpack.c.bf16 %v3514, %v3514
      %v3547 = vpack.c.bf16 %v3515, %v3515
      %v3548 = vpack.c.bf16 %v3516, %v3516
      %v3549 = vpack.c.bf16 %v3517, %v3517
      %v3550 = vpack.c.bf16 %v3518, %v3518
      %v3551 = vpack.c.bf16 %v3519, %v3519
      %v3552 = vpack.c.bf16 %v3520, %v3520
      %v3553 = vpack.c.bf16 %v3521, %v3521
      %v3554 = vpack.c.bf16 %v3522, %v3522
      %v3555 = vpack.c.bf16 %v3523, %v3523
      %v3556 = vpack.c.bf16 %v3524, %v3524
      %v3557 = vpack.c.bf16 %v3525, %v3525
      %v3558 = vpack.c.bf16 %v3526, %v3526
      %v3559 = vpack.c.bf16 %v3527, %v3527
      %v3560 = vpack.c.bf16 %v3528, %v3528
      %v3561 = vpack.c.bf16 %v3529, %v3529
      %v3562 = vpack.c.bf16 %v3530, %v3530
      %v3563 = vpack.c.bf16 %v3531, %v3531
      %v3564 = vpack.c.bf16 %v3532, %v3532
      %v3565 = vpack.c.bf16 %v3533, %v3533
      %v3566 = vpack.c.bf16 %v3534, %v3534
      %v3567 = vpack.c.bf16 %v3535, %v3535
      %v3568 = vld [vmem:[%s285 + $0x2] sm:$0xff]
      %v3569 = vld [vmem:[%s285 + $0xa] sm:$0xff]
      %v3570 = vld [vmem:[%s285 + $0x1a] sm:$0xff]
      %v3571 = vld [vmem:[%s285 + $0x22] sm:$0xff]
      %v3572 = vld [vmem:[%s285 + $0x32] sm:$0xff]
      %v3573 = vld [vmem:[%s285 + $0x3a] sm:$0xff]
      %v3574 = vld [vmem:[%s285 + $0x4a] sm:$0xff]
      %v3575 = vld [vmem:[%s285 + $0x52] sm:$0xff]
      %v3576 = vld [vmem:[%s285 + $0x62] sm:$0xff]
      %v3577 = vld [vmem:[%s285 + $0x6a] sm:$0xff]
      %v3578 = vld [vmem:[%s285 + $0x7a] sm:$0xff]
      %v3579 = vld [vmem:[%s285 + $0x82] sm:$0xff]
      %v3580 = vld [vmem:[%s285 + $0x92] sm:$0xff]
      %v3581 = vld [vmem:[%s285 + $0x9a] sm:$0xff]
      %v3582 = vld [vmem:[%s285 + $0xaa] sm:$0xff]
      %v3583 = vld [vmem:[%s285 + $0xb2] sm:$0xff]
      %v3584 = vld [vmem:[%s285 + $0xc2] sm:$0xff]
      %v3585 = vld [vmem:[%s285 + $0xca] sm:$0xff]
      %v3586 = vld [vmem:[%s285 + $0xda] sm:$0xff]
      %v3587 = vld [vmem:[%s285 + $0xe2] sm:$0xff]
      %v3588 = vld [vmem:[%s285 + $0xf2] sm:$0xff]
      %v3589 = vld [vmem:[%s285 + $0xfa] sm:$0xff]
      %v3590 = vld [vmem:[%s285 + $0x10a] sm:$0xff]
      %v3591 = vld [vmem:[%s285 + $0x112] sm:$0xff]
      %v3592 = vld [vmem:[%s285 + $0x122] sm:$0xff]
      %v3593 = vld [vmem:[%s285 + $0x12a] sm:$0xff]
      %v3594 = vld [vmem:[%s285 + $0x13a] sm:$0xff]
      %v3595 = vld [vmem:[%s285 + $0x142] sm:$0xff]
      %v3596 = vld [vmem:[%s285 + $0x152] sm:$0xff]
      %v3597 = vld [vmem:[%s285 + $0x15a] sm:$0xff]
      %v3598 = vld [vmem:[%s285 + $0x16a] sm:$0xff]
      %v3599 = vld [vmem:[%s285 + $0x172] sm:$0xff]
      %v3600 = vpack.c.bf16 %v3568, %v3568
      %v3601 = vpack.c.bf16 %v3569, %v3569
      %v3602 = vpack.c.bf16 %v3570, %v3570
      %v3603 = vpack.c.bf16 %v3571, %v3571
      %v3604 = vpack.c.bf16 %v3572, %v3572
      %v3605 = vpack.c.bf16 %v3573, %v3573
      %v3606 = vpack.c.bf16 %v3574, %v3574
      %v3607 = vpack.c.bf16 %v3575, %v3575
      %v3608 = vpack.c.bf16 %v3576, %v3576
      %v3609 = vpack.c.bf16 %v3577, %v3577
      %v3610 = vpack.c.bf16 %v3578, %v3578
      %v3611 = vpack.c.bf16 %v3579, %v3579
      %v3612 = vpack.c.bf16 %v3580, %v3580
      %v3613 = vpack.c.bf16 %v3581, %v3581
      %v3614 = vpack.c.bf16 %v3582, %v3582
      %v3615 = vpack.c.bf16 %v3583, %v3583
      %v3616 = vpack.c.bf16 %v3584, %v3584
      %v3617 = vpack.c.bf16 %v3585, %v3585
      %v3618 = vpack.c.bf16 %v3586, %v3586
      %v3619 = vpack.c.bf16 %v3587, %v3587
      %v3620 = vpack.c.bf16 %v3588, %v3588
      %v3621 = vpack.c.bf16 %v3589, %v3589
      %v3622 = vpack.c.bf16 %v3590, %v3590
      %v3623 = vpack.c.bf16 %v3591, %v3591
      %v3624 = vpack.c.bf16 %v3592, %v3592
      %v3625 = vpack.c.bf16 %v3593, %v3593
      %v3626 = vpack.c.bf16 %v3594, %v3594
      %v3627 = vpack.c.bf16 %v3595, %v3595
      %v3628 = vpack.c.bf16 %v3596, %v3596
      %v3629 = vpack.c.bf16 %v3597, %v3597
      %v3630 = vpack.c.bf16 %v3598, %v3598
      %v3631 = vpack.c.bf16 %v3599, %v3599
      %v3632 = vld [vmem:[%s290] sm:$0xff]
      %v3633 = vld [vmem:[%s290 + $0x8] sm:$0xff]
      %v3634 = vld [vmem:[%s290 + $0x18] sm:$0xff]
      %v3635 = vld [vmem:[%s290 + $0x20] sm:$0xff]
      %v3636 = vld [vmem:[%s290 + $0x30] sm:$0xff]
      %v3637 = vld [vmem:[%s290 + $0x38] sm:$0xff]
      %v3638 = vld [vmem:[%s290 + $0x48] sm:$0xff]
      %v3639 = vld [vmem:[%s290 + $0x50] sm:$0xff]
      %v3640 = vld [vmem:[%s290 + $0x60] sm:$0xff]
      %v3641 = vld [vmem:[%s290 + $0x68] sm:$0xff]
      %v3642 = vld [vmem:[%s290 + $0x78] sm:$0xff]
      %v3643 = vld [vmem:[%s290 + $0x80] sm:$0xff]
      %v3644 = vld [vmem:[%s290 + $0x90] sm:$0xff]
      %v3645 = vld [vmem:[%s290 + $0x98] sm:$0xff]
      %v3646 = vld [vmem:[%s290 + $0xa8] sm:$0xff]
      %v3647 = vld [vmem:[%s290 + $0xb0] sm:$0xff]
      %v3648 = vld [vmem:[%s290 + $0xc0] sm:$0xff]
      %v3649 = vld [vmem:[%s290 + $0xc8] sm:$0xff]
      %v3650 = vld [vmem:[%s290 + $0xd8] sm:$0xff]
      %v3651 = vld [vmem:[%s290 + $0xe0] sm:$0xff]
      %v3652 = vld [vmem:[%s290 + $0xf0] sm:$0xff]
      %v3653 = vld [vmem:[%s290 + $0xf8] sm:$0xff]
      %v3654 = vld [vmem:[%s290 + $0x108] sm:$0xff]
      %v3655 = vld [vmem:[%s290 + $0x110] sm:$0xff]
      %v3656 = vld [vmem:[%s290 + $0x120] sm:$0xff]
      %v3657 = vld [vmem:[%s290 + $0x128] sm:$0xff]
      %v3658 = vld [vmem:[%s290 + $0x138] sm:$0xff]
      %v3659 = vld [vmem:[%s290 + $0x140] sm:$0xff]
      %v3660 = vld [vmem:[%s290 + $0x150] sm:$0xff]
      %v3661 = vld [vmem:[%s290 + $0x158] sm:$0xff]
      %v3662 = vld [vmem:[%s290 + $0x168] sm:$0xff]
      %v3663 = vld [vmem:[%s290 + $0x170] sm:$0xff]
      %v3664 = vpack.c.bf16 %v3632, %v3632
      %v3665 = vpack.c.bf16 %v3633, %v3633
      %v3666 = vpack.c.bf16 %v3634, %v3634
      %v3667 = vpack.c.bf16 %v3635, %v3635
      %v3668 = vpack.c.bf16 %v3636, %v3636
      %v3669 = vpack.c.bf16 %v3637, %v3637
      %v3670 = vpack.c.bf16 %v3638, %v3638
      %v3671 = vpack.c.bf16 %v3639, %v3639
      %v3672 = vpack.c.bf16 %v3640, %v3640
      %v3673 = vpack.c.bf16 %v3641, %v3641
      %v3674 = vpack.c.bf16 %v3642, %v3642
      %v3675 = vpack.c.bf16 %v3643, %v3643
      %v3676 = vpack.c.bf16 %v3644, %v3644
      %v3677 = vpack.c.bf16 %v3645, %v3645
      %v3678 = vpack.c.bf16 %v3646, %v3646
      %v3679 = vpack.c.bf16 %v3647, %v3647
      %v3680 = vpack.c.bf16 %v3648, %v3648
      %v3681 = vpack.c.bf16 %v3649, %v3649
      %v3682 = vpack.c.bf16 %v3650, %v3650
      %v3683 = vpack.c.bf16 %v3651, %v3651
      %v3684 = vpack.c.bf16 %v3652, %v3652
      %v3685 = vpack.c.bf16 %v3653, %v3653
      %v3686 = vpack.c.bf16 %v3654, %v3654
      %v3687 = vpack.c.bf16 %v3655, %v3655
      %v3688 = vpack.c.bf16 %v3656, %v3656
      %v3689 = vpack.c.bf16 %v3657, %v3657
      %v3690 = vpack.c.bf16 %v3658, %v3658
      %v3691 = vpack.c.bf16 %v3659, %v3659
      %v3692 = vpack.c.bf16 %v3660, %v3660
      %v3693 = vpack.c.bf16 %v3661, %v3661
      %v3694 = vpack.c.bf16 %v3662, %v3662
      %v3695 = vpack.c.bf16 %v3663, %v3663
      %v3696 = vld [vmem:[%s290 + $0x1] sm:$0xff]
      %v3697 = vld [vmem:[%s290 + $0x9] sm:$0xff]
      %v3698 = vld [vmem:[%s290 + $0x19] sm:$0xff]
      %v3699 = vld [vmem:[%s290 + $0x21] sm:$0xff]
      %v3700 = vld [vmem:[%s290 + $0x31] sm:$0xff]
      %v3701 = vld [vmem:[%s290 + $0x39] sm:$0xff]
      %v3702 = vld [vmem:[%s290 + $0x49] sm:$0xff]
      %v3703 = vld [vmem:[%s290 + $0x51] sm:$0xff]
      %v3704 = vld [vmem:[%s290 + $0x61] sm:$0xff]
      %v3705 = vld [vmem:[%s290 + $0x69] sm:$0xff]
      %v3706 = vld [vmem:[%s290 + $0x79] sm:$0xff]
      %v3707 = vld [vmem:[%s290 + $0x81] sm:$0xff]
      %v3708 = vld [vmem:[%s290 + $0x91] sm:$0xff]
      %v3709 = vld [vmem:[%s290 + $0x99] sm:$0xff]
      %v3710 = vld [vmem:[%s290 + $0xa9] sm:$0xff]
      %v3711 = vld [vmem:[%s290 + $0xb1] sm:$0xff]
      %v3712 = vld [vmem:[%s290 + $0xc1] sm:$0xff]
      %v3713 = vld [vmem:[%s290 + $0xc9] sm:$0xff]
      %v3714 = vld [vmem:[%s290 + $0xd9] sm:$0xff]
      %v3715 = vld [vmem:[%s290 + $0xe1] sm:$0xff]
      %v3716 = vld [vmem:[%s290 + $0xf1] sm:$0xff]
      %v3717 = vld [vmem:[%s290 + $0xf9] sm:$0xff]
      %v3718 = vld [vmem:[%s290 + $0x109] sm:$0xff]
      %v3719 = vld [vmem:[%s290 + $0x111] sm:$0xff]
      %v3720 = vld [vmem:[%s290 + $0x121] sm:$0xff]
      %v3721 = vld [vmem:[%s290 + $0x129] sm:$0xff]
      %v3722 = vld [vmem:[%s290 + $0x139] sm:$0xff]
      %v3723 = vld [vmem:[%s290 + $0x141] sm:$0xff]
      %v3724 = vld [vmem:[%s290 + $0x151] sm:$0xff]
      %v3725 = vld [vmem:[%s290 + $0x159] sm:$0xff]
      %v3726 = vld [vmem:[%s290 + $0x169] sm:$0xff]
      %v3727 = vld [vmem:[%s290 + $0x171] sm:$0xff]
      %v3728 = vpack.c.bf16 %v3696, %v3696
      %v3729 = vpack.c.bf16 %v3697, %v3697
      %v3730 = vpack.c.bf16 %v3698, %v3698
      %v3731 = vpack.c.bf16 %v3699, %v3699
      %v3732 = vpack.c.bf16 %v3700, %v3700
      %v3733 = vpack.c.bf16 %v3701, %v3701
      %v3734 = vpack.c.bf16 %v3702, %v3702
      %v3735 = vpack.c.bf16 %v3703, %v3703
      %v3736 = vpack.c.bf16 %v3704, %v3704
      %v3737 = vpack.c.bf16 %v3705, %v3705
      %v3738 = vpack.c.bf16 %v3706, %v3706
      %v3739 = vpack.c.bf16 %v3707, %v3707
      %v3740 = vpack.c.bf16 %v3708, %v3708
      %v3741 = vpack.c.bf16 %v3709, %v3709
      %v3742 = vpack.c.bf16 %v3710, %v3710
      %v3743 = vpack.c.bf16 %v3711, %v3711
      %v3744 = vpack.c.bf16 %v3712, %v3712
      %v3745 = vpack.c.bf16 %v3713, %v3713
      %v3746 = vpack.c.bf16 %v3714, %v3714
      %v3747 = vpack.c.bf16 %v3715, %v3715
      %v3748 = vpack.c.bf16 %v3716, %v3716
      %v3749 = vpack.c.bf16 %v3717, %v3717
      %v3750 = vpack.c.bf16 %v3718, %v3718
      %v3751 = vpack.c.bf16 %v3719, %v3719
      %v3752 = vpack.c.bf16 %v3720, %v3720
      %v3753 = vpack.c.bf16 %v3721, %v3721
      %v3754 = vpack.c.bf16 %v3722, %v3722
      %v3755 = vpack.c.bf16 %v3723, %v3723
      %v3756 = vpack.c.bf16 %v3724, %v3724
      %v3757 = vpack.c.bf16 %v3725, %v3725
      %v3758 = vpack.c.bf16 %v3726, %v3726
      %v3759 = vpack.c.bf16 %v3727, %v3727
      %v3760 = vld [vmem:[%s290 + $0x2] sm:$0xff]
      %v3761 = vld [vmem:[%s290 + $0xa] sm:$0xff]
      %v3762 = vld [vmem:[%s290 + $0x1a] sm:$0xff]
      %v3763 = vld [vmem:[%s290 + $0x22] sm:$0xff]
      %v3764 = vld [vmem:[%s290 + $0x32] sm:$0xff]
      %v3765 = vld [vmem:[%s290 + $0x3a] sm:$0xff]
      %v3766 = vld [vmem:[%s290 + $0x4a] sm:$0xff]
      %v3767 = vld [vmem:[%s290 + $0x52] sm:$0xff]
      %v3768 = vld [vmem:[%s290 + $0x62] sm:$0xff]
      %v3769 = vld [vmem:[%s290 + $0x6a] sm:$0xff]
      %v3770 = vld [vmem:[%s290 + $0x7a] sm:$0xff]
      %v3771 = vld [vmem:[%s290 + $0x82] sm:$0xff]
      %v3772 = vld [vmem:[%s290 + $0x92] sm:$0xff]
      %v3773 = vld [vmem:[%s290 + $0x9a] sm:$0xff]
      %v3774 = vld [vmem:[%s290 + $0xaa] sm:$0xff]
      %v3775 = vld [vmem:[%s290 + $0xb2] sm:$0xff]
      %v3776 = vld [vmem:[%s290 + $0xc2] sm:$0xff]
      %v3777 = vld [vmem:[%s290 + $0xca] sm:$0xff]
      %v3778 = vld [vmem:[%s290 + $0xda] sm:$0xff]
      %v3779 = vld [vmem:[%s290 + $0xe2] sm:$0xff]
      %v3780 = vld [vmem:[%s290 + $0xf2] sm:$0xff]
      %v3781 = vld [vmem:[%s290 + $0xfa] sm:$0xff]
      %v3782 = vld [vmem:[%s290 + $0x10a] sm:$0xff]
      %v3783 = vld [vmem:[%s290 + $0x112] sm:$0xff]
      %v3784 = vld [vmem:[%s290 + $0x122] sm:$0xff]
      %v3785 = vld [vmem:[%s290 + $0x12a] sm:$0xff]
      %v3786 = vld [vmem:[%s290 + $0x13a] sm:$0xff]
      %v3787 = vld [vmem:[%s290 + $0x142] sm:$0xff]
      %v3788 = vld [vmem:[%s290 + $0x152] sm:$0xff]
      %v3789 = vld [vmem:[%s290 + $0x15a] sm:$0xff]
      %v3790 = vld [vmem:[%s290 + $0x16a] sm:$0xff]
      %v3791 = vld [vmem:[%s290 + $0x172] sm:$0xff]
      %v3792 = vpack.c.bf16 %v3760, %v3760
      %v3793 = vpack.c.bf16 %v3761, %v3761
      %v3794 = vpack.c.bf16 %v3762, %v3762
      %v3795 = vpack.c.bf16 %v3763, %v3763
      %v3796 = vpack.c.bf16 %v3764, %v3764
      %v3797 = vpack.c.bf16 %v3765, %v3765
      %v3798 = vpack.c.bf16 %v3766, %v3766
      %v3799 = vpack.c.bf16 %v3767, %v3767
      %v3800 = vpack.c.bf16 %v3768, %v3768
      %v3801 = vpack.c.bf16 %v3769, %v3769
      %v3802 = vpack.c.bf16 %v3770, %v3770
      %v3803 = vpack.c.bf16 %v3771, %v3771
      %v3804 = vpack.c.bf16 %v3772, %v3772
      %v3805 = vpack.c.bf16 %v3773, %v3773
      %v3806 = vpack.c.bf16 %v3774, %v3774
      %v3807 = vpack.c.bf16 %v3775, %v3775
      %v3808 = vpack.c.bf16 %v3776, %v3776
      %v3809 = vpack.c.bf16 %v3777, %v3777
      %v3810 = vpack.c.bf16 %v3778, %v3778
      %v3811 = vpack.c.bf16 %v3779, %v3779
      %v3812 = vpack.c.bf16 %v3780, %v3780
      %v3813 = vpack.c.bf16 %v3781, %v3781
      %v3814 = vpack.c.bf16 %v3782, %v3782
      %v3815 = vpack.c.bf16 %v3783, %v3783
      %v3816 = vpack.c.bf16 %v3784, %v3784
      %v3817 = vpack.c.bf16 %v3785, %v3785
      %v3818 = vpack.c.bf16 %v3786, %v3786
      %v3819 = vpack.c.bf16 %v3787, %v3787
      %v3820 = vpack.c.bf16 %v3788, %v3788
      %v3821 = vpack.c.bf16 %v3789, %v3789
      %v3822 = vpack.c.bf16 %v3790, %v3790
      %v3823 = vpack.c.bf16 %v3791, %v3791
      %v3856 = vunpack.c.l.b16 %v3280
      %v3857 = vunpack.c.l.b16 %v3281
      %v3858 = vunpack.c.l.b16 %v3282
      %v3859 = vunpack.c.l.b16 %v3283
      %v3860 = vunpack.c.l.b16 %v3284
      %v3861 = vunpack.c.l.b16 %v3285
      %v3862 = vunpack.c.l.b16 %v3286
      %v3863 = vunpack.c.l.b16 %v3287
      %v3864 = vunpack.c.l.b16 %v3288
      %v3865 = vunpack.c.l.b16 %v3289
      %v3866 = vunpack.c.l.b16 %v3290
      %v3867 = vunpack.c.l.b16 %v3291
      %v3868 = vunpack.c.l.b16 %v3292
      %v3869 = vunpack.c.l.b16 %v3293
      %v3870 = vunpack.c.l.b16 %v3294
      %v3871 = vunpack.c.l.b16 %v3295
      %v3872 = vunpack.c.l.b16 %v3296
      %v3873 = vunpack.c.l.b16 %v3297
      %v3874 = vunpack.c.l.b16 %v3298
      %v3875 = vunpack.c.l.b16 %v3299
      %v3876 = vunpack.c.l.b16 %v3300
      %v3877 = vunpack.c.l.b16 %v3301
      %v3878 = vunpack.c.l.b16 %v3302
      %v3879 = vunpack.c.l.b16 %v3303
      %v3880 = vunpack.c.l.b16 %v3304
      %v3881 = vunpack.c.l.b16 %v3305
      %v3882 = vunpack.c.l.b16 %v3306
      %v3883 = vunpack.c.l.b16 %v3307
      %v3884 = vunpack.c.l.b16 %v3308
      %v3885 = vunpack.c.l.b16 %v3309
      %v3886 = vunpack.c.l.b16 %v3310
      %v3887 = vunpack.c.l.b16 %v3311
      %v3888 = vpack.c.b16 %v3857, %v3856
      %v3889 = vpack.c.b16 %v3859, %v3858
      %v3890 = vpack.c.b16 %v3861, %v3860
      %v3891 = vpack.c.b16 %v3863, %v3862
      %v3892 = vpack.c.b16 %v3865, %v3864
      %v3893 = vpack.c.b16 %v3867, %v3866
      %v3894 = vpack.c.b16 %v3869, %v3868
      %v3895 = vpack.c.b16 %v3871, %v3870
      %v3896 = vpack.c.b16 %v3873, %v3872
      %v3897 = vpack.c.b16 %v3875, %v3874
      %v3898 = vpack.c.b16 %v3877, %v3876
      %v3899 = vpack.c.b16 %v3879, %v3878
      %v3900 = vpack.c.b16 %v3881, %v3880
      %v3901 = vpack.c.b16 %v3883, %v3882
      %v3902 = vpack.c.b16 %v3885, %v3884
      %v3903 = vpack.c.b16 %v3887, %v3886
      %v3952 = vunpack.c.l.b16 %v3344
      %v3953 = vunpack.c.l.b16 %v3345
      %v3954 = vunpack.c.l.b16 %v3346
      %v3955 = vunpack.c.l.b16 %v3347
      %v3956 = vunpack.c.l.b16 %v3348
      %v3957 = vunpack.c.l.b16 %v3349
      %v3958 = vunpack.c.l.b16 %v3350
      %v3959 = vunpack.c.l.b16 %v3351
      %v3960 = vunpack.c.l.b16 %v3352
      %v3961 = vunpack.c.l.b16 %v3353
      %v3962 = vunpack.c.l.b16 %v3354
      %v3963 = vunpack.c.l.b16 %v3355
      %v3964 = vunpack.c.l.b16 %v3356
      %v3965 = vunpack.c.l.b16 %v3357
      %v3966 = vunpack.c.l.b16 %v3358
      %v3967 = vunpack.c.l.b16 %v3359
      %v3968 = vunpack.c.l.b16 %v3360
      %v3969 = vunpack.c.l.b16 %v3361
      %v3970 = vunpack.c.l.b16 %v3362
      %v3971 = vunpack.c.l.b16 %v3363
      %v3972 = vunpack.c.l.b16 %v3364
      %v3973 = vunpack.c.l.b16 %v3365
      %v3974 = vunpack.c.l.b16 %v3366
      %v3975 = vunpack.c.l.b16 %v3367
      %v3976 = vunpack.c.l.b16 %v3368
      %v3977 = vunpack.c.l.b16 %v3369
      %v3978 = vunpack.c.l.b16 %v3370
      %v3979 = vunpack.c.l.b16 %v3371
      %v3980 = vunpack.c.l.b16 %v3372
      %v3981 = vunpack.c.l.b16 %v3373
      %v3982 = vunpack.c.l.b16 %v3374
      %v3983 = vunpack.c.l.b16 %v3375
      %v3984 = vpack.c.b16 %v3953, %v3952
      %v3985 = vpack.c.b16 %v3955, %v3954
      %v3986 = vpack.c.b16 %v3957, %v3956
      %v3987 = vpack.c.b16 %v3959, %v3958
      %v3988 = vpack.c.b16 %v3961, %v3960
      %v3989 = vpack.c.b16 %v3963, %v3962
      %v3990 = vpack.c.b16 %v3965, %v3964
      %v3991 = vpack.c.b16 %v3967, %v3966
      %v3992 = vpack.c.b16 %v3969, %v3968
      %v3993 = vpack.c.b16 %v3971, %v3970
      %v3994 = vpack.c.b16 %v3973, %v3972
      %v3995 = vpack.c.b16 %v3975, %v3974
      %v3996 = vpack.c.b16 %v3977, %v3976
      %v3997 = vpack.c.b16 %v3979, %v3978
      %v3998 = vpack.c.b16 %v3981, %v3980
      %v3999 = vpack.c.b16 %v3983, %v3982
      %v4048 = vunpack.c.l.b16 %v3408
      %v4049 = vunpack.c.l.b16 %v3409
      %v4050 = vunpack.c.l.b16 %v3410
      %v4051 = vunpack.c.l.b16 %v3411
      %v4052 = vunpack.c.l.b16 %v3412
      %v4053 = vunpack.c.l.b16 %v3413
      %v4054 = vunpack.c.l.b16 %v3414
      %v4055 = vunpack.c.l.b16 %v3415
      %v4056 = vunpack.c.l.b16 %v3416
      %v4057 = vunpack.c.l.b16 %v3417
      %v4058 = vunpack.c.l.b16 %v3418
      %v4059 = vunpack.c.l.b16 %v3419
      %v4060 = vunpack.c.l.b16 %v3420
      %v4061 = vunpack.c.l.b16 %v3421
      %v4062 = vunpack.c.l.b16 %v3422
      %v4063 = vunpack.c.l.b16 %v3423
      %v4064 = vunpack.c.l.b16 %v3424
      %v4065 = vunpack.c.l.b16 %v3425
      %v4066 = vunpack.c.l.b16 %v3426
      %v4067 = vunpack.c.l.b16 %v3427
      %v4068 = vunpack.c.l.b16 %v3428
      %v4069 = vunpack.c.l.b16 %v3429
      %v4070 = vunpack.c.l.b16 %v3430
      %v4071 = vunpack.c.l.b16 %v3431
      %v4072 = vunpack.c.l.b16 %v3432
      %v4073 = vunpack.c.l.b16 %v3433
      %v4074 = vunpack.c.l.b16 %v3434
      %v4075 = vunpack.c.l.b16 %v3435
      %v4076 = vunpack.c.l.b16 %v3436
      %v4077 = vunpack.c.l.b16 %v3437
      %v4078 = vunpack.c.l.b16 %v3438
      %v4079 = vunpack.c.l.b16 %v3439
      %v4080 = vpack.c.b16 %v4049, %v4048
      %v4081 = vpack.c.b16 %v4051, %v4050
      %v4082 = vpack.c.b16 %v4053, %v4052
      %v4083 = vpack.c.b16 %v4055, %v4054
      %v4084 = vpack.c.b16 %v4057, %v4056
      %v4085 = vpack.c.b16 %v4059, %v4058
      %v4086 = vpack.c.b16 %v4061, %v4060
      %v4087 = vpack.c.b16 %v4063, %v4062
      %v4088 = vpack.c.b16 %v4065, %v4064
      %v4089 = vpack.c.b16 %v4067, %v4066
      %v4090 = vpack.c.b16 %v4069, %v4068
      %v4091 = vpack.c.b16 %v4071, %v4070
      %v4092 = vpack.c.b16 %v4073, %v4072
      %v4093 = vpack.c.b16 %v4075, %v4074
      %v4094 = vpack.c.b16 %v4077, %v4076
      %v4095 = vpack.c.b16 %v4079, %v4078
      %v4144 = vunpack.c.l.b16 %v3472
      %v4145 = vunpack.c.l.b16 %v3473
      %v4146 = vunpack.c.l.b16 %v3474
      %v4147 = vunpack.c.l.b16 %v3475
      %v4148 = vunpack.c.l.b16 %v3476
      %v4149 = vunpack.c.l.b16 %v3477
      %v4150 = vunpack.c.l.b16 %v3478
      %v4151 = vunpack.c.l.b16 %v3479
      %v4152 = vunpack.c.l.b16 %v3480
      %v4153 = vunpack.c.l.b16 %v3481
      %v4154 = vunpack.c.l.b16 %v3482
      %v4155 = vunpack.c.l.b16 %v3483
      %v4156 = vunpack.c.l.b16 %v3484
      %v4157 = vunpack.c.l.b16 %v3485
      %v4158 = vunpack.c.l.b16 %v3486
      %v4159 = vunpack.c.l.b16 %v3487
      %v4160 = vunpack.c.l.b16 %v3488
      %v4161 = vunpack.c.l.b16 %v3489
      %v4162 = vunpack.c.l.b16 %v3490
      %v4163 = vunpack.c.l.b16 %v3491
      %v4164 = vunpack.c.l.b16 %v3492
      %v4165 = vunpack.c.l.b16 %v3493
      %v4166 = vunpack.c.l.b16 %v3494
      %v4167 = vunpack.c.l.b16 %v3495
      %v4168 = vunpack.c.l.b16 %v3496
      %v4169 = vunpack.c.l.b16 %v3497
      %v4170 = vunpack.c.l.b16 %v3498
      %v4171 = vunpack.c.l.b16 %v3499
      %v4172 = vunpack.c.l.b16 %v3500
      %v4173 = vunpack.c.l.b16 %v3501
      %v4174 = vunpack.c.l.b16 %v3502
      %v4175 = vunpack.c.l.b16 %v3503
      %v4176 = vpack.c.b16 %v4145, %v4144
      %v4177 = vpack.c.b16 %v4147, %v4146
      %v4178 = vpack.c.b16 %v4149, %v4148
      %v4179 = vpack.c.b16 %v4151, %v4150
      %v4180 = vpack.c.b16 %v4153, %v4152
      %v4181 = vpack.c.b16 %v4155, %v4154
      %v4182 = vpack.c.b16 %v4157, %v4156
      %v4183 = vpack.c.b16 %v4159, %v4158
      %v4184 = vpack.c.b16 %v4161, %v4160
      %v4185 = vpack.c.b16 %v4163, %v4162
      %v4186 = vpack.c.b16 %v4165, %v4164
      %v4187 = vpack.c.b16 %v4167, %v4166
      %v4188 = vpack.c.b16 %v4169, %v4168
      %v4189 = vpack.c.b16 %v4171, %v4170
      %v4190 = vpack.c.b16 %v4173, %v4172
      %v4191 = vpack.c.b16 %v4175, %v4174
      %v4240 = vunpack.c.l.b16 %v3536
      %v4241 = vunpack.c.l.b16 %v3537
      %v4242 = vunpack.c.l.b16 %v3538
      %v4243 = vunpack.c.l.b16 %v3539
      %v4244 = vunpack.c.l.b16 %v3540
      %v4245 = vunpack.c.l.b16 %v3541
      %v4246 = vunpack.c.l.b16 %v3542
      %v4247 = vunpack.c.l.b16 %v3543
      %v4248 = vunpack.c.l.b16 %v3544
      %v4249 = vunpack.c.l.b16 %v3545
      %v4250 = vunpack.c.l.b16 %v3546
      %v4251 = vunpack.c.l.b16 %v3547
      %v4252 = vunpack.c.l.b16 %v3548
      %v4253 = vunpack.c.l.b16 %v3549
      %v4254 = vunpack.c.l.b16 %v3550
      %v4255 = vunpack.c.l.b16 %v3551
      %v4256 = vunpack.c.l.b16 %v3552
      %v4257 = vunpack.c.l.b16 %v3553
      %v4258 = vunpack.c.l.b16 %v3554
      %v4259 = vunpack.c.l.b16 %v3555
      %v4260 = vunpack.c.l.b16 %v3556
      %v4261 = vunpack.c.l.b16 %v3557
      %v4262 = vunpack.c.l.b16 %v3558
      %v4263 = vunpack.c.l.b16 %v3559
      %v4264 = vunpack.c.l.b16 %v3560
      %v4265 = vunpack.c.l.b16 %v3561
      %v4266 = vunpack.c.l.b16 %v3562
      %v4267 = vunpack.c.l.b16 %v3563
      %v4268 = vunpack.c.l.b16 %v3564
      %v4269 = vunpack.c.l.b16 %v3565
      %v4270 = vunpack.c.l.b16 %v3566
      %v4271 = vunpack.c.l.b16 %v3567
      %v4272 = vpack.c.b16 %v4241, %v4240
      %v4273 = vpack.c.b16 %v4243, %v4242
      %v4274 = vpack.c.b16 %v4245, %v4244
      %v4275 = vpack.c.b16 %v4247, %v4246
      %v4276 = vpack.c.b16 %v4249, %v4248
      %v4277 = vpack.c.b16 %v4251, %v4250
      %v4278 = vpack.c.b16 %v4253, %v4252
      %v4279 = vpack.c.b16 %v4255, %v4254
      %v4280 = vpack.c.b16 %v4257, %v4256
      %v4281 = vpack.c.b16 %v4259, %v4258
      %v4282 = vpack.c.b16 %v4261, %v4260
      %v4283 = vpack.c.b16 %v4263, %v4262
      %v4284 = vpack.c.b16 %v4265, %v4264
      %v4285 = vpack.c.b16 %v4267, %v4266
      %v4286 = vpack.c.b16 %v4269, %v4268
      %v4287 = vpack.c.b16 %v4271, %v4270
      %v4336 = vunpack.c.l.b16 %v3600
      %v4337 = vunpack.c.l.b16 %v3601
      %v4338 = vunpack.c.l.b16 %v3602
      %v4339 = vunpack.c.l.b16 %v3603
      %v4340 = vunpack.c.l.b16 %v3604
      %v4341 = vunpack.c.l.b16 %v3605
      %v4342 = vunpack.c.l.b16 %v3606
      %v4343 = vunpack.c.l.b16 %v3607
      %v4344 = vunpack.c.l.b16 %v3608
      %v4345 = vunpack.c.l.b16 %v3609
      %v4346 = vunpack.c.l.b16 %v3610
      %v4347 = vunpack.c.l.b16 %v3611
      %v4348 = vunpack.c.l.b16 %v3612
      %v4349 = vunpack.c.l.b16 %v3613
      %v4350 = vunpack.c.l.b16 %v3614
      %v4351 = vunpack.c.l.b16 %v3615
      %v4352 = vunpack.c.l.b16 %v3616
      %v4353 = vunpack.c.l.b16 %v3617
      %v4354 = vunpack.c.l.b16 %v3618
      %v4355 = vunpack.c.l.b16 %v3619
      %v4356 = vunpack.c.l.b16 %v3620
      %v4357 = vunpack.c.l.b16 %v3621
      %v4358 = vunpack.c.l.b16 %v3622
      %v4359 = vunpack.c.l.b16 %v3623
      %v4360 = vunpack.c.l.b16 %v3624
      %v4361 = vunpack.c.l.b16 %v3625
      %v4362 = vunpack.c.l.b16 %v3626
      %v4363 = vunpack.c.l.b16 %v3627
      %v4364 = vunpack.c.l.b16 %v3628
      %v4365 = vunpack.c.l.b16 %v3629
      %v4366 = vunpack.c.l.b16 %v3630
      %v4367 = vunpack.c.l.b16 %v3631
      %v4368 = vpack.c.b16 %v4337, %v4336
      %v4369 = vpack.c.b16 %v4339, %v4338
      %v4370 = vpack.c.b16 %v4341, %v4340
      %v4371 = vpack.c.b16 %v4343, %v4342
      %v4372 = vpack.c.b16 %v4345, %v4344
      %v4373 = vpack.c.b16 %v4347, %v4346
      %v4374 = vpack.c.b16 %v4349, %v4348
      %v4375 = vpack.c.b16 %v4351, %v4350
      %v4376 = vpack.c.b16 %v4353, %v4352
      %v4377 = vpack.c.b16 %v4355, %v4354
      %v4378 = vpack.c.b16 %v4357, %v4356
      %v4379 = vpack.c.b16 %v4359, %v4358
      %v4380 = vpack.c.b16 %v4361, %v4360
      %v4381 = vpack.c.b16 %v4363, %v4362
      %v4382 = vpack.c.b16 %v4365, %v4364
      %v4383 = vpack.c.b16 %v4367, %v4366
      %v4432 = vunpack.c.l.b16 %v3664
      %v4433 = vunpack.c.l.b16 %v3665
      %v4434 = vunpack.c.l.b16 %v3666
      %v4435 = vunpack.c.l.b16 %v3667
      %v4436 = vunpack.c.l.b16 %v3668
      %v4437 = vunpack.c.l.b16 %v3669
      %v4438 = vunpack.c.l.b16 %v3670
      %v4439 = vunpack.c.l.b16 %v3671
      %v4440 = vunpack.c.l.b16 %v3672
      %v4441 = vunpack.c.l.b16 %v3673
      %v4442 = vunpack.c.l.b16 %v3674
      %v4443 = vunpack.c.l.b16 %v3675
      %v4444 = vunpack.c.l.b16 %v3676
      %v4445 = vunpack.c.l.b16 %v3677
      %v4446 = vunpack.c.l.b16 %v3678
      %v4447 = vunpack.c.l.b16 %v3679
      %v4448 = vunpack.c.l.b16 %v3680
      %v4449 = vunpack.c.l.b16 %v3681
      %v4450 = vunpack.c.l.b16 %v3682
      %v4451 = vunpack.c.l.b16 %v3683
      %v4452 = vunpack.c.l.b16 %v3684
      %v4453 = vunpack.c.l.b16 %v3685
      %v4454 = vunpack.c.l.b16 %v3686
      %v4455 = vunpack.c.l.b16 %v3687
      %v4456 = vunpack.c.l.b16 %v3688
      %v4457 = vunpack.c.l.b16 %v3689
      %v4458 = vunpack.c.l.b16 %v3690
      %v4459 = vunpack.c.l.b16 %v3691
      %v4460 = vunpack.c.l.b16 %v3692
      %v4461 = vunpack.c.l.b16 %v3693
      %v4462 = vunpack.c.l.b16 %v3694
      %v4463 = vunpack.c.l.b16 %v3695
      %v4464 = vpack.c.b16 %v4433, %v4432
      %v4465 = vpack.c.b16 %v4435, %v4434
      %v4466 = vpack.c.b16 %v4437, %v4436
      %v4467 = vpack.c.b16 %v4439, %v4438
      %v4468 = vpack.c.b16 %v4441, %v4440
      %v4469 = vpack.c.b16 %v4443, %v4442
      %v4470 = vpack.c.b16 %v4445, %v4444
      %v4471 = vpack.c.b16 %v4447, %v4446
      %v4472 = vpack.c.b16 %v4449, %v4448
      %v4473 = vpack.c.b16 %v4451, %v4450
      %v4474 = vpack.c.b16 %v4453, %v4452
      %v4475 = vpack.c.b16 %v4455, %v4454
      %v4476 = vpack.c.b16 %v4457, %v4456
      %v4477 = vpack.c.b16 %v4459, %v4458
      %v4478 = vpack.c.b16 %v4461, %v4460
      %v4479 = vpack.c.b16 %v4463, %v4462
      %v4528 = vunpack.c.l.b16 %v3728
      %v4529 = vunpack.c.l.b16 %v3729
      %v4530 = vunpack.c.l.b16 %v3730
      %v4531 = vunpack.c.l.b16 %v3731
      %v4532 = vunpack.c.l.b16 %v3732
      %v4533 = vunpack.c.l.b16 %v3733
      %v4534 = vunpack.c.l.b16 %v3734
      %v4535 = vunpack.c.l.b16 %v3735
      %v4536 = vunpack.c.l.b16 %v3736
      %v4537 = vunpack.c.l.b16 %v3737
      %v4538 = vunpack.c.l.b16 %v3738
      %v4539 = vunpack.c.l.b16 %v3739
      %v4540 = vunpack.c.l.b16 %v3740
      %v4541 = vunpack.c.l.b16 %v3741
      %v4542 = vunpack.c.l.b16 %v3742
      %v4543 = vunpack.c.l.b16 %v3743
      %v4544 = vunpack.c.l.b16 %v3744
      %v4545 = vunpack.c.l.b16 %v3745
      %v4546 = vunpack.c.l.b16 %v3746
      %v4547 = vunpack.c.l.b16 %v3747
      %v4548 = vunpack.c.l.b16 %v3748
      %v4549 = vunpack.c.l.b16 %v3749
      %v4550 = vunpack.c.l.b16 %v3750
      %v4551 = vunpack.c.l.b16 %v3751
      %v4552 = vunpack.c.l.b16 %v3752
      %v4553 = vunpack.c.l.b16 %v3753
      %v4554 = vunpack.c.l.b16 %v3754
      %v4555 = vunpack.c.l.b16 %v3755
      %v4556 = vunpack.c.l.b16 %v3756
      %v4557 = vunpack.c.l.b16 %v3757
      %v4558 = vunpack.c.l.b16 %v3758
      %v4559 = vunpack.c.l.b16 %v3759
      %v4560 = vpack.c.b16 %v4529, %v4528
      %v4561 = vpack.c.b16 %v4531, %v4530
      %v4562 = vpack.c.b16 %v4533, %v4532
      %v4563 = vpack.c.b16 %v4535, %v4534
      %v4564 = vpack.c.b16 %v4537, %v4536
      %v4565 = vpack.c.b16 %v4539, %v4538
      %v4566 = vpack.c.b16 %v4541, %v4540
      %v4567 = vpack.c.b16 %v4543, %v4542
      %v4568 = vpack.c.b16 %v4545, %v4544
      %v4569 = vpack.c.b16 %v4547, %v4546
      %v4570 = vpack.c.b16 %v4549, %v4548
      %v4571 = vpack.c.b16 %v4551, %v4550
      %v4572 = vpack.c.b16 %v4553, %v4552
      %v4573 = vpack.c.b16 %v4555, %v4554
      %v4574 = vpack.c.b16 %v4557, %v4556
      %v4575 = vpack.c.b16 %v4559, %v4558
      %v4624 = vunpack.c.l.b16 %v3792
      %v4625 = vunpack.c.l.b16 %v3793
      %v4626 = vunpack.c.l.b16 %v3794
      %v4627 = vunpack.c.l.b16 %v3795
      %v4628 = vunpack.c.l.b16 %v3796
      %v4629 = vunpack.c.l.b16 %v3797
      %v4630 = vunpack.c.l.b16 %v3798
      %v4631 = vunpack.c.l.b16 %v3799
      %v4632 = vunpack.c.l.b16 %v3800
      %v4633 = vunpack.c.l.b16 %v3801
      %v4634 = vunpack.c.l.b16 %v3802
      %v4635 = vunpack.c.l.b16 %v3803
      %v4636 = vunpack.c.l.b16 %v3804
      %v4637 = vunpack.c.l.b16 %v3805
      %v4638 = vunpack.c.l.b16 %v3806
      %v4639 = vunpack.c.l.b16 %v3807
      %v4640 = vunpack.c.l.b16 %v3808
      %v4641 = vunpack.c.l.b16 %v3809
      %v4642 = vunpack.c.l.b16 %v3810
      %v4643 = vunpack.c.l.b16 %v3811
      %v4644 = vunpack.c.l.b16 %v3812
      %v4645 = vunpack.c.l.b16 %v3813
      %v4646 = vunpack.c.l.b16 %v3814
      %v4647 = vunpack.c.l.b16 %v3815
      %v4648 = vunpack.c.l.b16 %v3816
      %v4649 = vunpack.c.l.b16 %v3817
      %v4650 = vunpack.c.l.b16 %v3818
      %v4651 = vunpack.c.l.b16 %v3819
      %v4652 = vunpack.c.l.b16 %v3820
      %v4653 = vunpack.c.l.b16 %v3821
      %v4654 = vunpack.c.l.b16 %v3822
      %v4655 = vunpack.c.l.b16 %v3823
      %v4656 = vpack.c.b16 %v4625, %v4624
      %v4657 = vpack.c.b16 %v4627, %v4626
      %v4658 = vpack.c.b16 %v4629, %v4628
      %v4659 = vpack.c.b16 %v4631, %v4630
      %v4660 = vpack.c.b16 %v4633, %v4632
      %v4661 = vpack.c.b16 %v4635, %v4634
      %v4662 = vpack.c.b16 %v4637, %v4636
      %v4663 = vpack.c.b16 %v4639, %v4638
      %v4664 = vpack.c.b16 %v4641, %v4640
      %v4665 = vpack.c.b16 %v4643, %v4642
      %v4666 = vpack.c.b16 %v4645, %v4644
      %v4667 = vpack.c.b16 %v4647, %v4646
      %v4668 = vpack.c.b16 %v4649, %v4648
      %v4669 = vpack.c.b16 %v4651, %v4650
      %v4670 = vpack.c.b16 %v4653, %v4652
      %v4671 = vpack.c.b16 %v4655, %v4654
      %v4688 = vld [vmem:[%s3] sm:$0xf]
      %v4689 = vld [vmem:[%s3 + $0x4] sm:$0xf]
      %v4690 = vld [vmem:[%s3 + $0x8] sm:$0xf]
      %v4691 = vld [vmem:[%s3 + $0xc] sm:$0xf]
      %v4692 = vld [vmem:[%s3 + $0x10] sm:$0xf]
      %v4693 = vld [vmem:[%s3 + $0x14] sm:$0xf]
      %v4694 = vld [vmem:[%s3 + $0x18] sm:$0xf]
      %v4695 = vld [vmem:[%s3 + $0x1c] sm:$0xf]
      %v4696 = vld [vmem:[%s3 + $0x20] sm:$0xf]
      %v4697 = vld [vmem:[%s3 + $0x24] sm:$0xf]
      %v4698 = vld [vmem:[%s3 + $0x28] sm:$0xf]
      %v4699 = vld [vmem:[%s3 + $0x2c] sm:$0xf]
      %v4700 = vld [vmem:[%s3 + $0x30] sm:$0xf]
      %v4701 = vld [vmem:[%s3 + $0x34] sm:$0xf]
      %v4702 = vld [vmem:[%s3 + $0x38] sm:$0xf]
      %v4703 = vld [vmem:[%s3 + $0x3c] sm:$0xf]
      %v4704 = vld [vmem:[%s3 + $0x40] sm:$0xf]
      %v4705 = vld [vmem:[%s3 + $0x44] sm:$0xf]
      %v4706 = vld [vmem:[%s3 + $0x48] sm:$0xf]
      %v4707 = vld [vmem:[%s3 + $0x4c] sm:$0xf]
      %v4708 = vld [vmem:[%s3 + $0x50] sm:$0xf]
      %v4709 = vld [vmem:[%s3 + $0x54] sm:$0xf]
      %v4710 = vld [vmem:[%s3 + $0x58] sm:$0xf]
      %v4711 = vld [vmem:[%s3 + $0x5c] sm:$0xf]
      %v4712 = vld [vmem:[%s3 + $0x60] sm:$0xf]
      %v4713 = vld [vmem:[%s3 + $0x64] sm:$0xf]
      %v4714 = vld [vmem:[%s3 + $0x68] sm:$0xf]
      %v4715 = vld [vmem:[%s3 + $0x6c] sm:$0xf]
      %v4716 = vld [vmem:[%s3 + $0x70] sm:$0xf]
      %v4717 = vld [vmem:[%s3 + $0x74] sm:$0xf]
      %v4718 = vld [vmem:[%s3 + $0x78] sm:$0xf]
      %v4719 = vld [vmem:[%s3 + $0x7c] sm:$0xf]
      %v4720 = vld [vmem:[%s3 + $0x80] sm:$0xf]
      %v4721 = vld [vmem:[%s3 + $0x84] sm:$0xf]
      %v4722 = vld [vmem:[%s3 + $0x88] sm:$0xf]
      %v4723 = vld [vmem:[%s3 + $0x8c] sm:$0xf]
      %v4724 = vld [vmem:[%s3 + $0x90] sm:$0xf]
      %v4725 = vld [vmem:[%s3 + $0x94] sm:$0xf]
      %v4726 = vld [vmem:[%s3 + $0x98] sm:$0xf]
      %v4727 = vld [vmem:[%s3 + $0x9c] sm:$0xf]
      %v4728 = vld [vmem:[%s3 + $0xa0] sm:$0xf]
      %v4729 = vld [vmem:[%s3 + $0xa4] sm:$0xf]
      %v4730 = vld [vmem:[%s3 + $0xa8] sm:$0xf]
      %v4731 = vld [vmem:[%s3 + $0xac] sm:$0xf]
      %v4732 = vld [vmem:[%s3 + $0xb0] sm:$0xf]
      %v4733 = vld [vmem:[%s3 + $0xb4] sm:$0xf]
      %v4734 = vld [vmem:[%s3 + $0xb8] sm:$0xf]
      %v4735 = vld [vmem:[%s3 + $0xbc] sm:$0xf]
      %v4736 = vld [vmem:[%s3 + $0xc0] sm:$0xf]
      %v4737 = vld [vmem:[%s3 + $0xc4] sm:$0xf]
      %v4738 = vld [vmem:[%s3 + $0xc8] sm:$0xf]
      %v4739 = vld [vmem:[%s3 + $0xcc] sm:$0xf]
      %v4740 = vld [vmem:[%s3 + $0xd0] sm:$0xf]
      %v4741 = vld [vmem:[%s3 + $0xd4] sm:$0xf]
      %v4742 = vld [vmem:[%s3 + $0xd8] sm:$0xf]
      %v4743 = vld [vmem:[%s3 + $0xdc] sm:$0xf]
      %v4744 = vld [vmem:[%s3 + $0xe0] sm:$0xf]
      %v4745 = vld [vmem:[%s3 + $0xe4] sm:$0xf]
      %v4746 = vld [vmem:[%s3 + $0xe8] sm:$0xf]
      %v4747 = vld [vmem:[%s3 + $0xec] sm:$0xf]
      %v4748 = vld [vmem:[%s3 + $0xf0] sm:$0xf]
      %v4749 = vld [vmem:[%s3 + $0xf4] sm:$0xf]
      %v4750 = vld [vmem:[%s3 + $0xf8] sm:$0xf]
      %v4751 = vld [vmem:[%s3 + $0xfc] sm:$0xf]
      %v4752 = vld [vmem:[%s3 + $0x100] sm:$0xf]
      %v4753 = vld [vmem:[%s3 + $0x104] sm:$0xf]
      %v4754 = vld [vmem:[%s3 + $0x108] sm:$0xf]
      %v4755 = vld [vmem:[%s3 + $0x10c] sm:$0xf]
      %v4756 = vld [vmem:[%s3 + $0x110] sm:$0xf]
      %v4757 = vld [vmem:[%s3 + $0x114] sm:$0xf]
      %v4758 = vld [vmem:[%s3 + $0x118] sm:$0xf]
      %v4759 = vld [vmem:[%s3 + $0x11c] sm:$0xf]
      %v4760 = vld [vmem:[%s3 + $0x120] sm:$0xf]
      %v4761 = vld [vmem:[%s3 + $0x124] sm:$0xf]
      %v4762 = vld [vmem:[%s3 + $0x128] sm:$0xf]
      %v4763 = vld [vmem:[%s3 + $0x12c] sm:$0xf]
      %v4764 = vld [vmem:[%s3 + $0x130] sm:$0xf]
      %v4765 = vld [vmem:[%s3 + $0x134] sm:$0xf]
      %v4766 = vld [vmem:[%s3 + $0x138] sm:$0xf]
      %v4767 = vld [vmem:[%s3 + $0x13c] sm:$0xf]
      %v4768 = vld [vmem:[%s3 + $0x140] sm:$0xf]
      %v4769 = vld [vmem:[%s3 + $0x144] sm:$0xf]
      %v4770 = vld [vmem:[%s3 + $0x148] sm:$0xf]
      %v4771 = vld [vmem:[%s3 + $0x14c] sm:$0xf]
      %v4772 = vld [vmem:[%s3 + $0x150] sm:$0xf]
      %v4773 = vld [vmem:[%s3 + $0x154] sm:$0xf]
      %v4774 = vld [vmem:[%s3 + $0x158] sm:$0xf]
      %v4775 = vld [vmem:[%s3 + $0x15c] sm:$0xf]
      %v4776 = vld [vmem:[%s3 + $0x160] sm:$0xf]
      %v4777 = vld [vmem:[%s3 + $0x164] sm:$0xf]
      %v4778 = vld [vmem:[%s3 + $0x168] sm:$0xf]
      %v4779 = vld [vmem:[%s3 + $0x16c] sm:$0xf]
      %v4780 = vld [vmem:[%s3 + $0x170] sm:$0xf]
      %v4781 = vld [vmem:[%s3 + $0x174] sm:$0xf]
      %v4782 = vld [vmem:[%s3 + $0x178] sm:$0xf]
      %v4783 = vld [vmem:[%s3 + $0x17c] sm:$0xf]
      %v4784 = vld [vmem:[%s3 + $0x180] sm:$0xf]
      %v4785 = vld [vmem:[%s3 + $0x184] sm:$0xf]
      %v4786 = vld [vmem:[%s3 + $0x188] sm:$0xf]
      %v4787 = vld [vmem:[%s3 + $0x18c] sm:$0xf]
      %v4788 = vld [vmem:[%s3 + $0x190] sm:$0xf]
      %v4789 = vld [vmem:[%s3 + $0x194] sm:$0xf]
      %v4790 = vld [vmem:[%s3 + $0x198] sm:$0xf]
      %v4791 = vld [vmem:[%s3 + $0x19c] sm:$0xf]
      %v4792 = vld [vmem:[%s3 + $0x1a0] sm:$0xf]
      %v4793 = vld [vmem:[%s3 + $0x1a4] sm:$0xf]
      %v4794 = vld [vmem:[%s3 + $0x1a8] sm:$0xf]
      %v4795 = vld [vmem:[%s3 + $0x1ac] sm:$0xf]
      %v4796 = vld [vmem:[%s3 + $0x1b0] sm:$0xf]
      %v4797 = vld [vmem:[%s3 + $0x1b4] sm:$0xf]
      %v4798 = vld [vmem:[%s3 + $0x1b8] sm:$0xf]
      %v4799 = vld [vmem:[%s3 + $0x1bc] sm:$0xf]
      %v4800 = vld [vmem:[%s3 + $0x1c0] sm:$0xf]
      %v4801 = vld [vmem:[%s3 + $0x1c4] sm:$0xf]
      %v4802 = vld [vmem:[%s3 + $0x1c8] sm:$0xf]
      %v4803 = vld [vmem:[%s3 + $0x1cc] sm:$0xf]
      %v4804 = vld [vmem:[%s3 + $0x1d0] sm:$0xf]
      %v4805 = vld [vmem:[%s3 + $0x1d4] sm:$0xf]
      %v4806 = vld [vmem:[%s3 + $0x1d8] sm:$0xf]
      %v4807 = vld [vmem:[%s3 + $0x1dc] sm:$0xf]
      %v4808 = vld [vmem:[%s3 + $0x1e0] sm:$0xf]
      %v4809 = vld [vmem:[%s3 + $0x1e4] sm:$0xf]
      %v4810 = vld [vmem:[%s3 + $0x1e8] sm:$0xf]
      %v4811 = vld [vmem:[%s3 + $0x1ec] sm:$0xf]
      %v4812 = vld [vmem:[%s3 + $0x1f0] sm:$0xf]
      %v4813 = vld [vmem:[%s3 + $0x1f4] sm:$0xf]
      %v4814 = vld [vmem:[%s3 + $0x1f8] sm:$0xf]
      %v4815 = vld [vmem:[%s3 + $0x1fc] sm:$0xf]
      %v4816 = vld [vmem:[%s3 + $0x200] sm:$0xf]
      %v4817 = vld [vmem:[%s3 + $0x204] sm:$0xf]
      %v4818 = vld [vmem:[%s3 + $0x208] sm:$0xf]
      %v4819 = vld [vmem:[%s3 + $0x20c] sm:$0xf]
      %v4820 = vld [vmem:[%s3 + $0x210] sm:$0xf]
      %v4821 = vld [vmem:[%s3 + $0x214] sm:$0xf]
      %v4822 = vld [vmem:[%s3 + $0x218] sm:$0xf]
      %v4823 = vld [vmem:[%s3 + $0x21c] sm:$0xf]
      %v4824 = vld [vmem:[%s3 + $0x220] sm:$0xf]
      %v4825 = vld [vmem:[%s3 + $0x224] sm:$0xf]
      %v4826 = vld [vmem:[%s3 + $0x228] sm:$0xf]
      %v4827 = vld [vmem:[%s3 + $0x22c] sm:$0xf]
      %v4828 = vld [vmem:[%s3 + $0x230] sm:$0xf]
      %v4829 = vld [vmem:[%s3 + $0x234] sm:$0xf]
      %v4830 = vld [vmem:[%s3 + $0x238] sm:$0xf]
      %v4831 = vld [vmem:[%s3 + $0x23c] sm:$0xf]
      %v4832 = vld [vmem:[%s4] sm:$0x1]
      %v4834 = vperm.slane %v4832, 0
      %v4980 = vunpack.c.l.b16 %v4688
      %v4981 = vunpack.c.l.b16 %v4689
      %v4982 = vunpack.c.l.b16 %v4690
      %v4983 = vunpack.c.l.b16 %v4691
      %v4984 = vunpack.c.l.b16 %v4692
      %v4985 = vunpack.c.l.b16 %v4693
      %v4986 = vunpack.c.l.b16 %v4694
      %v4987 = vunpack.c.l.b16 %v4695
      %v4988 = vunpack.c.l.b16 %v4696
      %v4989 = vunpack.c.l.b16 %v4697
      %v4990 = vunpack.c.l.b16 %v4698
      %v4991 = vunpack.c.l.b16 %v4699
      %v4992 = vunpack.c.l.b16 %v4700
      %v4993 = vunpack.c.l.b16 %v4701
      %v4994 = vunpack.c.l.b16 %v4702
      %v4995 = vunpack.c.l.b16 %v4703
      %v4996 = vunpack.c.l.b16 %v4704
      %v4997 = vunpack.c.l.b16 %v4705
      %v4998 = vunpack.c.l.b16 %v4706
      %v4999 = vunpack.c.l.b16 %v4707
      %v5000 = vunpack.c.l.b16 %v4708
      %v5001 = vunpack.c.l.b16 %v4709
      %v5002 = vunpack.c.l.b16 %v4710
      %v5003 = vunpack.c.l.b16 %v4711
      %v5004 = vunpack.c.l.b16 %v4712
      %v5005 = vunpack.c.l.b16 %v4713
      %v5006 = vunpack.c.l.b16 %v4714
      %v5007 = vunpack.c.l.b16 %v4715
      %v5008 = vunpack.c.l.b16 %v4716
      %v5009 = vunpack.c.l.b16 %v4717
      %v5010 = vunpack.c.l.b16 %v4718
      %v5011 = vunpack.c.l.b16 %v4719
      %v5012 = vunpack.c.l.b16 %v4720
      %v5013 = vunpack.c.l.b16 %v4721
      %v5014 = vunpack.c.l.b16 %v4722
      %v5015 = vunpack.c.l.b16 %v4723
      %v5016 = vunpack.c.l.b16 %v4724
      %v5017 = vunpack.c.l.b16 %v4725
      %v5018 = vunpack.c.l.b16 %v4726
      %v5019 = vunpack.c.l.b16 %v4727
      %v5020 = vunpack.c.l.b16 %v4728
      %v5021 = vunpack.c.l.b16 %v4729
      %v5022 = vunpack.c.l.b16 %v4730
      %v5023 = vunpack.c.l.b16 %v4731
      %v5024 = vunpack.c.l.b16 %v4732
      %v5025 = vunpack.c.l.b16 %v4733
      %v5026 = vunpack.c.l.b16 %v4734
      %v5027 = vunpack.c.l.b16 %v4735
      %v5028 = vunpack.c.l.b16 %v4736
      %v5029 = vunpack.c.l.b16 %v4737
      %v5030 = vunpack.c.l.b16 %v4738
      %v5031 = vunpack.c.l.b16 %v4739
      %v5032 = vunpack.c.l.b16 %v4740
      %v5033 = vunpack.c.l.b16 %v4741
      %v5034 = vunpack.c.l.b16 %v4742
      %v5035 = vunpack.c.l.b16 %v4743
      %v5036 = vunpack.c.l.b16 %v4744
      %v5037 = vunpack.c.l.b16 %v4745
      %v5038 = vunpack.c.l.b16 %v4746
      %v5039 = vunpack.c.l.b16 %v4747
      %v5040 = vunpack.c.l.b16 %v4748
      %v5041 = vunpack.c.l.b16 %v4749
      %v5042 = vunpack.c.l.b16 %v4750
      %v5043 = vunpack.c.l.b16 %v4751
      %v5044 = vunpack.c.l.b16 %v4752
      %v5045 = vunpack.c.l.b16 %v4753
      %v5046 = vunpack.c.l.b16 %v4754
      %v5047 = vunpack.c.l.b16 %v4755
      %v5048 = vunpack.c.l.b16 %v4756
      %v5049 = vunpack.c.l.b16 %v4757
      %v5050 = vunpack.c.l.b16 %v4758
      %v5051 = vunpack.c.l.b16 %v4759
      %v5052 = vunpack.c.l.b16 %v4760
      %v5053 = vunpack.c.l.b16 %v4761
      %v5054 = vunpack.c.l.b16 %v4762
      %v5055 = vunpack.c.l.b16 %v4763
      %v5056 = vunpack.c.l.b16 %v4764
      %v5057 = vunpack.c.l.b16 %v4765
      %v5058 = vunpack.c.l.b16 %v4766
      %v5059 = vunpack.c.l.b16 %v4767
      %v5060 = vunpack.c.l.b16 %v4768
      %v5061 = vunpack.c.l.b16 %v4769
      %v5062 = vunpack.c.l.b16 %v4770
      %v5063 = vunpack.c.l.b16 %v4771
      %v5064 = vunpack.c.l.b16 %v4772
      %v5065 = vunpack.c.l.b16 %v4773
      %v5066 = vunpack.c.l.b16 %v4774
      %v5067 = vunpack.c.l.b16 %v4775
      %v5068 = vunpack.c.l.b16 %v4776
      %v5069 = vunpack.c.l.b16 %v4777
      %v5070 = vunpack.c.l.b16 %v4778
      %v5071 = vunpack.c.l.b16 %v4779
      %v5072 = vunpack.c.l.b16 %v4780
      %v5073 = vunpack.c.l.b16 %v4781
      %v5074 = vunpack.c.l.b16 %v4782
      %v5075 = vunpack.c.l.b16 %v4783
      %v5076 = vunpack.c.l.b16 %v4784
      %v5077 = vunpack.c.l.b16 %v4785
      %v5078 = vunpack.c.l.b16 %v4786
      %v5079 = vunpack.c.l.b16 %v4787
      %v5080 = vunpack.c.l.b16 %v4788
      %v5081 = vunpack.c.l.b16 %v4789
      %v5082 = vunpack.c.l.b16 %v4790
      %v5083 = vunpack.c.l.b16 %v4791
      %v5084 = vunpack.c.l.b16 %v4792
      %v5085 = vunpack.c.l.b16 %v4793
      %v5086 = vunpack.c.l.b16 %v4794
      %v5087 = vunpack.c.l.b16 %v4795
      %v5088 = vunpack.c.l.b16 %v4796
      %v5089 = vunpack.c.l.b16 %v4797
      %v5090 = vunpack.c.l.b16 %v4798
      %v5091 = vunpack.c.l.b16 %v4799
      %v5092 = vunpack.c.l.b16 %v4800
      %v5093 = vunpack.c.l.b16 %v4801
      %v5094 = vunpack.c.l.b16 %v4802
      %v5095 = vunpack.c.l.b16 %v4803
      %v5096 = vunpack.c.l.b16 %v4804
      %v5097 = vunpack.c.l.b16 %v4805
      %v5098 = vunpack.c.l.b16 %v4806
      %v5099 = vunpack.c.l.b16 %v4807
      %v5100 = vunpack.c.l.b16 %v4808
      %v5101 = vunpack.c.l.b16 %v4809
      %v5102 = vunpack.c.l.b16 %v4810
      %v5103 = vunpack.c.l.b16 %v4811
      %v5104 = vunpack.c.l.b16 %v4812
      %v5105 = vunpack.c.l.b16 %v4813
      %v5106 = vunpack.c.l.b16 %v4814
      %v5107 = vunpack.c.l.b16 %v4815
      %v5108 = vunpack.c.l.b16 %v4816
      %v5109 = vunpack.c.l.b16 %v4817
      %v5110 = vunpack.c.l.b16 %v4818
      %v5111 = vunpack.c.l.b16 %v4819
      %v5112 = vunpack.c.l.b16 %v4820
      %v5113 = vunpack.c.l.b16 %v4821
      %v5114 = vunpack.c.l.b16 %v4822
      %v5115 = vunpack.c.l.b16 %v4823
      %v5116 = vunpack.c.l.b16 %v4824
      %v5117 = vunpack.c.l.b16 %v4825
      %v5118 = vunpack.c.l.b16 %v4826
      %v5119 = vunpack.c.l.b16 %v4827
      %v5120 = vunpack.c.l.b16 %v4828
      %v5121 = vunpack.c.l.b16 %v4829
      %v5122 = vunpack.c.l.b16 %v4830
      %v5123 = vunpack.c.l.b16 %v4831
      %v5124 = vpack.c.b16 %v4981, %v4980
      %v5125 = vpack.c.b16 %v4983, %v4982
      %v5126 = vpack.c.b16 %v4985, %v4984
      %v5127 = vpack.c.b16 %v4987, %v4986
      %v5128 = vpack.c.b16 %v4989, %v4988
      %v5129 = vpack.c.b16 %v4991, %v4990
      %v5130 = vpack.c.b16 %v4993, %v4992
      %v5131 = vpack.c.b16 %v4995, %v4994
      %v5132 = vpack.c.b16 %v4997, %v4996
      %v5133 = vpack.c.b16 %v4999, %v4998
      %v5134 = vpack.c.b16 %v5001, %v5000
      %v5135 = vpack.c.b16 %v5003, %v5002
      %v5136 = vpack.c.b16 %v5005, %v5004
      %v5137 = vpack.c.b16 %v5007, %v5006
      %v5138 = vpack.c.b16 %v5009, %v5008
      %v5139 = vpack.c.b16 %v5011, %v5010
      %v5140 = vpack.c.b16 %v5013, %v5012
      %v5141 = vpack.c.b16 %v5015, %v5014
      %v5142 = vpack.c.b16 %v5017, %v5016
      %v5143 = vpack.c.b16 %v5019, %v5018
      %v5144 = vpack.c.b16 %v5021, %v5020
      %v5145 = vpack.c.b16 %v5023, %v5022
      %v5146 = vpack.c.b16 %v5025, %v5024
      %v5147 = vpack.c.b16 %v5027, %v5026
      %v5148 = vpack.c.b16 %v5029, %v5028
      %v5149 = vpack.c.b16 %v5031, %v5030
      %v5150 = vpack.c.b16 %v5033, %v5032
      %v5151 = vpack.c.b16 %v5035, %v5034
      %v5152 = vpack.c.b16 %v5037, %v5036
      %v5153 = vpack.c.b16 %v5039, %v5038
      %v5154 = vpack.c.b16 %v5041, %v5040
      %v5155 = vpack.c.b16 %v5043, %v5042
      %v5156 = vpack.c.b16 %v5045, %v5044
      %v5157 = vpack.c.b16 %v5047, %v5046
      %v5158 = vpack.c.b16 %v5049, %v5048
      %v5159 = vpack.c.b16 %v5051, %v5050
      %v5160 = vpack.c.b16 %v5053, %v5052
      %v5161 = vpack.c.b16 %v5055, %v5054
      %v5162 = vpack.c.b16 %v5057, %v5056
      %v5163 = vpack.c.b16 %v5059, %v5058
      %v5164 = vpack.c.b16 %v5061, %v5060
      %v5165 = vpack.c.b16 %v5063, %v5062
      %v5166 = vpack.c.b16 %v5065, %v5064
      %v5167 = vpack.c.b16 %v5067, %v5066
      %v5168 = vpack.c.b16 %v5069, %v5068
      %v5169 = vpack.c.b16 %v5071, %v5070
      %v5170 = vpack.c.b16 %v5073, %v5072
      %v5171 = vpack.c.b16 %v5075, %v5074
      %v5172 = vpack.c.b16 %v5077, %v5076
      %v5173 = vpack.c.b16 %v5079, %v5078
      %v5174 = vpack.c.b16 %v5081, %v5080
      %v5175 = vpack.c.b16 %v5083, %v5082
      %v5176 = vpack.c.b16 %v5085, %v5084
      %v5177 = vpack.c.b16 %v5087, %v5086
      %v5178 = vpack.c.b16 %v5089, %v5088
      %v5179 = vpack.c.b16 %v5091, %v5090
      %v5180 = vpack.c.b16 %v5093, %v5092
      %v5181 = vpack.c.b16 %v5095, %v5094
      %v5182 = vpack.c.b16 %v5097, %v5096
      %v5183 = vpack.c.b16 %v5099, %v5098
      %v5184 = vpack.c.b16 %v5101, %v5100
      %v5185 = vpack.c.b16 %v5103, %v5102
      %v5186 = vpack.c.b16 %v5105, %v5104
      %v5187 = vpack.c.b16 %v5107, %v5106
      %v5188 = vpack.c.b16 %v5109, %v5108
      %v5189 = vpack.c.b16 %v5111, %v5110
      %v5190 = vpack.c.b16 %v5113, %v5112
      %v5191 = vpack.c.b16 %v5115, %v5114
      %v5192 = vpack.c.b16 %v5117, %v5116
      %v5193 = vpack.c.b16 %v5119, %v5118
      %v5194 = vpack.c.b16 %v5121, %v5120
      %v5195 = vpack.c.b16 %v5123, %v5122
      %5268 = vmatpush.bf16.msra.mxu0 %v5131
      %5269 = vmatpush.bf16.msra.mxu0 %v5130
      %5270 = vmatpush.bf16.msra.mxu0 %v5129
      %5271 = vmatpush.bf16.msra.mxu0 %v5128
      %5272 = vmatpush.bf16.msra.mxu0 %v5127
      %5273 = vmatpush.bf16.msra.mxu0 %v5126
      %5274 = vmatpush.bf16.msra.mxu0 %v5125
      %5275 = vmatpush.bf16.msra.mxu0 %v5124
      %5276 = vmatmul.bf16.gmra.mxu0 %v3888
      %v5277 = vpop.f32.mrf.mxu0
      %v5278 = vadd.f32 %v4834, %v5277
      %v5279 = vpop.f32.mrf.mxu0
      %v5280 = vadd.f32 %v4834, %v5279
      %5281 = vmatmul.bf16.gmra.mxu0 %v3889
      %v5282 = vpop.f32.mrf.mxu0
      %v5283 = vadd.f32 %v4834, %v5282
      %v5284 = vpop.f32.mrf.mxu0
      %v5285 = vadd.f32 %v4834, %v5284
      %5286 = vmatmul.bf16.gmra.mxu0 %v3890
      %v5287 = vpop.f32.mrf.mxu0
      %v5288 = vadd.f32 %v4834, %v5287
      %v5289 = vpop.f32.mrf.mxu0
      %v5290 = vadd.f32 %v4834, %v5289
      %5291 = vmatmul.bf16.gmra.mxu0 %v3891
      %v5292 = vpop.f32.mrf.mxu0
      %v5293 = vadd.f32 %v4834, %v5292
      %v5294 = vpop.f32.mrf.mxu0
      %v5295 = vadd.f32 %v4834, %v5294
      %5296 = vmatmul.bf16.gmra.mxu0 %v3892
      %v5297 = vpop.f32.mrf.mxu0
      %v5298 = vadd.f32 %v4834, %v5297
      %v5299 = vpop.f32.mrf.mxu0
      %v5300 = vadd.f32 %v4834, %v5299
      %5301 = vmatmul.bf16.gmra.mxu0 %v3893
      %v5302 = vpop.f32.mrf.mxu0
      %v5303 = vadd.f32 %v4834, %v5302
      %v5304 = vpop.f32.mrf.mxu0
      %v5305 = vadd.f32 %v4834, %v5304
      %5306 = vmatmul.bf16.gmra.mxu0 %v3894
      %v5307 = vpop.f32.mrf.mxu0
      %v5308 = vadd.f32 %v4834, %v5307
      %v5309 = vpop.f32.mrf.mxu0
      %v5310 = vadd.f32 %v4834, %v5309
      %5311 = vmatmul.bf16.gmra.mxu0 %v3895
      %v5312 = vpop.f32.mrf.mxu0
      %v5313 = vadd.f32 %v4834, %v5312
      %v5314 = vpop.f32.mrf.mxu0
      %v5315 = vadd.f32 %v4834, %v5314
      %5316 = vmatmul.bf16.gmra.mxu0 %v3896
      %v5317 = vpop.f32.mrf.mxu0
      %v5318 = vadd.f32 %v4834, %v5317
      %v5319 = vpop.f32.mrf.mxu0
      %v5320 = vadd.f32 %v4834, %v5319
      %5321 = vmatmul.bf16.gmra.mxu0 %v3897
      %v5322 = vpop.f32.mrf.mxu0
      %v5323 = vadd.f32 %v4834, %v5322
      %v5324 = vpop.f32.mrf.mxu0
      %v5325 = vadd.f32 %v4834, %v5324
      %5326 = vmatmul.bf16.gmra.mxu0 %v3898
      %v5327 = vpop.f32.mrf.mxu0
      %v5328 = vadd.f32 %v4834, %v5327
      %v5329 = vpop.f32.mrf.mxu0
      %v5330 = vadd.f32 %v4834, %v5329
      %5331 = vmatmul.bf16.gmra.mxu0 %v3899
      %v5332 = vpop.f32.mrf.mxu0
      %v5333 = vadd.f32 %v4834, %v5332
      %v5334 = vpop.f32.mrf.mxu0
      %v5335 = vadd.f32 %v4834, %v5334
      %5336 = vmatmul.bf16.gmra.mxu0 %v3900
      %v5337 = vpop.f32.mrf.mxu0
      %v5338 = vadd.f32 %v4834, %v5337
      %v5339 = vpop.f32.mrf.mxu0
      %v5340 = vadd.f32 %v4834, %v5339
      %5341 = vmatmul.bf16.gmra.mxu0 %v3901
      %v5342 = vpop.f32.mrf.mxu0
      %v5343 = vadd.f32 %v4834, %v5342
      %v5344 = vpop.f32.mrf.mxu0
      %v5345 = vadd.f32 %v4834, %v5344
      %5346 = vmatmul.bf16.gmra.mxu0 %v3902
      %v5347 = vpop.f32.mrf.mxu0
      %v5348 = vadd.f32 %v4834, %v5347
      %v5349 = vpop.f32.mrf.mxu0
      %v5350 = vadd.f32 %v4834, %v5349
      %5351 = vmatmul.bf16.gmra.mxu0 %v3903
      %v5352 = vpop.f32.mrf.mxu0
      %v5353 = vadd.f32 %v4834, %v5352
      %v5354 = vpop.f32.mrf.mxu0
      %v5355 = vadd.f32 %v4834, %v5354
      %5356 = vdwg.mxu0
      %5357 = vmatpush.bf16.msra.mxu0 %v5139
      %5358 = vmatpush.bf16.msra.mxu0 %v5138
      %5359 = vmatpush.bf16.msra.mxu0 %v5137
      %5360 = vmatpush.bf16.msra.mxu0 %v5136
      %5361 = vmatpush.bf16.msra.mxu0 %v5135
      %5362 = vmatpush.bf16.msra.mxu0 %v5134
      %5363 = vmatpush.bf16.msra.mxu0 %v5133
      %5364 = vmatpush.bf16.msra.mxu0 %v5132
      %5365 = vmatmul.bf16.gmra.mxu0 %v3984
      %v5366 = vpop.f32.mrf.mxu0
      %v5367 = vadd.f32 %v5278, %v5366
      %v5368 = vpop.f32.mrf.mxu0
      %v5369 = vadd.f32 %v5280, %v5368
      %5370 = vmatmul.bf16.gmra.mxu0 %v3985
      %v5371 = vpop.f32.mrf.mxu0
      %v5372 = vadd.f32 %v5283, %v5371
      %v5373 = vpop.f32.mrf.mxu0
      %v5374 = vadd.f32 %v5285, %v5373
      %5375 = vmatmul.bf16.gmra.mxu0 %v3986
      %v5376 = vpop.f32.mrf.mxu0
      %v5377 = vadd.f32 %v5288, %v5376
      %v5378 = vpop.f32.mrf.mxu0
      %v5379 = vadd.f32 %v5290, %v5378
      %5380 = vmatmul.bf16.gmra.mxu0 %v3987
      %v5381 = vpop.f32.mrf.mxu0
      %v5382 = vadd.f32 %v5293, %v5381
      %v5383 = vpop.f32.mrf.mxu0
      %v5384 = vadd.f32 %v5295, %v5383
      %5385 = vmatmul.bf16.gmra.mxu0 %v3988
      %v5386 = vpop.f32.mrf.mxu0
      %v5387 = vadd.f32 %v5298, %v5386
      %v5388 = vpop.f32.mrf.mxu0
      %v5389 = vadd.f32 %v5300, %v5388
      %5390 = vmatmul.bf16.gmra.mxu0 %v3989
      %v5391 = vpop.f32.mrf.mxu0
      %v5392 = vadd.f32 %v5303, %v5391
      %v5393 = vpop.f32.mrf.mxu0
      %v5394 = vadd.f32 %v5305, %v5393
      %5395 = vmatmul.bf16.gmra.mxu0 %v3990
      %v5396 = vpop.f32.mrf.mxu0
      %v5397 = vadd.f32 %v5308, %v5396
      %v5398 = vpop.f32.mrf.mxu0
      %v5399 = vadd.f32 %v5310, %v5398
      %5400 = vmatmul.bf16.gmra.mxu0 %v3991
      %v5401 = vpop.f32.mrf.mxu0
      %v5402 = vadd.f32 %v5313, %v5401
      %v5403 = vpop.f32.mrf.mxu0
      %v5404 = vadd.f32 %v5315, %v5403
      %5405 = vmatmul.bf16.gmra.mxu0 %v3992
      %v5406 = vpop.f32.mrf.mxu0
      %v5407 = vadd.f32 %v5318, %v5406
      %v5408 = vpop.f32.mrf.mxu0
      %v5409 = vadd.f32 %v5320, %v5408
      %5410 = vmatmul.bf16.gmra.mxu0 %v3993
      %v5411 = vpop.f32.mrf.mxu0
      %v5412 = vadd.f32 %v5323, %v5411
      %v5413 = vpop.f32.mrf.mxu0
      %v5414 = vadd.f32 %v5325, %v5413
      %5415 = vmatmul.bf16.gmra.mxu0 %v3994
      %v5416 = vpop.f32.mrf.mxu0
      %v5417 = vadd.f32 %v5328, %v5416
      %v5418 = vpop.f32.mrf.mxu0
      %v5419 = vadd.f32 %v5330, %v5418
      %5420 = vmatmul.bf16.gmra.mxu0 %v3995
      %v5421 = vpop.f32.mrf.mxu0
      %v5422 = vadd.f32 %v5333, %v5421
      %v5423 = vpop.f32.mrf.mxu0
      %v5424 = vadd.f32 %v5335, %v5423
      %5425 = vmatmul.bf16.gmra.mxu0 %v3996
      %v5426 = vpop.f32.mrf.mxu0
      %v5427 = vadd.f32 %v5338, %v5426
      %v5428 = vpop.f32.mrf.mxu0
      %v5429 = vadd.f32 %v5340, %v5428
      %5430 = vmatmul.bf16.gmra.mxu0 %v3997
      %v5431 = vpop.f32.mrf.mxu0
      %v5432 = vadd.f32 %v5343, %v5431
      %v5433 = vpop.f32.mrf.mxu0
      %v5434 = vadd.f32 %v5345, %v5433
      %5435 = vmatmul.bf16.gmra.mxu0 %v3998
      %v5436 = vpop.f32.mrf.mxu0
      %v5437 = vadd.f32 %v5348, %v5436
      %v5438 = vpop.f32.mrf.mxu0
      %v5439 = vadd.f32 %v5350, %v5438
      %5440 = vmatmul.bf16.gmra.mxu0 %v3999
      %v5441 = vpop.f32.mrf.mxu0
      %v5442 = vadd.f32 %v5353, %v5441
      %v5443 = vpop.f32.mrf.mxu0
      %v5444 = vadd.f32 %v5355, %v5443
      %5445 = vdwg.mxu0
      %5446 = vmatpush.bf16.msra.mxu0 %v5147
      %5447 = vmatpush.bf16.msra.mxu0 %v5146
      %5448 = vmatpush.bf16.msra.mxu0 %v5145
      %5449 = vmatpush.bf16.msra.mxu0 %v5144
      %5450 = vmatpush.bf16.msra.mxu0 %v5143
      %5451 = vmatpush.bf16.msra.mxu0 %v5142
      %5452 = vmatpush.bf16.msra.mxu0 %v5141
      %5453 = vmatpush.bf16.msra.mxu0 %v5140
      %5454 = vmatmul.bf16.gmra.mxu0 %v4080
      %v5455 = vpop.f32.mrf.mxu0
      %v5456 = vadd.f32 %v5367, %v5455
      %v5457 = vpop.f32.mrf.mxu0
      %v5458 = vadd.f32 %v5369, %v5457
      %5459 = vmatmul.bf16.gmra.mxu0 %v4081
      %v5460 = vpop.f32.mrf.mxu0
      %v5461 = vadd.f32 %v5372, %v5460
      %v5462 = vpop.f32.mrf.mxu0
      %v5463 = vadd.f32 %v5374, %v5462
      %5464 = vmatmul.bf16.gmra.mxu0 %v4082
      %v5465 = vpop.f32.mrf.mxu0
      %v5466 = vadd.f32 %v5377, %v5465
      %v5467 = vpop.f32.mrf.mxu0
      %v5468 = vadd.f32 %v5379, %v5467
      %5469 = vmatmul.bf16.gmra.mxu0 %v4083
      %v5470 = vpop.f32.mrf.mxu0
      %v5471 = vadd.f32 %v5382, %v5470
      %v5472 = vpop.f32.mrf.mxu0
      %v5473 = vadd.f32 %v5384, %v5472
      %5474 = vmatmul.bf16.gmra.mxu0 %v4084
      %v5475 = vpop.f32.mrf.mxu0
      %v5476 = vadd.f32 %v5387, %v5475
      %v5477 = vpop.f32.mrf.mxu0
      %v5478 = vadd.f32 %v5389, %v5477
      %5479 = vmatmul.bf16.gmra.mxu0 %v4085
      %v5480 = vpop.f32.mrf.mxu0
      %v5481 = vadd.f32 %v5392, %v5480
      %v5482 = vpop.f32.mrf.mxu0
      %v5483 = vadd.f32 %v5394, %v5482
      %5484 = vmatmul.bf16.gmra.mxu0 %v4086
      %v5485 = vpop.f32.mrf.mxu0
      %v5486 = vadd.f32 %v5397, %v5485
      %v5487 = vpop.f32.mrf.mxu0
      %v5488 = vadd.f32 %v5399, %v5487
      %5489 = vmatmul.bf16.gmra.mxu0 %v4087
      %v5490 = vpop.f32.mrf.mxu0
      %v5491 = vadd.f32 %v5402, %v5490
      %v5492 = vpop.f32.mrf.mxu0
      %v5493 = vadd.f32 %v5404, %v5492
      %5494 = vmatmul.bf16.gmra.mxu0 %v4088
      %v5495 = vpop.f32.mrf.mxu0
      %v5496 = vadd.f32 %v5407, %v5495
      %v5497 = vpop.f32.mrf.mxu0
      %v5498 = vadd.f32 %v5409, %v5497
      %5499 = vmatmul.bf16.gmra.mxu0 %v4089
      %v5500 = vpop.f32.mrf.mxu0
      %v5501 = vadd.f32 %v5412, %v5500
      %v5502 = vpop.f32.mrf.mxu0
      %v5503 = vadd.f32 %v5414, %v5502
      %5504 = vmatmul.bf16.gmra.mxu0 %v4090
      %v5505 = vpop.f32.mrf.mxu0
      %v5506 = vadd.f32 %v5417, %v5505
      %v5507 = vpop.f32.mrf.mxu0
      %v5508 = vadd.f32 %v5419, %v5507
      %5509 = vmatmul.bf16.gmra.mxu0 %v4091
      %v5510 = vpop.f32.mrf.mxu0
      %v5511 = vadd.f32 %v5422, %v5510
      %v5512 = vpop.f32.mrf.mxu0
      %v5513 = vadd.f32 %v5424, %v5512
      %5514 = vmatmul.bf16.gmra.mxu0 %v4092
      %v5515 = vpop.f32.mrf.mxu0
      %v5516 = vadd.f32 %v5427, %v5515
      %v5517 = vpop.f32.mrf.mxu0
      %v5518 = vadd.f32 %v5429, %v5517
      %5519 = vmatmul.bf16.gmra.mxu0 %v4093
      %v5520 = vpop.f32.mrf.mxu0
      %v5521 = vadd.f32 %v5432, %v5520
      %v5522 = vpop.f32.mrf.mxu0
      %v5523 = vadd.f32 %v5434, %v5522
      %5524 = vmatmul.bf16.gmra.mxu0 %v4094
      %v5525 = vpop.f32.mrf.mxu0
      %v5526 = vadd.f32 %v5437, %v5525
      %v5527 = vpop.f32.mrf.mxu0
      %v5528 = vadd.f32 %v5439, %v5527
      %5529 = vmatmul.bf16.gmra.mxu0 %v4095
      %v5530 = vpop.f32.mrf.mxu0
      %v5531 = vadd.f32 %v5442, %v5530
      %v5532 = vpop.f32.mrf.mxu0
      %v5533 = vadd.f32 %v5444, %v5532
      %5534 = vdwg.mxu0
      %5535 = vmatpush.bf16.msra.mxu0 %v5155
      %5536 = vmatpush.bf16.msra.mxu0 %v5154
      %5537 = vmatpush.bf16.msra.mxu0 %v5153
      %5538 = vmatpush.bf16.msra.mxu0 %v5152
      %5539 = vmatpush.bf16.msra.mxu0 %v5151
      %5540 = vmatpush.bf16.msra.mxu0 %v5150
      %5541 = vmatpush.bf16.msra.mxu0 %v5149
      %5542 = vmatpush.bf16.msra.mxu0 %v5148
      %5543 = vmatmul.bf16.gmra.mxu0 %v4176
      %v5544 = vpop.f32.mrf.mxu0
      %v5545 = vadd.f32 %v5456, %v5544
      %v5546 = vpop.f32.mrf.mxu0
      %v5547 = vadd.f32 %v5458, %v5546
      %5548 = vmatmul.bf16.gmra.mxu0 %v4177
      %v5549 = vpop.f32.mrf.mxu0
      %v5550 = vadd.f32 %v5461, %v5549
      %v5551 = vpop.f32.mrf.mxu0
      %v5552 = vadd.f32 %v5463, %v5551
      %5553 = vmatmul.bf16.gmra.mxu0 %v4178
      %v5554 = vpop.f32.mrf.mxu0
      %v5555 = vadd.f32 %v5466, %v5554
      %v5556 = vpop.f32.mrf.mxu0
      %v5557 = vadd.f32 %v5468, %v5556
      %5558 = vmatmul.bf16.gmra.mxu0 %v4179
      %v5559 = vpop.f32.mrf.mxu0
      %v5560 = vadd.f32 %v5471, %v5559
      %v5561 = vpop.f32.mrf.mxu0
      %v5562 = vadd.f32 %v5473, %v5561
      %5563 = vmatmul.bf16.gmra.mxu0 %v4180
      %v5564 = vpop.f32.mrf.mxu0
      %v5565 = vadd.f32 %v5476, %v5564
      %v5566 = vpop.f32.mrf.mxu0
      %v5567 = vadd.f32 %v5478, %v5566
      %5568 = vmatmul.bf16.gmra.mxu0 %v4181
      %v5569 = vpop.f32.mrf.mxu0
      %v5570 = vadd.f32 %v5481, %v5569
      %v5571 = vpop.f32.mrf.mxu0
      %v5572 = vadd.f32 %v5483, %v5571
      %5573 = vmatmul.bf16.gmra.mxu0 %v4182
      %v5574 = vpop.f32.mrf.mxu0
      %v5575 = vadd.f32 %v5486, %v5574
      %v5576 = vpop.f32.mrf.mxu0
      %v5577 = vadd.f32 %v5488, %v5576
      %5578 = vmatmul.bf16.gmra.mxu0 %v4183
      %v5579 = vpop.f32.mrf.mxu0
      %v5580 = vadd.f32 %v5491, %v5579
      %v5581 = vpop.f32.mrf.mxu0
      %v5582 = vadd.f32 %v5493, %v5581
      %5583 = vmatmul.bf16.gmra.mxu0 %v4184
      %v5584 = vpop.f32.mrf.mxu0
      %v5585 = vadd.f32 %v5496, %v5584
      %v5586 = vpop.f32.mrf.mxu0
      %v5587 = vadd.f32 %v5498, %v5586
      %5588 = vmatmul.bf16.gmra.mxu0 %v4185
      %v5589 = vpop.f32.mrf.mxu0
      %v5590 = vadd.f32 %v5501, %v5589
      %v5591 = vpop.f32.mrf.mxu0
      %v5592 = vadd.f32 %v5503, %v5591
      %5593 = vmatmul.bf16.gmra.mxu0 %v4186
      %v5594 = vpop.f32.mrf.mxu0
      %v5595 = vadd.f32 %v5506, %v5594
      %v5596 = vpop.f32.mrf.mxu0
      %v5597 = vadd.f32 %v5508, %v5596
      %5598 = vmatmul.bf16.gmra.mxu0 %v4187
      %v5599 = vpop.f32.mrf.mxu0
      %v5600 = vadd.f32 %v5511, %v5599
      %v5601 = vpop.f32.mrf.mxu0
      %v5602 = vadd.f32 %v5513, %v5601
      %5603 = vmatmul.bf16.gmra.mxu0 %v4188
      %v5604 = vpop.f32.mrf.mxu0
      %v5605 = vadd.f32 %v5516, %v5604
      %v5606 = vpop.f32.mrf.mxu0
      %v5607 = vadd.f32 %v5518, %v5606
      %5608 = vmatmul.bf16.gmra.mxu0 %v4189
      %v5609 = vpop.f32.mrf.mxu0
      %v5610 = vadd.f32 %v5521, %v5609
      %v5611 = vpop.f32.mrf.mxu0
      %v5612 = vadd.f32 %v5523, %v5611
      %5613 = vmatmul.bf16.gmra.mxu0 %v4190
      %v5614 = vpop.f32.mrf.mxu0
      %v5615 = vadd.f32 %v5526, %v5614
      %v5616 = vpop.f32.mrf.mxu0
      %v5617 = vadd.f32 %v5528, %v5616
      %5618 = vmatmul.bf16.gmra.mxu0 %v4191
      %v5619 = vpop.f32.mrf.mxu0
      %v5620 = vadd.f32 %v5531, %v5619
      %v5621 = vpop.f32.mrf.mxu0
      %v5622 = vadd.f32 %v5533, %v5621
      %5623 = vdwg.mxu0
      %5624 = vmatpush.bf16.msra.mxu0 %v5163
      %5625 = vmatpush.bf16.msra.mxu0 %v5162
      %5626 = vmatpush.bf16.msra.mxu0 %v5161
      %5627 = vmatpush.bf16.msra.mxu0 %v5160
      %5628 = vmatpush.bf16.msra.mxu0 %v5159
      %5629 = vmatpush.bf16.msra.mxu0 %v5158
      %5630 = vmatpush.bf16.msra.mxu0 %v5157
      %5631 = vmatpush.bf16.msra.mxu0 %v5156
      %5632 = vmatmul.bf16.gmra.mxu0 %v4272
      %v5633 = vpop.f32.mrf.mxu0
      %v5634 = vadd.f32 %v5545, %v5633
      %v5635 = vpop.f32.mrf.mxu0
      %v5636 = vadd.f32 %v5547, %v5635
      %5637 = vmatmul.bf16.gmra.mxu0 %v4273
      %v5638 = vpop.f32.mrf.mxu0
      %v5639 = vadd.f32 %v5550, %v5638
      %v5640 = vpop.f32.mrf.mxu0
      %v5641 = vadd.f32 %v5552, %v5640
      %5642 = vmatmul.bf16.gmra.mxu0 %v4274
      %v5643 = vpop.f32.mrf.mxu0
      %v5644 = vadd.f32 %v5555, %v5643
      %v5645 = vpop.f32.mrf.mxu0
      %v5646 = vadd.f32 %v5557, %v5645
      %5647 = vmatmul.bf16.gmra.mxu0 %v4275
      %v5648 = vpop.f32.mrf.mxu0
      %v5649 = vadd.f32 %v5560, %v5648
      %v5650 = vpop.f32.mrf.mxu0
      %v5651 = vadd.f32 %v5562, %v5650
      %5652 = vmatmul.bf16.gmra.mxu0 %v4276
      %v5653 = vpop.f32.mrf.mxu0
      %v5654 = vadd.f32 %v5565, %v5653
      %v5655 = vpop.f32.mrf.mxu0
      %v5656 = vadd.f32 %v5567, %v5655
      %5657 = vmatmul.bf16.gmra.mxu0 %v4277
      %v5658 = vpop.f32.mrf.mxu0
      %v5659 = vadd.f32 %v5570, %v5658
      %v5660 = vpop.f32.mrf.mxu0
      %v5661 = vadd.f32 %v5572, %v5660
      %5662 = vmatmul.bf16.gmra.mxu0 %v4278
      %v5663 = vpop.f32.mrf.mxu0
      %v5664 = vadd.f32 %v5575, %v5663
      %v5665 = vpop.f32.mrf.mxu0
      %v5666 = vadd.f32 %v5577, %v5665
      %5667 = vmatmul.bf16.gmra.mxu0 %v4279
      %v5668 = vpop.f32.mrf.mxu0
      %v5669 = vadd.f32 %v5580, %v5668
      %v5670 = vpop.f32.mrf.mxu0
      %v5671 = vadd.f32 %v5582, %v5670
      %5672 = vmatmul.bf16.gmra.mxu0 %v4280
      %v5673 = vpop.f32.mrf.mxu0
      %v5674 = vadd.f32 %v5585, %v5673
      %v5675 = vpop.f32.mrf.mxu0
      %v5676 = vadd.f32 %v5587, %v5675
      %5677 = vmatmul.bf16.gmra.mxu0 %v4281
      %v5678 = vpop.f32.mrf.mxu0
      %v5679 = vadd.f32 %v5590, %v5678
      %v5680 = vpop.f32.mrf.mxu0
      %v5681 = vadd.f32 %v5592, %v5680
      %5682 = vmatmul.bf16.gmra.mxu0 %v4282
      %v5683 = vpop.f32.mrf.mxu0
      %v5684 = vadd.f32 %v5595, %v5683
      %v5685 = vpop.f32.mrf.mxu0
      %v5686 = vadd.f32 %v5597, %v5685
      %5687 = vmatmul.bf16.gmra.mxu0 %v4283
      %v5688 = vpop.f32.mrf.mxu0
      %v5689 = vadd.f32 %v5600, %v5688
      %v5690 = vpop.f32.mrf.mxu0
      %v5691 = vadd.f32 %v5602, %v5690
      %5692 = vmatmul.bf16.gmra.mxu0 %v4284
      %v5693 = vpop.f32.mrf.mxu0
      %v5694 = vadd.f32 %v5605, %v5693
      %v5695 = vpop.f32.mrf.mxu0
      %v5696 = vadd.f32 %v5607, %v5695
      %5697 = vmatmul.bf16.gmra.mxu0 %v4285
      %v5698 = vpop.f32.mrf.mxu0
      %v5699 = vadd.f32 %v5610, %v5698
      %v5700 = vpop.f32.mrf.mxu0
      %v5701 = vadd.f32 %v5612, %v5700
      %5702 = vmatmul.bf16.gmra.mxu0 %v4286
      %v5703 = vpop.f32.mrf.mxu0
      %v5704 = vadd.f32 %v5615, %v5703
      %v5705 = vpop.f32.mrf.mxu0
      %v5706 = vadd.f32 %v5617, %v5705
      %5707 = vmatmul.bf16.gmra.mxu0 %v4287
      %v5708 = vpop.f32.mrf.mxu0
      %v5709 = vadd.f32 %v5620, %v5708
      %v5710 = vpop.f32.mrf.mxu0
      %v5711 = vadd.f32 %v5622, %v5710
      %5712 = vdwg.mxu0
      %5713 = vmatpush.bf16.msra.mxu0 %v5171
      %5714 = vmatpush.bf16.msra.mxu0 %v5170
      %5715 = vmatpush.bf16.msra.mxu0 %v5169
      %5716 = vmatpush.bf16.msra.mxu0 %v5168
      %5717 = vmatpush.bf16.msra.mxu0 %v5167
      %5718 = vmatpush.bf16.msra.mxu0 %v5166
      %5719 = vmatpush.bf16.msra.mxu0 %v5165
      %5720 = vmatpush.bf16.msra.mxu0 %v5164
      %5721 = vmatmul.bf16.gmra.mxu0 %v4368
      %v5722 = vpop.f32.mrf.mxu0
      %v5723 = vadd.f32 %v5634, %v5722
      %v5724 = vpop.f32.mrf.mxu0
      %v5725 = vadd.f32 %v5636, %v5724
      %5726 = vmatmul.bf16.gmra.mxu0 %v4369
      %v5727 = vpop.f32.mrf.mxu0
      %v5728 = vadd.f32 %v5639, %v5727
      %v5729 = vpop.f32.mrf.mxu0
      %v5730 = vadd.f32 %v5641, %v5729
      %5731 = vmatmul.bf16.gmra.mxu0 %v4370
      %v5732 = vpop.f32.mrf.mxu0
      %v5733 = vadd.f32 %v5644, %v5732
      %v5734 = vpop.f32.mrf.mxu0
      %v5735 = vadd.f32 %v5646, %v5734
      %5736 = vmatmul.bf16.gmra.mxu0 %v4371
      %v5737 = vpop.f32.mrf.mxu0
      %v5738 = vadd.f32 %v5649, %v5737
      %v5739 = vpop.f32.mrf.mxu0
      %v5740 = vadd.f32 %v5651, %v5739
      %5741 = vmatmul.bf16.gmra.mxu0 %v4372
      %v5742 = vpop.f32.mrf.mxu0
      %v5743 = vadd.f32 %v5654, %v5742
      %v5744 = vpop.f32.mrf.mxu0
      %v5745 = vadd.f32 %v5656, %v5744
      %5746 = vmatmul.bf16.gmra.mxu0 %v4373
      %v5747 = vpop.f32.mrf.mxu0
      %v5748 = vadd.f32 %v5659, %v5747
      %v5749 = vpop.f32.mrf.mxu0
      %v5750 = vadd.f32 %v5661, %v5749
      %5751 = vmatmul.bf16.gmra.mxu0 %v4374
      %v5752 = vpop.f32.mrf.mxu0
      %v5753 = vadd.f32 %v5664, %v5752
      %v5754 = vpop.f32.mrf.mxu0
      %v5755 = vadd.f32 %v5666, %v5754
      %5756 = vmatmul.bf16.gmra.mxu0 %v4375
      %v5757 = vpop.f32.mrf.mxu0
      %v5758 = vadd.f32 %v5669, %v5757
      %v5759 = vpop.f32.mrf.mxu0
      %v5760 = vadd.f32 %v5671, %v5759
      %5761 = vmatmul.bf16.gmra.mxu0 %v4376
      %v5762 = vpop.f32.mrf.mxu0
      %v5763 = vadd.f32 %v5674, %v5762
      %v5764 = vpop.f32.mrf.mxu0
      %v5765 = vadd.f32 %v5676, %v5764
      %5766 = vmatmul.bf16.gmra.mxu0 %v4377
      %v5767 = vpop.f32.mrf.mxu0
      %v5768 = vadd.f32 %v5679, %v5767
      %v5769 = vpop.f32.mrf.mxu0
      %v5770 = vadd.f32 %v5681, %v5769
      %5771 = vmatmul.bf16.gmra.mxu0 %v4378
      %v5772 = vpop.f32.mrf.mxu0
      %v5773 = vadd.f32 %v5684, %v5772
      %v5774 = vpop.f32.mrf.mxu0
      %v5775 = vadd.f32 %v5686, %v5774
      %5776 = vmatmul.bf16.gmra.mxu0 %v4379
      %v5777 = vpop.f32.mrf.mxu0
      %v5778 = vadd.f32 %v5689, %v5777
      %v5779 = vpop.f32.mrf.mxu0
      %v5780 = vadd.f32 %v5691, %v5779
      %5781 = vmatmul.bf16.gmra.mxu0 %v4380
      %v5782 = vpop.f32.mrf.mxu0
      %v5783 = vadd.f32 %v5694, %v5782
      %v5784 = vpop.f32.mrf.mxu0
      %v5785 = vadd.f32 %v5696, %v5784
      %5786 = vmatmul.bf16.gmra.mxu0 %v4381
      %v5787 = vpop.f32.mrf.mxu0
      %v5788 = vadd.f32 %v5699, %v5787
      %v5789 = vpop.f32.mrf.mxu0
      %v5790 = vadd.f32 %v5701, %v5789
      %5791 = vmatmul.bf16.gmra.mxu0 %v4382
      %v5792 = vpop.f32.mrf.mxu0
      %v5793 = vadd.f32 %v5704, %v5792
      %v5794 = vpop.f32.mrf.mxu0
      %v5795 = vadd.f32 %v5706, %v5794
      %5796 = vmatmul.bf16.gmra.mxu0 %v4383
      %v5797 = vpop.f32.mrf.mxu0
      %v5798 = vadd.f32 %v5709, %v5797
      %v5799 = vpop.f32.mrf.mxu0
      %v5800 = vadd.f32 %v5711, %v5799
      %5801 = vdwg.mxu0
      %5802 = vmatpush.bf16.msra.mxu0 %v5179
      %5803 = vmatpush.bf16.msra.mxu0 %v5178
      %5804 = vmatpush.bf16.msra.mxu0 %v5177
      %5805 = vmatpush.bf16.msra.mxu0 %v5176
      %5806 = vmatpush.bf16.msra.mxu0 %v5175
      %5807 = vmatpush.bf16.msra.mxu0 %v5174
      %5808 = vmatpush.bf16.msra.mxu0 %v5173
      %5809 = vmatpush.bf16.msra.mxu0 %v5172
      %5810 = vmatmul.bf16.gmra.mxu0 %v4464
      %v5811 = vpop.f32.mrf.mxu0
      %v5812 = vadd.f32 %v5723, %v5811
      %v5813 = vpop.f32.mrf.mxu0
      %v5814 = vadd.f32 %v5725, %v5813
      %5815 = vmatmul.bf16.gmra.mxu0 %v4465
      %v5816 = vpop.f32.mrf.mxu0
      %v5817 = vadd.f32 %v5728, %v5816
      %v5818 = vpop.f32.mrf.mxu0
      %v5819 = vadd.f32 %v5730, %v5818
      %5820 = vmatmul.bf16.gmra.mxu0 %v4466
      %v5821 = vpop.f32.mrf.mxu0
      %v5822 = vadd.f32 %v5733, %v5821
      %v5823 = vpop.f32.mrf.mxu0
      %v5824 = vadd.f32 %v5735, %v5823
      %5825 = vmatmul.bf16.gmra.mxu0 %v4467
      %v5826 = vpop.f32.mrf.mxu0
      %v5827 = vadd.f32 %v5738, %v5826
      %v5828 = vpop.f32.mrf.mxu0
      %v5829 = vadd.f32 %v5740, %v5828
      %5830 = vmatmul.bf16.gmra.mxu0 %v4468
      %v5831 = vpop.f32.mrf.mxu0
      %v5832 = vadd.f32 %v5743, %v5831
      %v5833 = vpop.f32.mrf.mxu0
      %v5834 = vadd.f32 %v5745, %v5833
      %5835 = vmatmul.bf16.gmra.mxu0 %v4469
      %v5836 = vpop.f32.mrf.mxu0
      %v5837 = vadd.f32 %v5748, %v5836
      %v5838 = vpop.f32.mrf.mxu0
      %v5839 = vadd.f32 %v5750, %v5838
      %5840 = vmatmul.bf16.gmra.mxu0 %v4470
      %v5841 = vpop.f32.mrf.mxu0
      %v5842 = vadd.f32 %v5753, %v5841
      %v5843 = vpop.f32.mrf.mxu0
      %v5844 = vadd.f32 %v5755, %v5843
      %5845 = vmatmul.bf16.gmra.mxu0 %v4471
      %v5846 = vpop.f32.mrf.mxu0
      %v5847 = vadd.f32 %v5758, %v5846
      %v5848 = vpop.f32.mrf.mxu0
      %v5849 = vadd.f32 %v5760, %v5848
      %5850 = vmatmul.bf16.gmra.mxu0 %v4472
      %v5851 = vpop.f32.mrf.mxu0
      %v5852 = vadd.f32 %v5763, %v5851
      %v5853 = vpop.f32.mrf.mxu0
      %v5854 = vadd.f32 %v5765, %v5853
      %5855 = vmatmul.bf16.gmra.mxu0 %v4473
      %v5856 = vpop.f32.mrf.mxu0
      %v5857 = vadd.f32 %v5768, %v5856
      %v5858 = vpop.f32.mrf.mxu0
      %v5859 = vadd.f32 %v5770, %v5858
      %5860 = vmatmul.bf16.gmra.mxu0 %v4474
      %v5861 = vpop.f32.mrf.mxu0
      %v5862 = vadd.f32 %v5773, %v5861
      %v5863 = vpop.f32.mrf.mxu0
      %v5864 = vadd.f32 %v5775, %v5863
      %5865 = vmatmul.bf16.gmra.mxu0 %v4475
      %v5866 = vpop.f32.mrf.mxu0
      %v5867 = vadd.f32 %v5778, %v5866
      %v5868 = vpop.f32.mrf.mxu0
      %v5869 = vadd.f32 %v5780, %v5868
      %5870 = vmatmul.bf16.gmra.mxu0 %v4476
      %v5871 = vpop.f32.mrf.mxu0
      %v5872 = vadd.f32 %v5783, %v5871
      %v5873 = vpop.f32.mrf.mxu0
      %v5874 = vadd.f32 %v5785, %v5873
      %5875 = vmatmul.bf16.gmra.mxu0 %v4477
      %v5876 = vpop.f32.mrf.mxu0
      %v5877 = vadd.f32 %v5788, %v5876
      %v5878 = vpop.f32.mrf.mxu0
      %v5879 = vadd.f32 %v5790, %v5878
      %5880 = vmatmul.bf16.gmra.mxu0 %v4478
      %v5881 = vpop.f32.mrf.mxu0
      %v5882 = vadd.f32 %v5793, %v5881
      %v5883 = vpop.f32.mrf.mxu0
      %v5884 = vadd.f32 %v5795, %v5883
      %5885 = vmatmul.bf16.gmra.mxu0 %v4479
      %v5886 = vpop.f32.mrf.mxu0
      %v5887 = vadd.f32 %v5798, %v5886
      %v5888 = vpop.f32.mrf.mxu0
      %v5889 = vadd.f32 %v5800, %v5888
      %5890 = vdwg.mxu0
      %5891 = vmatpush.bf16.msra.mxu0 %v5187
      %5892 = vmatpush.bf16.msra.mxu0 %v5186
      %5893 = vmatpush.bf16.msra.mxu0 %v5185
      %5894 = vmatpush.bf16.msra.mxu0 %v5184
      %5895 = vmatpush.bf16.msra.mxu0 %v5183
      %5896 = vmatpush.bf16.msra.mxu0 %v5182
      %5897 = vmatpush.bf16.msra.mxu0 %v5181
      %5898 = vmatpush.bf16.msra.mxu0 %v5180
      %5899 = vmatmul.bf16.gmra.mxu0 %v4560
      %v5900 = vpop.f32.mrf.mxu0
      %v5901 = vadd.f32 %v5812, %v5900
      %v5902 = vpop.f32.mrf.mxu0
      %v5903 = vadd.f32 %v5814, %v5902
      %5904 = vmatmul.bf16.gmra.mxu0 %v4561
      %v5905 = vpop.f32.mrf.mxu0
      %v5906 = vadd.f32 %v5817, %v5905
      %v5907 = vpop.f32.mrf.mxu0
      %v5908 = vadd.f32 %v5819, %v5907
      %5909 = vmatmul.bf16.gmra.mxu0 %v4562
      %v5910 = vpop.f32.mrf.mxu0
      %v5911 = vadd.f32 %v5822, %v5910
      %v5912 = vpop.f32.mrf.mxu0
      %v5913 = vadd.f32 %v5824, %v5912
      %5914 = vmatmul.bf16.gmra.mxu0 %v4563
      %v5915 = vpop.f32.mrf.mxu0
      %v5916 = vadd.f32 %v5827, %v5915
      %v5917 = vpop.f32.mrf.mxu0
      %v5918 = vadd.f32 %v5829, %v5917
      %5919 = vmatmul.bf16.gmra.mxu0 %v4564
      %v5920 = vpop.f32.mrf.mxu0
      %v5921 = vadd.f32 %v5832, %v5920
      %v5922 = vpop.f32.mrf.mxu0
      %v5923 = vadd.f32 %v5834, %v5922
      %5924 = vmatmul.bf16.gmra.mxu0 %v4565
      %v5925 = vpop.f32.mrf.mxu0
      %v5926 = vadd.f32 %v5837, %v5925
      %v5927 = vpop.f32.mrf.mxu0
      %v5928 = vadd.f32 %v5839, %v5927
      %5929 = vmatmul.bf16.gmra.mxu0 %v4566
      %v5930 = vpop.f32.mrf.mxu0
      %v5931 = vadd.f32 %v5842, %v5930
      %v5932 = vpop.f32.mrf.mxu0
      %v5933 = vadd.f32 %v5844, %v5932
      %5934 = vmatmul.bf16.gmra.mxu0 %v4567
      %v5935 = vpop.f32.mrf.mxu0
      %v5936 = vadd.f32 %v5847, %v5935
      %v5937 = vpop.f32.mrf.mxu0
      %v5938 = vadd.f32 %v5849, %v5937
      %5939 = vmatmul.bf16.gmra.mxu0 %v4568
      %v5940 = vpop.f32.mrf.mxu0
      %v5941 = vadd.f32 %v5852, %v5940
      %v5942 = vpop.f32.mrf.mxu0
      %v5943 = vadd.f32 %v5854, %v5942
      %5944 = vmatmul.bf16.gmra.mxu0 %v4569
      %v5945 = vpop.f32.mrf.mxu0
      %v5946 = vadd.f32 %v5857, %v5945
      %v5947 = vpop.f32.mrf.mxu0
      %v5948 = vadd.f32 %v5859, %v5947
      %5949 = vmatmul.bf16.gmra.mxu0 %v4570
      %v5950 = vpop.f32.mrf.mxu0
      %v5951 = vadd.f32 %v5862, %v5950
      %v5952 = vpop.f32.mrf.mxu0
      %v5953 = vadd.f32 %v5864, %v5952
      %5954 = vmatmul.bf16.gmra.mxu0 %v4571
      %v5955 = vpop.f32.mrf.mxu0
      %v5956 = vadd.f32 %v5867, %v5955
      %v5957 = vpop.f32.mrf.mxu0
      %v5958 = vadd.f32 %v5869, %v5957
      %5959 = vmatmul.bf16.gmra.mxu0 %v4572
      %v5960 = vpop.f32.mrf.mxu0
      %v5961 = vadd.f32 %v5872, %v5960
      %v5962 = vpop.f32.mrf.mxu0
      %v5963 = vadd.f32 %v5874, %v5962
      %5964 = vmatmul.bf16.gmra.mxu0 %v4573
      %v5965 = vpop.f32.mrf.mxu0
      %v5966 = vadd.f32 %v5877, %v5965
      %v5967 = vpop.f32.mrf.mxu0
      %v5968 = vadd.f32 %v5879, %v5967
      %5969 = vmatmul.bf16.gmra.mxu0 %v4574
      %v5970 = vpop.f32.mrf.mxu0
      %v5971 = vadd.f32 %v5882, %v5970
      %v5972 = vpop.f32.mrf.mxu0
      %v5973 = vadd.f32 %v5884, %v5972
      %5974 = vmatmul.bf16.gmra.mxu0 %v4575
      %v5975 = vpop.f32.mrf.mxu0
      %v5976 = vadd.f32 %v5887, %v5975
      %v5977 = vpop.f32.mrf.mxu0
      %v5978 = vadd.f32 %v5889, %v5977
      %5979 = vdwg.mxu0
      %5980 = vmatpush.bf16.msra.mxu0 %v5195
      %5981 = vmatpush.bf16.msra.mxu0 %v5194
      %5982 = vmatpush.bf16.msra.mxu0 %v5193
      %5983 = vmatpush.bf16.msra.mxu0 %v5192
      %5984 = vmatpush.bf16.msra.mxu0 %v5191
      %5985 = vmatpush.bf16.msra.mxu0 %v5190
      %5986 = vmatpush.bf16.msra.mxu0 %v5189
      %5987 = vmatpush.bf16.msra.mxu0 %v5188
      %5988 = vmatmul.bf16.gmra.mxu0 %v4656
      %v5989 = vpop.f32.mrf.mxu0
      %v5990 = vadd.f32 %v5901, %v5989
      %v5991 = vpop.f32.mrf.mxu0
      %v5992 = vadd.f32 %v5903, %v5991
      %5993 = vmatmul.bf16.gmra.mxu0 %v4657
      %v5994 = vpop.f32.mrf.mxu0
      %v5995 = vadd.f32 %v5906, %v5994
      %v5996 = vpop.f32.mrf.mxu0
      %v5997 = vadd.f32 %v5908, %v5996
      %5998 = vmatmul.bf16.gmra.mxu0 %v4658
      %v5999 = vpop.f32.mrf.mxu0
      %v6000 = vadd.f32 %v5911, %v5999
      %v6001 = vpop.f32.mrf.mxu0
      %v6002 = vadd.f32 %v5913, %v6001
      %6003 = vmatmul.bf16.gmra.mxu0 %v4659
      %v6004 = vpop.f32.mrf.mxu0
      %v6005 = vadd.f32 %v5916, %v6004
      %v6006 = vpop.f32.mrf.mxu0
      %v6007 = vadd.f32 %v5918, %v6006
      %6008 = vmatmul.bf16.gmra.mxu0 %v4660
      %v6009 = vpop.f32.mrf.mxu0
      %v6010 = vadd.f32 %v5921, %v6009
      %v6011 = vpop.f32.mrf.mxu0
      %v6012 = vadd.f32 %v5923, %v6011
      %6013 = vmatmul.bf16.gmra.mxu0 %v4661
      %v6014 = vpop.f32.mrf.mxu0
      %v6015 = vadd.f32 %v5926, %v6014
      %v6016 = vpop.f32.mrf.mxu0
      %v6017 = vadd.f32 %v5928, %v6016
      %6018 = vmatmul.bf16.gmra.mxu0 %v4662
      %v6019 = vpop.f32.mrf.mxu0
      %v6020 = vadd.f32 %v5931, %v6019
      %v6021 = vpop.f32.mrf.mxu0
      %v6022 = vadd.f32 %v5933, %v6021
      %6023 = vmatmul.bf16.gmra.mxu0 %v4663
      %v6024 = vpop.f32.mrf.mxu0
      %v6025 = vadd.f32 %v5936, %v6024
      %v6026 = vpop.f32.mrf.mxu0
      %v6027 = vadd.f32 %v5938, %v6026
      %6028 = vmatmul.bf16.gmra.mxu0 %v4664
      %v6029 = vpop.f32.mrf.mxu0
      %v6030 = vadd.f32 %v5941, %v6029
      %v6031 = vpop.f32.mrf.mxu0
      %v6032 = vadd.f32 %v5943, %v6031
      %6033 = vmatmul.bf16.gmra.mxu0 %v4665
      %v6034 = vpop.f32.mrf.mxu0
      %v6035 = vadd.f32 %v5946, %v6034
      %v6036 = vpop.f32.mrf.mxu0
      %v6037 = vadd.f32 %v5948, %v6036
      %6038 = vmatmul.bf16.gmra.mxu0 %v4666
      %v6039 = vpop.f32.mrf.mxu0
      %v6040 = vadd.f32 %v5951, %v6039
      %v6041 = vpop.f32.mrf.mxu0
      %v6042 = vadd.f32 %v5953, %v6041
      %6043 = vmatmul.bf16.gmra.mxu0 %v4667
      %v6044 = vpop.f32.mrf.mxu0
      %v6045 = vadd.f32 %v5956, %v6044
      %v6046 = vpop.f32.mrf.mxu0
      %v6047 = vadd.f32 %v5958, %v6046
      %6048 = vmatmul.bf16.gmra.mxu0 %v4668
      %v6049 = vpop.f32.mrf.mxu0
      %v6050 = vadd.f32 %v5961, %v6049
      %v6051 = vpop.f32.mrf.mxu0
      %v6052 = vadd.f32 %v5963, %v6051
      %6053 = vmatmul.bf16.gmra.mxu0 %v4669
      %v6054 = vpop.f32.mrf.mxu0
      %v6055 = vadd.f32 %v5966, %v6054
      %v6056 = vpop.f32.mrf.mxu0
      %v6057 = vadd.f32 %v5968, %v6056
      %6058 = vmatmul.bf16.gmra.mxu0 %v4670
      %v6059 = vpop.f32.mrf.mxu0
      %v6060 = vadd.f32 %v5971, %v6059
      %v6061 = vpop.f32.mrf.mxu0
      %v6062 = vadd.f32 %v5973, %v6061
      %6063 = vmatmul.bf16.gmra.mxu0 %v4671
      %v6064 = vpop.f32.mrf.mxu0
      %v6065 = vadd.f32 %v5976, %v6064
      %v6066 = vpop.f32.mrf.mxu0
      %v6067 = vadd.f32 %v5978, %v6066
      %6068 = vdwg.mxu0
      %v6069 = vld [vmem:[%s219] sm:$0xff]
      %v6070 = vld [vmem:[%s219 + $0x8] sm:$0xff]
      %v6071 = vld [vmem:[%s219 + $0x10] sm:$0xff]
      %v6072 = vld [vmem:[%s219 + $0x18] sm:$0xff]
      %v6073 = vld [vmem:[%s219 + $0x20] sm:$0xff]
      %v6074 = vld [vmem:[%s219 + $0x28] sm:$0xff]
      %v6075 = vld [vmem:[%s219 + $0x30] sm:$0xff]
      %v6076 = vld [vmem:[%s219 + $0x38] sm:$0xff]
      %v6077 = vld [vmem:[%s219 + $0x40] sm:$0xff]
      %v6078 = vld [vmem:[%s219 + $0x48] sm:$0xff]
      %v6079 = vld [vmem:[%s219 + $0x50] sm:$0xff]
      %v6080 = vld [vmem:[%s219 + $0x58] sm:$0xff]
      %v6081 = vld [vmem:[%s219 + $0x60] sm:$0xff]
      %v6082 = vld [vmem:[%s219 + $0x68] sm:$0xff]
      %v6083 = vld [vmem:[%s219 + $0x70] sm:$0xff]
      %v6084 = vld [vmem:[%s219 + $0x78] sm:$0xff]
      %v6085 = vld [vmem:[%s219 + $0x80] sm:$0xff]
      %v6086 = vld [vmem:[%s219 + $0x88] sm:$0xff]
      %v6087 = vld [vmem:[%s219 + $0x90] sm:$0xff]
      %v6088 = vld [vmem:[%s219 + $0x98] sm:$0xff]
      %v6089 = vld [vmem:[%s219 + $0xa0] sm:$0xff]
      %v6090 = vld [vmem:[%s219 + $0xa8] sm:$0xff]
      %v6091 = vld [vmem:[%s219 + $0xb0] sm:$0xff]
      %v6092 = vld [vmem:[%s219 + $0xb8] sm:$0xff]
      %v6093 = vld [vmem:[%s219 + $0xc0] sm:$0xff]
      %v6094 = vld [vmem:[%s219 + $0xc8] sm:$0xff]
      %v6095 = vld [vmem:[%s219 + $0xd0] sm:$0xff]
      %v6096 = vld [vmem:[%s219 + $0xd8] sm:$0xff]
      %v6097 = vld [vmem:[%s219 + $0xe0] sm:$0xff]
      %v6098 = vld [vmem:[%s219 + $0xe8] sm:$0xff]
      %v6099 = vld [vmem:[%s219 + $0xf0] sm:$0xff]
      %v6100 = vld [vmem:[%s219 + $0xf8] sm:$0xff]
      %v6101 = vadd.f32 %v5990, %v6069
      %v6102 = vadd.f32 %v5992, %v6070
      %v6103 = vadd.f32 %v5995, %v6071
      %v6104 = vadd.f32 %v5997, %v6072
      %v6105 = vadd.f32 %v6000, %v6073
      %v6106 = vadd.f32 %v6002, %v6074
      %v6107 = vadd.f32 %v6005, %v6075
      %v6108 = vadd.f32 %v6007, %v6076
      %v6109 = vadd.f32 %v6010, %v6077
      %v6110 = vadd.f32 %v6012, %v6078
      %v6111 = vadd.f32 %v6015, %v6079
      %v6112 = vadd.f32 %v6017, %v6080
      %v6113 = vadd.f32 %v6020, %v6081
      %v6114 = vadd.f32 %v6022, %v6082
      %v6115 = vadd.f32 %v6025, %v6083
      %v6116 = vadd.f32 %v6027, %v6084
      %v6117 = vadd.f32 %v6030, %v6085
      %v6118 = vadd.f32 %v6032, %v6086
      %v6119 = vadd.f32 %v6035, %v6087
      %v6120 = vadd.f32 %v6037, %v6088
      %v6121 = vadd.f32 %v6040, %v6089
      %v6122 = vadd.f32 %v6042, %v6090
      %v6123 = vadd.f32 %v6045, %v6091
      %v6124 = vadd.f32 %v6047, %v6092
      %v6125 = vadd.f32 %v6050, %v6093
      %v6126 = vadd.f32 %v6052, %v6094
      %v6127 = vadd.f32 %v6055, %v6095
      %v6128 = vadd.f32 %v6057, %v6096
      %v6129 = vadd.f32 %v6060, %v6097
      %v6130 = vadd.f32 %v6062, %v6098
      %v6131 = vadd.f32 %v6065, %v6099
      %v6132 = vadd.f32 %v6067, %v6100
      %v6133 = vmax.f32 %v6101, 0.0
      %v6134 = vmax.f32 %v6102, 0.0
      %v6135 = vmax.f32 %v6103, 0.0
      %v6136 = vmax.f32 %v6104, 0.0
      %v6137 = vmax.f32 %v6105, 0.0
      %v6138 = vmax.f32 %v6106, 0.0
      %v6139 = vmax.f32 %v6107, 0.0
      %v6140 = vmax.f32 %v6108, 0.0
      %v6141 = vmax.f32 %v6109, 0.0
      %v6142 = vmax.f32 %v6110, 0.0
      %v6143 = vmax.f32 %v6111, 0.0
      %v6144 = vmax.f32 %v6112, 0.0
      %v6145 = vmax.f32 %v6113, 0.0
      %v6146 = vmax.f32 %v6114, 0.0
      %v6147 = vmax.f32 %v6115, 0.0
      %v6148 = vmax.f32 %v6116, 0.0
      %v6149 = vmax.f32 %v6117, 0.0
      %v6150 = vmax.f32 %v6118, 0.0
      %v6151 = vmax.f32 %v6119, 0.0
      %v6152 = vmax.f32 %v6120, 0.0
      %v6153 = vmax.f32 %v6121, 0.0
      %v6154 = vmax.f32 %v6122, 0.0
      %v6155 = vmax.f32 %v6123, 0.0
      %v6156 = vmax.f32 %v6124, 0.0
      %v6157 = vmax.f32 %v6125, 0.0
      %v6158 = vmax.f32 %v6126, 0.0
      %v6159 = vmax.f32 %v6127, 0.0
      %v6160 = vmax.f32 %v6128, 0.0
      %v6161 = vmax.f32 %v6129, 0.0
      %v6162 = vmax.f32 %v6130, 0.0
      %v6163 = vmax.f32 %v6131, 0.0
      %v6164 = vmax.f32 %v6132, 0.0
      %6165 = vst [vmem:[%s224] sm:$0xff] %v6133
      %6166 = vst [vmem:[%s224 + $0x8] sm:$0xff] %v6134
      %6167 = vst [vmem:[%s224 + $0x10] sm:$0xff] %v6135
      %6168 = vst [vmem:[%s224 + $0x18] sm:$0xff] %v6136
      %6169 = vst [vmem:[%s224 + $0x20] sm:$0xff] %v6137
      %6170 = vst [vmem:[%s224 + $0x28] sm:$0xff] %v6138
      %6171 = vst [vmem:[%s224 + $0x30] sm:$0xff] %v6139
      %6172 = vst [vmem:[%s224 + $0x38] sm:$0xff] %v6140
      %6173 = vst [vmem:[%s224 + $0x40] sm:$0xff] %v6141
      %6174 = vst [vmem:[%s224 + $0x48] sm:$0xff] %v6142
      %6175 = vst [vmem:[%s224 + $0x50] sm:$0xff] %v6143
      %6176 = vst [vmem:[%s224 + $0x58] sm:$0xff] %v6144
      %6177 = vst [vmem:[%s224 + $0x60] sm:$0xff] %v6145
      %6178 = vst [vmem:[%s224 + $0x68] sm:$0xff] %v6146
      %6179 = vst [vmem:[%s224 + $0x70] sm:$0xff] %v6147
      %6180 = vst [vmem:[%s224 + $0x78] sm:$0xff] %v6148
      %6181 = vst [vmem:[%s224 + $0x80] sm:$0xff] %v6149
      %6182 = vst [vmem:[%s224 + $0x88] sm:$0xff] %v6150
      %6183 = vst [vmem:[%s224 + $0x90] sm:$0xff] %v6151
      %6184 = vst [vmem:[%s224 + $0x98] sm:$0xff] %v6152
      %6185 = vst [vmem:[%s224 + $0xa0] sm:$0xff] %v6153
      %6186 = vst [vmem:[%s224 + $0xa8] sm:$0xff] %v6154
      %6187 = vst [vmem:[%s224 + $0xb0] sm:$0xff] %v6155
      %6188 = vst [vmem:[%s224 + $0xb8] sm:$0xff] %v6156
      %6189 = vst [vmem:[%s224 + $0xc0] sm:$0xff] %v6157
      %6190 = vst [vmem:[%s224 + $0xc8] sm:$0xff] %v6158
      %6191 = vst [vmem:[%s224 + $0xd0] sm:$0xff] %v6159
      %6192 = vst [vmem:[%s224 + $0xd8] sm:$0xff] %v6160
      %6193 = vst [vmem:[%s224 + $0xe0] sm:$0xff] %v6161
      %6194 = vst [vmem:[%s224 + $0xe8] sm:$0xff] %v6162
      %6195 = vst [vmem:[%s224 + $0xf0] sm:$0xff] %v6163
      %6196 = vst [vmem:[%s224 + $0xf8] sm:$0xff] %v6164
      %p6197 = scmp.lt.s32.totalorder %s16, 1
      %s6198 = scalar_select %p6197, %s16, 1
      %s6199 = smul.addr %s6198, 32
      %s6200 = smul.addr %s6199, 8
      %s6201 = scalar_lea.vmem %s5, %s6200
      // Predicated region
      $region45: #{_forward.1} parent=39 // pred_check
        %p6202 = pneg %p144
      $region46: #{_forward.1} parent=39 // pred_check_branch
        %6204 = sbr.rel (%p6202) target = $region48
      $region47: #{_forward.1} parent=39 // pred_region
        _
      $region48: #{_forward.1} parent=39 // pred_fallthru
        _
    $region40: #{_forward.1} parent=5 // pred_fallthru
      _
    %p6205 = scmp.le.s32.totalorder 2, %s11
    // Predicated region
    $region49: #{_forward.1} parent=5 // pred_check
      %p6206 = pneg %p6205
    $region50: #{_forward.1} parent=5 // pred_check_branch
      %6208 = sbr.rel (%p6206) target = $region52
    $region51: #{_forward.1} parent=5 // pred_region
      %s6209 = ssub.s32 %s11, 2
      // Predicated region
      $region53: #{_forward.1} parent=51 // pred_check
        %p6210 = pneg %p150
      $region54: #{_forward.1} parent=51 // pred_check_branch
        %6212 = sbr.rel (%p6210) target = $region56
      $region55: #{_forward.1} parent=51 // pred_region
        %p6213 = scmp.lt.s32.totalorder %s17, 1
        %s6214 = scalar_select %p6213, %s17, 1
        %s6215 = smul.addr %s6214, 32
        %s6216 = smul.addr %s6215, 8
        %s6217 = scalar_lea.vmem %s5, %s6216
      $region56: #{_forward.1} parent=51 // pred_fallthru
        _
    $region52: #{_forward.1} parent=5 // pred_fallthru
      _
  $region6: #{_forward.1} parent=0 // loop_footer
    %s15 = sadd.s32 1, %s11
  $region7: #{_forward.1} parent=0 // loop_footer_branch
    %10 = sbr.rel target = $region3
  $region8: #{_forward.1} parent=0 // loop_exit
    _

</llo_original>
